<compile_context>
chip_gen: v7x
topology: tpu7x:2x2x1
jax: 0.10.0
libtpu: 0.0.40
codegen_flags: <defaults>
</compile_context>

<pallas_src>
import functools

import jax
import jax.numpy as jnp
import numpy as np
from jax.experimental import pallas as pl
from jax.experimental.pallas import tpu as pltpu


# ---------------------------------------------------------------------------
# math helpers
# ---------------------------------------------------------------------------
def _layernorm_1p(x, g, b, eps=1e-5):
    # single-pass stats (E[x], E[x^2]) - fewer XLU reductions (v5e-friendly)
    mu = jnp.mean(x, axis=-1, keepdims=True)
    var = jnp.maximum(jnp.mean(x * x, axis=-1, keepdims=True) - mu * mu, 0.0)
    return (x - mu) * jax.lax.rsqrt(var + eps) * g + b


def _layernorm_ref(x, g, b, eps=1e-5):
    # torch.nn.LayerNorm: biased variance, eps=1e-5 (two-pass, reference only)
    mu = jnp.mean(x, axis=-1, keepdims=True)
    var = jnp.mean((x - mu) ** 2, axis=-1, keepdims=True)
    return (x - mu) * jax.lax.rsqrt(var + eps) * g + b


def _gelu(x):
    # torch.nn.GELU default (exact, erf-based) -> EUP slot, hidden under matmuls
    return 0.5 * x * (1.0 + jax.lax.erf(x * 0.7071067811865476))


# ---------------------------------------------------------------------------
# Pallas kernel: one resampler layer for TB (b, T) slices per grid step
# ---------------------------------------------------------------------------
def resampler_kernel(x_ref, lat0_ref,
                     mg_ref, mb_ref, lg_ref, lb_ref,
                     wq_ref, wkv_ref, wo_ref,
                     fg_ref, fb_ref, w1_ref, w2_ref,
                     ng_ref, nb_ref,
                     o_ref, lat_acc, *, heads, dim_head):
    layer = pl.program_id(1)
    num_layers = pl.num_programs(1)
    TB, n1, D = x_ref.shape            # TB (b,T) slices, n1 = F*v media tokens
    n = lat0_ref.shape[0]              # num_latents
    inner = heads * dim_head

    # seed latent accumulator at the first layer of every BT tile
    @pl.when(layer == 0)
    def _():
        lat_acc[...] = jnp.broadcast_to(
            lat0_ref[...][None].astype(jnp.float32), (TB, n, D))

    lat = lat_acc[...]                             # (TB, n, D) f32 carried state
    x = x_ref[...].astype(jnp.float32)             # bf16 input -> f32 for LN

    # ---------------- PerceiverAttention ----------------
    xn = _layernorm_1p(x, mg_ref[0], mb_ref[0])        # norm_media
    ln = _layernorm_1p(lat, lg_ref[0], lb_ref[0])      # norm_latents

    xn2 = xn.reshape(TB * n1, D).astype(jnp.bfloat16)
    ln2 = ln.reshape(TB * n, D).astype(jnp.bfloat16)

    wq = wq_ref[0]             # (D, inner)     bf16, 1/sqrt(dim_head) pre-folded
    wkv = wkv_ref[0]           # (D, 2*inner)   bf16
    wo = wo_ref[0]             # (inner, D)     bf16

    # projections; downcast to bf16 ONCE per tensor (no per-head casts)
    q3 = jnp.dot(ln2, wq, preferred_element_type=jnp.float32) \
        .astype(jnp.bfloat16).reshape(TB, n, inner)
    kvx = jnp.dot(xn2, wkv, preferred_element_type=jnp.float32) \
        .astype(jnp.bfloat16).reshape(TB, n1, 2 * inner)
    kvl = jnp.dot(ln2, wkv, preferred_element_type=jnp.float32) \
        .astype(jnp.bfloat16).reshape(TB, n, 2 * inner)

    head_outs = []
    for h in range(heads):
        ksl = slice(h * dim_head, (h + 1) * dim_head)
        vsl = slice(inner + h * dim_head, inner + (h + 1) * dim_head)
        qh = q3[:, :, ksl]                              # (TB, n,  dh) bf16
        kxh, vxh = kvx[:, :, ksl], kvx[:, :, vsl]       # (TB, n1, dh) bf16
        klh, vlh = kvl[:, :, ksl], kvl[:, :, vsl]       # (TB, n,  dh) bf16

        # kv token order is [media, latents] (matches torch.cat((x, latents))).
        # Softmax over two separate, 128-layout-friendly blocks: shared max,
        # separate exp/sum, single approximate reciprocal -> no lane concat.
        sim_x = jnp.einsum('bqd,bkd->bqk', qh, kxh,
                           preferred_element_type=jnp.float32)   # (TB, n, n1)
        sim_l = jnp.einsum('bqd,bkd->bqk', qh, klh,
                           preferred_element_type=jnp.float32)   # (TB, n, n)
        m = jnp.maximum(jnp.max(sim_x, axis=-1, keepdims=True),
                        jnp.max(sim_l, axis=-1, keepdims=True))
        px = jnp.exp(sim_x - m)
        pq = jnp.exp(sim_l - m)
        inv = pl.reciprocal(jnp.sum(px, axis=-1, keepdims=True)
                            + jnp.sum(pq, axis=-1, keepdims=True), approx=True)
        oh = (jnp.einsum('bqk,bkd->bqd', (px * inv).astype(jnp.bfloat16), vxh,
                         preferred_element_type=jnp.float32)
              + jnp.einsum('bqk,bkd->bqd', (pq * inv).astype(jnp.bfloat16), vlh,
                           preferred_element_type=jnp.float32))
        head_outs.append(oh.astype(jnp.bfloat16))

    # fuse the heads-concat into ONE K=inner output-projection matmul
    out_all = jnp.concatenate(head_outs, axis=-1).reshape(TB * n, inner)
    attn_out = jnp.dot(out_all, wo, preferred_element_type=jnp.float32)
    lat = lat + attn_out.reshape(TB, n, D)

    # ---------------- FeedForward ----------------
    y = _layernorm_1p(lat, fg_ref[0], fb_ref[0])
    h1 = jnp.dot(y.reshape(TB * n, D).astype(jnp.bfloat16), w1_ref[0],
                 preferred_element_type=jnp.float32)
    h1 = _gelu(h1).astype(jnp.bfloat16)
    lat = lat + jnp.dot(h1, w2_ref[0],
                        preferred_element_type=jnp.float32).reshape(TB, n, D)

    lat_acc[...] = lat

    # final nn.LayerNorm + store, only on the last layer
    @pl.when(layer == num_layers - 1)
    def _():
        o_ref[...] = _layernorm_1p(lat, ng_ref[...], nb_ref[...]).astype(o_ref.dtype)


# ---------------------------------------------------------------------------
# wrapper
# ---------------------------------------------------------------------------
def perceiver_resampler(x, params, *, heads, dim_head, tile_bt=None):
    b, T, F, v, D = x.shape
    n1 = F * v
    BT = b * T
    # bf16 activations: halves the dominant x-tile HBM traffic & VMEM footprint
    x2 = x.reshape(BT, n1, D).astype(jnp.bfloat16)

    lat = params["latents"]
    n = lat.shape[0]
    depth = params["wq"].shape[0]
    inner = heads * dim_head
    ff_inner = params["w1"].shape[2]

    # ---- VMEM budgeting (v7x: 64 MiB physical; v5e/v6e: 128 MiB) ----
    try:
        vmem_cap = int(pltpu.get_tpu_info().vmem_capacity_bytes)
    except Exception:
        vmem_cap = 64 << 20                        # conservative (v7x) fallback
    vmem_budget = (vmem_cap * 85) // 100           # headroom for compiler scratch

    f32b, bf16b = 4, 2
    w_attn = bf16b * (D * inner + 2 * D * inner + inner * D) + f32b * 6 * D
    w_ffn = bf16b * (D * ff_inner + ff_inner * D)          # ~80% of layer bytes
    # drop big FFN weights to single buffering only under real VMEM pressure
    ffn_buffers = 2 if 2 * (w_attn + w_ffn) <= (vmem_budget * 6) // 10 else 1
    w_resident = 2 * w_attn + ffn_buffers * w_ffn

    out_itemsize = jnp.dtype(x.dtype).itemsize

    def act_bytes(tb):
        a = 2 * tb * n1 * D * bf16b                        # x tile (double-buffered)
        a += 2 * tb * n * D * out_itemsize                 # out tile (double-buffered)
        a += tb * n * D * f32b                             # latent scratch accumulator
        a += tb * n1 * D * f32b                            # x upcast / norm_media
        a += tb * (n1 + n) * 2 * inner * (f32b + bf16b)    # kv projections (+bf16)
        a += tb * n * inner * (f32b + bf16b)               # q projection
        a += 2 * tb * n * (n1 + n) * f32b                  # per-head sim / exp temps
        a += tb * n * ff_inner * (f32b + bf16b)            # FFN hidden
        a += tb * n * (inner + D) * f32b                   # head concat + attn_out
        return a

    if tile_bt is None:
        # Grow tile_bt until BT fits in 1-2 grid tiles: layer weights are
        # re-DMA'd once per (BT tile, layer) step, so fewer tiles => less HBM
        # weight traffic.  Keep >= 2 tiles when possible so the "parallel" BT
        # axis can still shard across v7x's two TensorCores.
        budget = max(vmem_budget - w_resident, 4 << 20)
        divisors = [d for d in range(1, BT + 1) if BT % d == 0]
        fits = [d for d in divisors if act_bytes(d) <= budget]
        pref = [d for d in fits if BT // d >= 2]
        tile_bt = max(pref) if pref else (max(fits) if fits else 1)
    assert BT % tile_bt == 0

    vmem_limit = w_resident + act_bytes(tile_bt) + (8 << 20)
    vmem_limit = int(min(max(vmem_limit, 32 << 20), vmem_budget))

    def layer_spec(a, buffers=2):
        shape = (1,) + a.shape[1:]
        idx = lambda i, l, nd=a.ndim: (l,) + (0,) * (nd - 1)
        if buffers == 2:
            return pl.BlockSpec(shape, idx)
        return pl.BlockSpec(shape, idx, pipeline_mode=pl.Buffered(buffers))

    def full_spec(a):
        return pl.BlockSpec(a.shape, lambda i, l, nd=a.ndim: (0,) * nd)

    in_specs = (
        [pl.BlockSpec((tile_bt, n1, D), lambda i, l: (i, 0, 0)),
         full_spec(lat)]
        + [layer_spec(params[k]) for k in
           ("mg", "mb", "lg", "lb", "wq", "wkv", "wo", "fg", "fb")]
        + [layer_spec(params["w1"], ffn_buffers),
           layer_spec(params["w2"], ffn_buffers)]
        + [full_spec(params["ng"]), full_spec(params["nb"])])

    args = ([x2, lat]
            + [params[k] for k in ("mg", "mb", "lg", "lb", "wq", "wkv", "wo",
                                   "fg", "fb", "w1", "w2")]
            + [params["ng"], params["nb"]])

    out = pl.pallas_call(
        functools.partial(resampler_kernel, heads=heads, dim_head=dim_head),
        out_shape=jax.ShapeDtypeStruct((BT, n, D), x.dtype),
        grid=(BT // tile_bt, depth),
        in_specs=in_specs,
        out_specs=pl.BlockSpec((tile_bt, n, D), lambda i, l: (i, 0, 0)),
        scratch_shapes=[pltpu.VMEM((tile_bt, n, D), jnp.float32)],
        compiler_params=pltpu.CompilerParams(
            dimension_semantics=("parallel", "arbitrary"),
            vmem_limit_bytes=vmem_limit),
    )(*args)
    return out.reshape(b, T, n, D)


# ---------------------------------------------------------------------------
# pure-JAX reference (mirrors the PyTorch forward, f32 math)
# ---------------------------------------------------------------------------
def reference(x, params, *, heads, dim_head):
    b, T, F, v, D = x.shape
    x2 = x.reshape(b, T, F * v, D)
    lat = jnp.broadcast_to(params["latents"], (b, T) + params["latents"].shape)
    depth = params["wq"].shape[0]
    inner = heads * dim_head
    f32 = lambda a: a.astype(jnp.float32)

    def split_heads(a):
        bb, tt, nn, _ = a.shape
        return a.reshape(bb, tt, nn, heads, dim_head).transpose(0, 3, 1, 2, 4)

    for l in range(depth):
        xn = _layernorm_ref(x2, params["mg"][l], params["mb"][l])
        ln = _layernorm_ref(lat, params["lg"][l], params["lb"][l])
        # NOTE: 1/sqrt(dim_head) is pre-folded into params["wq"] (see
        # init_params), so no explicit `q * scale` here.
        q = ln @ f32(params["wq"][l])
        kv = jnp.concatenate([xn, ln], axis=2) @ f32(params["wkv"][l])
        k, vv = kv[..., :inner], kv[..., inner:]
        qh, kh, vh = split_heads(q), split_heads(k), split_heads(vv)
        sim = jnp.einsum('bhtid,bhtjd->bhtij', qh, kh)
        sim = sim - jnp.max(sim, axis=-1, keepdims=True)
        attn = jax.nn.softmax(sim, axis=-1)
        o = jnp.einsum('bhtij,bhtjd->bhtid', attn, vh)
        o = o.transpose(0, 2, 3, 1, 4).reshape(b, T, -1, inner)
        lat = lat + o @ f32(params["wo"][l])
        y = _layernorm_ref(lat, params["fg"][l], params["fb"][l])
        y = _gelu(y @ f32(params["w1"][l]))
        lat = lat + y @ f32(params["w2"][l])
    return _layernorm_ref(lat, params["ng"], params["nb"])


# ---------------------------------------------------------------------------
def init_params(key, *, dim, depth, dim_head, heads, num_latents, ff_mult):
    inner = dim_head * heads
    ff_inner = int(dim * ff_mult)
    scale = dim_head ** (-0.5)
    keys = jax.random.split(key, 6)
    p = {
        "latents": jax.random.normal(keys[0], (num_latents, dim), jnp.float32),
        # LayerNorm params (torch default gamma=1, beta=0), shaped (depth,1,D)
        "mg": jnp.ones((depth, 1, dim), jnp.float32),
        "mb": jnp.zeros((depth, 1, dim), jnp.float32),
        "lg": jnp.ones((depth, 1, dim), jnp.float32),
        "lb": jnp.zeros((depth, 1, dim), jnp.float32),
        "fg": jnp.ones((depth, 1, dim), jnp.float32),
        "fb": jnp.zeros((depth, 1, dim), jnp.float32),
        "ng": jnp.ones((1, dim), jnp.float32),
        "nb": jnp.zeros((1, dim), jnp.float32),
        # Linear weights stored as (in, out) = torch weight.T, bf16 for the MXU.
        # The attention scale 1/sqrt(dim_head) is folded into wq ONCE here
        # (host-side), so neither kernel nor reference multiplies q at runtime.
        "wq": (0.02 * scale *
               jax.random.normal(keys[1], (depth, dim, inner))).astype(jnp.bfloat16),
        "wkv": (0.02 * jax.random.normal(keys[2], (depth, dim, 2 * inner))).astype(jnp.bfloat16),
        "wo": (0.02 * jax.random.normal(keys[3], (depth, inner, dim))).astype(jnp.bfloat16),
        "w1": (0.02 * jax.random.normal(keys[4], (depth, dim, ff_inner))).astype(jnp.bfloat16),
        "w2": (0.02 * jax.random.normal(keys[5], (depth, ff_inner, dim))).astype(jnp.bfloat16),
    }
    return p


if __name__ == "__main__":
    # small shapes: b=2, T=4, F=2, v=4, D=32 ; heads=4, dim_head=8, latents=8
    b, T, F, v, D = 2, 4, 2, 4, 32
    heads, dim_head = 4, 8
    num_latents, depth, ff_mult = 8, 2, 4

    key = jax.random.PRNGKey(0)
    kx, kp = jax.random.split(key)
    x = jax.random.normal(kx, (b, T, F, v, D), jnp.float32)
    params = init_params(kp, dim=D, depth=depth, dim_head=dim_head,
                         heads=heads, num_latents=num_latents, ff_mult=ff_mult)

    out = perceiver_resampler(x, params, heads=heads, dim_head=dim_head)
    out = jax.block_until_ready(out)

    ref = jax.block_until_ready(reference(x, params, heads=heads,
                                          dim_head=dim_head))
    assert out.shape == (b, T, num_latents, D)
    # bf16 inputs/weights + approx reciprocal in the kernel vs f32 reference
    np.testing.assert_allclose(np.asarray(out), np.asarray(ref),
                               rtol=2e-2, atol=2e-2)
    print("KERNEL_OK")
</pallas_src>

<mosaic_0001>
module attributes {stable_mosaic.version = 11 : i64} {
  func.func @resampler_kernel(%arg0: i32, %arg1: i32, %arg2: memref<4x8x32xbf16, #tpu.memory_space<vmem>>, %arg3: memref<8x32xf32, #tpu.memory_space<vmem>>, %arg4: memref<1x1x32xf32, #tpu.memory_space<vmem>>, %arg5: memref<1x1x32xf32, #tpu.memory_space<vmem>>, %arg6: memref<1x1x32xf32, #tpu.memory_space<vmem>>, %arg7: memref<1x1x32xf32, #tpu.memory_space<vmem>>, %arg8: memref<1x32x32xbf16, #tpu.memory_space<vmem>>, %arg9: memref<1x32x64xbf16, #tpu.memory_space<vmem>>, %arg10: memref<1x32x32xbf16, #tpu.memory_space<vmem>>, %arg11: memref<1x1x32xf32, #tpu.memory_space<vmem>>, %arg12: memref<1x1x32xf32, #tpu.memory_space<vmem>>, %arg13: memref<1x32x128xbf16, #tpu.memory_space<vmem>>, %arg14: memref<1x128x32xbf16, #tpu.memory_space<vmem>>, %arg15: memref<1x32xf32, #tpu.memory_space<vmem>>, %arg16: memref<1x32xf32, #tpu.memory_space<vmem>>, %arg17: memref<4x8x32xf32, #tpu.memory_space<vmem>>, %arg18: memref<4x8x32xf32, #tpu.memory_space<vmem>>) attributes {dimension_semantics = [#tpu.dimension_semantics<parallel>, #tpu.dimension_semantics<arbitrary>], iteration_bounds = array<i64: 2, 2>, scalar_prefetch = 0 : i64, scratch_operands = 1 : i64, tpu.core_type = #tpu.core_type<tc>, window_params = [{transform_indices = @transform_0, window_bounds = array<i64: 4, 8, 32>}, {pipeline_mode = #tpu.pipeline_mode<synchronous>, transform_indices = @transform_1, window_bounds = array<i64: 8, 32>}, {transform_indices = @transform_2, window_bounds = array<i64: 1, 1, 32>}, {transform_indices = @transform_3, window_bounds = array<i64: 1, 1, 32>}, {transform_indices = @transform_4, window_bounds = array<i64: 1, 1, 32>}, {transform_indices = @transform_5, window_bounds = array<i64: 1, 1, 32>}, {transform_indices = @transform_6, window_bounds = array<i64: 1, 32, 32>}, {transform_indices = @transform_7, window_bounds = array<i64: 1, 32, 64>}, {transform_indices = @transform_8, window_bounds = array<i64: 1, 32, 32>}, {transform_indices = @transform_9, window_bounds = array<i64: 1, 1, 32>}, {transform_indices = @transform_10, window_bounds = array<i64: 1, 1, 32>}, {transform_indices = @transform_11, window_bounds = array<i64: 1, 32, 128>}, {transform_indices = @transform_12, window_bounds = array<i64: 1, 128, 32>}, {pipeline_mode = #tpu.pipeline_mode<synchronous>, transform_indices = @transform_13, window_bounds = array<i64: 1, 32>}, {pipeline_mode = #tpu.pipeline_mode<synchronous>, transform_indices = @transform_14, window_bounds = array<i64: 1, 32>}, {transform_indices = @transform_15, window_bounds = array<i64: 4, 8, 32>}]} {
    %c0_i32 = arith.constant 0 : i32
    %0 = arith.cmpi eq, %arg1, %c0_i32 : i32
    %1 = arith.extui %0 : i1 to i32
    %c0_i32_0 = arith.constant 0 : i32
    %2 = arith.cmpi ne, %1, %c0_i32_0 : i32
    scf.if %2 {
      %c0_101 = arith.constant 0 : index
      %c0_102 = arith.constant 0 : index
      %279 = vector.load %arg3[%c0_101, %c0_102] : memref<8x32xf32, #tpu.memory_space<vmem>>, vector<8x32xf32>
      %280 = vector.shape_cast %279 : vector<8x32xf32> to vector<1x8x32xf32>
      %281 = vector.shape_cast %280 : vector<1x8x32xf32> to vector<1x8x32xf32>
      %282 = vector.broadcast %281 : vector<1x8x32xf32> to vector<4x8x32xf32>
      %c0_103 = arith.constant 0 : index
      %c0_104 = arith.constant 0 : index
      %c0_105 = arith.constant 0 : index
      %283 = vector.load %arg18[%c0_103, %c0_104, %c0_105] : memref<4x8x32xf32, #tpu.memory_space<vmem>>, vector<4x8x32xf32>
      tpu.vector_store %arg18[%c0_103, %c0_104, %c0_105], %282 {strides = array<i32>} : memref<4x8x32xf32, #tpu.memory_space<vmem>>, vector<4x8x32xf32>,
    } else {
    }
    %c0 = arith.constant 0 : index
    %c0_1 = arith.constant 0 : index
    %c0_2 = arith.constant 0 : index
    %3 = vector.load %arg18[%c0, %c0_1, %c0_2] : memref<4x8x32xf32, #tpu.memory_space<vmem>>, vector<4x8x32xf32>
    %c0_3 = arith.constant 0 : index
    %c0_4 = arith.constant 0 : index
    %c0_5 = arith.constant 0 : index
    %4 = vector.load %arg2[%c0_3, %c0_4, %c0_5] : memref<4x8x32xbf16, #tpu.memory_space<vmem>>, vector<4x8x32xbf16>
    %5 = arith.extf %4 : vector<4x8x32xbf16> to vector<4x8x32xf32>
    %c0_6 = arith.constant 0 : index
    %c0_7 = arith.constant 0 : index
    %c0_8 = arith.constant 0 : index
    %6 = vector.load %arg4[%c0_6, %c0_7, %c0_8] : memref<1x1x32xf32, #tpu.memory_space<vmem>>, vector<1x1x32xf32>
    %7 = vector.shape_cast %6 : vector<1x1x32xf32> to vector<1x32xf32>
    %c0_9 = arith.constant 0 : index
    %c0_10 = arith.constant 0 : index
    %c0_11 = arith.constant 0 : index
    %8 = vector.load %arg5[%c0_9, %c0_10, %c0_11] : memref<1x1x32xf32, #tpu.memory_space<vmem>>, vector<1x1x32xf32>
    %9 = vector.shape_cast %8 : vector<1x1x32xf32> to vector<1x32xf32>
    %cst = arith.constant dense<0.000000e+00> : vector<4x8xf32>
    %10 = vector.multi_reduction <add>, %5, %cst [2] : vector<4x8x32xf32> to vector<4x8xf32>
    %11 = vector.shape_cast %10 : vector<4x8xf32> to vector<4x8x1xf32>
    %cst_12 = arith.constant 3.200000e+01 : f32
    %12 = vector.broadcast %cst_12 : f32 to vector<4x8x1xf32>
    %13 = arith.divf %11, %12 : vector<4x8x1xf32>
    %14 = arith.mulf %5, %5 : vector<4x8x32xf32>
    %cst_13 = arith.constant dense<0.000000e+00> : vector<4x8xf32>
    %15 = vector.multi_reduction <add>, %14, %cst_13 [2] : vector<4x8x32xf32> to vector<4x8xf32>
    %16 = vector.shape_cast %15 : vector<4x8xf32> to vector<4x8x1xf32>
    %cst_14 = arith.constant 3.200000e+01 : f32
    %17 = vector.broadcast %cst_14 : f32 to vector<4x8x1xf32>
    %18 = arith.divf %16, %17 : vector<4x8x1xf32>
    %19 = arith.mulf %13, %13 : vector<4x8x1xf32>
    %20 = arith.subf %18, %19 : vector<4x8x1xf32>
    %cst_15 = arith.constant 0.000000e+00 : f32
    %21 = vector.broadcast %cst_15 : f32 to vector<4x8x1xf32>
    %22 = arith.maximumf %20, %21 : vector<4x8x1xf32>
    %23 = vector.broadcast %13 : vector<4x8x1xf32> to vector<4x8x32xf32>
    %24 = arith.subf %5, %23 : vector<4x8x32xf32>
    %cst_16 = arith.constant 9.99999974E-6 : f32
    %25 = vector.broadcast %cst_16 : f32 to vector<4x8x1xf32>
    %26 = arith.addf %22, %25 : vector<4x8x1xf32>
    %27 = math.rsqrt %26 : vector<4x8x1xf32>
    %28 = vector.broadcast %27 : vector<4x8x1xf32> to vector<4x8x32xf32>
    %29 = arith.mulf %24, %28 : vector<4x8x32xf32>
    %30 = vector.shape_cast %7 : vector<1x32xf32> to vector<1x1x32xf32>
    %31 = vector.broadcast %30 : vector<1x1x32xf32> to vector<4x8x32xf32>
    %32 = arith.mulf %29, %31 : vector<4x8x32xf32>
    %33 = vector.shape_cast %9 : vector<1x32xf32> to vector<1x1x32xf32>
    %34 = vector.broadcast %33 : vector<1x1x32xf32> to vector<4x8x32xf32>
    %35 = arith.addf %32, %34 : vector<4x8x32xf32>
    %c0_17 = arith.constant 0 : index
    %c0_18 = arith.constant 0 : index
    %c0_19 = arith.constant 0 : index
    %36 = vector.load %arg6[%c0_17, %c0_18, %c0_19] : memref<1x1x32xf32, #tpu.memory_space<vmem>>, vector<1x1x32xf32>
    %37 = vector.shape_cast %36 : vector<1x1x32xf32> to vector<1x32xf32>
    %c0_20 = arith.constant 0 : index
    %c0_21 = arith.constant 0 : index
    %c0_22 = arith.constant 0 : index
    %38 = vector.load %arg7[%c0_20, %c0_21, %c0_22] : memref<1x1x32xf32, #tpu.memory_space<vmem>>, vector<1x1x32xf32>
    %39 = vector.shape_cast %38 : vector<1x1x32xf32> to vector<1x32xf32>
    %cst_23 = arith.constant dense<0.000000e+00> : vector<4x8xf32>
    %40 = vector.multi_reduction <add>, %3, %cst_23 [2] : vector<4x8x32xf32> to vector<4x8xf32>
    %41 = vector.shape_cast %40 : vector<4x8xf32> to vector<4x8x1xf32>
    %cst_24 = arith.constant 3.200000e+01 : f32
    %42 = vector.broadcast %cst_24 : f32 to vector<4x8x1xf32>
    %43 = arith.divf %41, %42 : vector<4x8x1xf32>
    %44 = arith.mulf %3, %3 : vector<4x8x32xf32>
    %cst_25 = arith.constant dense<0.000000e+00> : vector<4x8xf32>
    %45 = vector.multi_reduction <add>, %44, %cst_25 [2] : vector<4x8x32xf32> to vector<4x8xf32>
    %46 = vector.shape_cast %45 : vector<4x8xf32> to vector<4x8x1xf32>
    %cst_26 = arith.constant 3.200000e+01 : f32
    %47 = vector.broadcast %cst_26 : f32 to vector<4x8x1xf32>
    %48 = arith.divf %46, %47 : vector<4x8x1xf32>
    %49 = arith.mulf %43, %43 : vector<4x8x1xf32>
    %50 = arith.subf %48, %49 : vector<4x8x1xf32>
    %cst_27 = arith.constant 0.000000e+00 : f32
    %51 = vector.broadcast %cst_27 : f32 to vector<4x8x1xf32>
    %52 = arith.maximumf %50, %51 : vector<4x8x1xf32>
    %53 = vector.broadcast %43 : vector<4x8x1xf32> to vector<4x8x32xf32>
    %54 = arith.subf %3, %53 : vector<4x8x32xf32>
    %cst_28 = arith.constant 9.99999974E-6 : f32
    %55 = vector.broadcast %cst_28 : f32 to vector<4x8x1xf32>
    %56 = arith.addf %52, %55 : vector<4x8x1xf32>
    %57 = math.rsqrt %56 : vector<4x8x1xf32>
    %58 = vector.broadcast %57 : vector<4x8x1xf32> to vector<4x8x32xf32>
    %59 = arith.mulf %54, %58 : vector<4x8x32xf32>
    %60 = vector.shape_cast %37 : vector<1x32xf32> to vector<1x1x32xf32>
    %61 = vector.broadcast %60 : vector<1x1x32xf32> to vector<4x8x32xf32>
    %62 = arith.mulf %59, %61 : vector<4x8x32xf32>
    %63 = vector.shape_cast %39 : vector<1x32xf32> to vector<1x1x32xf32>
    %64 = vector.broadcast %63 : vector<1x1x32xf32> to vector<4x8x32xf32>
    %65 = arith.addf %62, %64 : vector<4x8x32xf32>
    %66 = vector.shape_cast %35 : vector<4x8x32xf32> to vector<32x32xf32>
    %67 = arith.truncf %66 : vector<32x32xf32> to vector<32x32xbf16>
    %68 = vector.shape_cast %65 : vector<4x8x32xf32> to vector<32x32xf32>
    %69 = arith.truncf %68 : vector<32x32xf32> to vector<32x32xbf16>
    %c0_29 = arith.constant 0 : index
    %c0_30 = arith.constant 0 : index
    %c0_31 = arith.constant 0 : index
    %70 = vector.load %arg8[%c0_29, %c0_30, %c0_31] : memref<1x32x32xbf16, #tpu.memory_space<vmem>>, vector<1x32x32xbf16>
    %71 = vector.shape_cast %70 : vector<1x32x32xbf16> to vector<32x32xbf16>
    %c0_32 = arith.constant 0 : index
    %c0_33 = arith.constant 0 : index
    %c0_34 = arith.constant 0 : index
    %72 = vector.load %arg9[%c0_32, %c0_33, %c0_34] : memref<1x32x64xbf16, #tpu.memory_space<vmem>>, vector<1x32x64xbf16>
    %73 = vector.shape_cast %72 : vector<1x32x64xbf16> to vector<32x64xbf16>
    %c0_35 = arith.constant 0 : index
    %c0_36 = arith.constant 0 : index
    %c0_37 = arith.constant 0 : index
    %74 = vector.load %arg10[%c0_35, %c0_36, %c0_37] : memref<1x32x32xbf16, #tpu.memory_space<vmem>>, vector<1x32x32xbf16>
    %75 = vector.shape_cast %74 : vector<1x32x32xbf16> to vector<32x32xbf16>
    %cst_38 = arith.constant dense<0.000000e+00> : vector<32x32xf32>
    %76 = tpu.matmul %69, %71, %cst_38 {dimension_numbers = #tpu.dot_dimension_numbers<[1], [0], [0], [1], [0, 0, 1, 1], [], []>} : vector<32x32xbf16>, vector<32x32xbf16>, vector<32x32xf32> -> vector<32x32xf32>
    %77 = arith.truncf %76 : vector<32x32xf32> to vector<32x32xbf16>
    %78 = vector.shape_cast %77 : vector<32x32xbf16> to vector<4x8x32xbf16>
    %cst_39 = arith.constant dense<0.000000e+00> : vector<32x64xf32>
    %79 = tpu.matmul %67, %73, %cst_39 {dimension_numbers = #tpu.dot_dimension_numbers<[1], [0], [0], [1], [0, 0, 1, 1], [], []>} : vector<32x32xbf16>, vector<32x64xbf16>, vector<32x64xf32> -> vector<32x64xf32>
    %80 = arith.truncf %79 : vector<32x64xf32> to vector<32x64xbf16>
    %81 = vector.shape_cast %80 : vector<32x64xbf16> to vector<4x8x64xbf16>
    %cst_40 = arith.constant dense<0.000000e+00> : vector<32x64xf32>
    %82 = tpu.matmul %69, %73, %cst_40 {dimension_numbers = #tpu.dot_dimension_numbers<[1], [0], [0], [1], [0, 0, 1, 1], [], []>} : vector<32x32xbf16>, vector<32x64xbf16>, vector<32x64xf32> -> vector<32x64xf32>
    %83 = arith.truncf %82 : vector<32x64xf32> to vector<32x64xbf16>
    %84 = vector.shape_cast %83 : vector<32x64xbf16> to vector<4x8x64xbf16>
    %85 = vector.extract_strided_slice %78 {offsets = [0, 0, 0], sizes = [4, 8, 8], strides = [1, 1, 1]} : vector<4x8x32xbf16> to vector<4x8x8xbf16>
    %86 = vector.extract_strided_slice %81 {offsets = [0, 0, 0], sizes = [4, 8, 8], strides = [1, 1, 1]} : vector<4x8x64xbf16> to vector<4x8x8xbf16>
    %87 = vector.extract_strided_slice %81 {offsets = [0, 0, 32], sizes = [4, 8, 8], strides = [1, 1, 1]} : vector<4x8x64xbf16> to vector<4x8x8xbf16>
    %88 = vector.extract_strided_slice %84 {offsets = [0, 0, 0], sizes = [4, 8, 8], strides = [1, 1, 1]} : vector<4x8x64xbf16> to vector<4x8x8xbf16>
    %89 = vector.extract_strided_slice %84 {offsets = [0, 0, 32], sizes = [4, 8, 8], strides = [1, 1, 1]} : vector<4x8x64xbf16> to vector<4x8x8xbf16>
    "tpu.trace_start"() <{level = 10 : i32, message = "bqd,bkd->bqk"}> : () -> ()
    %cst_41 = arith.constant dense<0.000000e+00> : vector<4x8x8xf32>
    %90 = tpu.matmul %85, %86, %cst_41 {dimension_numbers = #tpu.dot_dimension_numbers<[2], [2], [1], [1], [0, 0, 0, 1, 1, 1], [0], [0]>} : vector<4x8x8xbf16>, vector<4x8x8xbf16>, vector<4x8x8xf32> -> vector<4x8x8xf32>
    %cst_42 = arith.constant dense<0.000000e+00> : vector<4x8x8xf32>
    %91 = tpu.matmul %85, %88, %cst_42 {dimension_numbers = #tpu.dot_dimension_numbers<[2], [2], [1], [1], [0, 0, 0, 1, 1, 1], [0], [0]>} : vector<4x8x8xbf16>, vector<4x8x8xbf16>, vector<4x8x8xf32> -> vector<4x8x8xf32>
    "tpu.trace_stop"() : () -> ()
    %cst_43 = arith.constant dense<0xFF800000> : vector<4x8xf32>
    %92 = vector.multi_reduction <maximumf>, %90, %cst_43 [2] : vector<4x8x8xf32> to vector<4x8xf32>
    %93 = vector.shape_cast %92 : vector<4x8xf32> to vector<4x8x1xf32>
    %cst_44 = arith.constant dense<0xFF800000> : vector<4x8xf32>
    %94 = vector.multi_reduction <maximumf>, %91, %cst_44 [2] : vector<4x8x8xf32> to vector<4x8xf32>
    %95 = vector.shape_cast %94 : vector<4x8xf32> to vector<4x8x1xf32>
    %96 = arith.maximumf %93, %95 : vector<4x8x1xf32>
    %97 = vector.broadcast %96 : vector<4x8x1xf32> to vector<4x8x8xf32>
    %98 = arith.subf %90, %97 : vector<4x8x8xf32>
    %99 = math.exp %98 : vector<4x8x8xf32>
    %100 = vector.broadcast %96 : vector<4x8x1xf32> to vector<4x8x8xf32>
    %101 = arith.subf %91, %100 : vector<4x8x8xf32>
    %102 = math.exp %101 : vector<4x8x8xf32>
    %cst_45 = arith.constant dense<0.000000e+00> : vector<4x8xf32>
    %103 = vector.multi_reduction <add>, %99, %cst_45 [2] : vector<4x8x8xf32> to vector<4x8xf32>
    %104 = vector.shape_cast %103 : vector<4x8xf32> to vector<4x8x1xf32>
    %cst_46 = arith.constant dense<0.000000e+00> : vector<4x8xf32>
    %105 = vector.multi_reduction <add>, %102, %cst_46 [2] : vector<4x8x8xf32> to vector<4x8xf32>
    %106 = vector.shape_cast %105 : vector<4x8xf32> to vector<4x8x1xf32>
    %107 = arith.addf %104, %106 : vector<4x8x1xf32>
    %108 = tpu.reciprocal %107 {approx = true} : vector<4x8x1xf32> -> vector<4x8x1xf32>
    %109 = vector.broadcast %108 : vector<4x8x1xf32> to vector<4x8x8xf32>
    %110 = arith.mulf %99, %109 : vector<4x8x8xf32>
    %111 = arith.truncf %110 : vector<4x8x8xf32> to vector<4x8x8xbf16>
    "tpu.trace_start"() <{level = 10 : i32, message = "bqk,bkd->bqd"}> : () -> ()
    %cst_47 = arith.constant dense<0.000000e+00> : vector<4x8x8xf32>
    %112 = tpu.matmul %111, %87, %cst_47 {dimension_numbers = #tpu.dot_dimension_numbers<[2], [1], [1], [2], [0, 0, 0, 1, 1, 2], [0], [0]>} : vector<4x8x8xbf16>, vector<4x8x8xbf16>, vector<4x8x8xf32> -> vector<4x8x8xf32>
    "tpu.trace_stop"() : () -> ()
    %113 = vector.broadcast %108 : vector<4x8x1xf32> to vector<4x8x8xf32>
    %114 = arith.mulf %102, %113 : vector<4x8x8xf32>
    %115 = arith.truncf %114 : vector<4x8x8xf32> to vector<4x8x8xbf16>
    "tpu.trace_start"() <{level = 10 : i32, message = "bqk,bkd->bqd"}> : () -> ()
    %cst_48 = arith.constant dense<0.000000e+00> : vector<4x8x8xf32>
    %116 = tpu.matmul %115, %89, %cst_48 {dimension_numbers = #tpu.dot_dimension_numbers<[2], [1], [1], [2], [0, 0, 0, 1, 1, 2], [0], [0]>} : vector<4x8x8xbf16>, vector<4x8x8xbf16>, vector<4x8x8xf32> -> vector<4x8x8xf32>
    "tpu.trace_stop"() : () -> ()
    %117 = arith.addf %112, %116 : vector<4x8x8xf32>
    %118 = arith.truncf %117 : vector<4x8x8xf32> to vector<4x8x8xbf16>
    %119 = vector.extract_strided_slice %78 {offsets = [0, 0, 8], sizes = [4, 8, 8], strides = [1, 1, 1]} : vector<4x8x32xbf16> to vector<4x8x8xbf16>
    %120 = vector.extract_strided_slice %81 {offsets = [0, 0, 8], sizes = [4, 8, 8], strides = [1, 1, 1]} : vector<4x8x64xbf16> to vector<4x8x8xbf16>
    %121 = vector.extract_strided_slice %81 {offsets = [0, 0, 40], sizes = [4, 8, 8], strides = [1, 1, 1]} : vector<4x8x64xbf16> to vector<4x8x8xbf16>
    %122 = vector.extract_strided_slice %84 {offsets = [0, 0, 8], sizes = [4, 8, 8], strides = [1, 1, 1]} : vector<4x8x64xbf16> to vector<4x8x8xbf16>
    %123 = vector.extract_strided_slice %84 {offsets = [0, 0, 40], sizes = [4, 8, 8], strides = [1, 1, 1]} : vector<4x8x64xbf16> to vector<4x8x8xbf16>
    "tpu.trace_start"() <{level = 10 : i32, message = "bqd,bkd->bqk"}> : () -> ()
    %cst_49 = arith.constant dense<0.000000e+00> : vector<4x8x8xf32>
    %124 = tpu.matmul %119, %120, %cst_49 {dimension_numbers = #tpu.dot_dimension_numbers<[2], [2], [1], [1], [0, 0, 0, 1, 1, 1], [0], [0]>} : vector<4x8x8xbf16>, vector<4x8x8xbf16>, vector<4x8x8xf32> -> vector<4x8x8xf32>
    %cst_50 = arith.constant dense<0.000000e+00> : vector<4x8x8xf32>
    %125 = tpu.matmul %119, %122, %cst_50 {dimension_numbers = #tpu.dot_dimension_numbers<[2], [2], [1], [1], [0, 0, 0, 1, 1, 1], [0], [0]>} : vector<4x8x8xbf16>, vector<4x8x8xbf16>, vector<4x8x8xf32> -> vector<4x8x8xf32>
    "tpu.trace_stop"() : () -> ()
    %cst_51 = arith.constant dense<0xFF800000> : vector<4x8xf32>
    %126 = vector.multi_reduction <maximumf>, %124, %cst_51 [2] : vector<4x8x8xf32> to vector<4x8xf32>
    %127 = vector.shape_cast %126 : vector<4x8xf32> to vector<4x8x1xf32>
    %cst_52 = arith.constant dense<0xFF800000> : vector<4x8xf32>
    %128 = vector.multi_reduction <maximumf>, %125, %cst_52 [2] : vector<4x8x8xf32> to vector<4x8xf32>
    %129 = vector.shape_cast %128 : vector<4x8xf32> to vector<4x8x1xf32>
    %130 = arith.maximumf %127, %129 : vector<4x8x1xf32>
    %131 = vector.broadcast %130 : vector<4x8x1xf32> to vector<4x8x8xf32>
    %132 = arith.subf %124, %131 : vector<4x8x8xf32>
    %133 = math.exp %132 : vector<4x8x8xf32>
    %134 = vector.broadcast %130 : vector<4x8x1xf32> to vector<4x8x8xf32>
    %135 = arith.subf %125, %134 : vector<4x8x8xf32>
    %136 = math.exp %135 : vector<4x8x8xf32>
    %cst_53 = arith.constant dense<0.000000e+00> : vector<4x8xf32>
    %137 = vector.multi_reduction <add>, %133, %cst_53 [2] : vector<4x8x8xf32> to vector<4x8xf32>
    %138 = vector.shape_cast %137 : vector<4x8xf32> to vector<4x8x1xf32>
    %cst_54 = arith.constant dense<0.000000e+00> : vector<4x8xf32>
    %139 = vector.multi_reduction <add>, %136, %cst_54 [2] : vector<4x8x8xf32> to vector<4x8xf32>
    %140 = vector.shape_cast %139 : vector<4x8xf32> to vector<4x8x1xf32>
    %141 = arith.addf %138, %140 : vector<4x8x1xf32>
    %142 = tpu.reciprocal %141 {approx = true} : vector<4x8x1xf32> -> vector<4x8x1xf32>
    %143 = vector.broadcast %142 : vector<4x8x1xf32> to vector<4x8x8xf32>
    %144 = arith.mulf %133, %143 : vector<4x8x8xf32>
    %145 = arith.truncf %144 : vector<4x8x8xf32> to vector<4x8x8xbf16>
    "tpu.trace_start"() <{level = 10 : i32, message = "bqk,bkd->bqd"}> : () -> ()
    %cst_55 = arith.constant dense<0.000000e+00> : vector<4x8x8xf32>
    %146 = tpu.matmul %145, %121, %cst_55 {dimension_numbers = #tpu.dot_dimension_numbers<[2], [1], [1], [2], [0, 0, 0, 1, 1, 2], [0], [0]>} : vector<4x8x8xbf16>, vector<4x8x8xbf16>, vector<4x8x8xf32> -> vector<4x8x8xf32>
    "tpu.trace_stop"() : () -> ()
    %147 = vector.broadcast %142 : vector<4x8x1xf32> to vector<4x8x8xf32>
    %148 = arith.mulf %136, %147 : vector<4x8x8xf32>
    %149 = arith.truncf %148 : vector<4x8x8xf32> to vector<4x8x8xbf16>
    "tpu.trace_start"() <{level = 10 : i32, message = "bqk,bkd->bqd"}> : () -> ()
    %cst_56 = arith.constant dense<0.000000e+00> : vector<4x8x8xf32>
    %150 = tpu.matmul %149, %123, %cst_56 {dimension_numbers = #tpu.dot_dimension_numbers<[2], [1], [1], [2], [0, 0, 0, 1, 1, 2], [0], [0]>} : vector<4x8x8xbf16>, vector<4x8x8xbf16>, vector<4x8x8xf32> -> vector<4x8x8xf32>
    "tpu.trace_stop"() : () -> ()
    %151 = arith.addf %146, %150 : vector<4x8x8xf32>
    %152 = arith.truncf %151 : vector<4x8x8xf32> to vector<4x8x8xbf16>
    %153 = vector.extract_strided_slice %78 {offsets = [0, 0, 16], sizes = [4, 8, 8], strides = [1, 1, 1]} : vector<4x8x32xbf16> to vector<4x8x8xbf16>
    %154 = vector.extract_strided_slice %81 {offsets = [0, 0, 16], sizes = [4, 8, 8], strides = [1, 1, 1]} : vector<4x8x64xbf16> to vector<4x8x8xbf16>
    %155 = vector.extract_strided_slice %81 {offsets = [0, 0, 48], sizes = [4, 8, 8], strides = [1, 1, 1]} : vector<4x8x64xbf16> to vector<4x8x8xbf16>
    %156 = vector.extract_strided_slice %84 {offsets = [0, 0, 16], sizes = [4, 8, 8], strides = [1, 1, 1]} : vector<4x8x64xbf16> to vector<4x8x8xbf16>
    %157 = vector.extract_strided_slice %84 {offsets = [0, 0, 48], sizes = [4, 8, 8], strides = [1, 1, 1]} : vector<4x8x64xbf16> to vector<4x8x8xbf16>
    "tpu.trace_start"() <{level = 10 : i32, message = "bqd,bkd->bqk"}> : () -> ()
    %cst_57 = arith.constant dense<0.000000e+00> : vector<4x8x8xf32>
    %158 = tpu.matmul %153, %154, %cst_57 {dimension_numbers = #tpu.dot_dimension_numbers<[2], [2], [1], [1], [0, 0, 0, 1, 1, 1], [0], [0]>} : vector<4x8x8xbf16>, vector<4x8x8xbf16>, vector<4x8x8xf32> -> vector<4x8x8xf32>
    %cst_58 = arith.constant dense<0.000000e+00> : vector<4x8x8xf32>
    %159 = tpu.matmul %153, %156, %cst_58 {dimension_numbers = #tpu.dot_dimension_numbers<[2], [2], [1], [1], [0, 0, 0, 1, 1, 1], [0], [0]>} : vector<4x8x8xbf16>, vector<4x8x8xbf16>, vector<4x8x8xf32> -> vector<4x8x8xf32>
    "tpu.trace_stop"() : () -> ()
    %cst_59 = arith.constant dense<0xFF800000> : vector<4x8xf32>
    %160 = vector.multi_reduction <maximumf>, %158, %cst_59 [2] : vector<4x8x8xf32> to vector<4x8xf32>
    %161 = vector.shape_cast %160 : vector<4x8xf32> to vector<4x8x1xf32>
    %cst_60 = arith.constant dense<0xFF800000> : vector<4x8xf32>
    %162 = vector.multi_reduction <maximumf>, %159, %cst_60 [2] : vector<4x8x8xf32> to vector<4x8xf32>
    %163 = vector.shape_cast %162 : vector<4x8xf32> to vector<4x8x1xf32>
    %164 = arith.maximumf %161, %163 : vector<4x8x1xf32>
    %165 = vector.broadcast %164 : vector<4x8x1xf32> to vector<4x8x8xf32>
    %166 = arith.subf %158, %165 : vector<4x8x8xf32>
    %167 = math.exp %166 : vector<4x8x8xf32>
    %168 = vector.broadcast %164 : vector<4x8x1xf32> to vector<4x8x8xf32>
    %169 = arith.subf %159, %168 : vector<4x8x8xf32>
    %170 = math.exp %169 : vector<4x8x8xf32>
    %cst_61 = arith.constant dense<0.000000e+00> : vector<4x8xf32>
    %171 = vector.multi_reduction <add>, %167, %cst_61 [2] : vector<4x8x8xf32> to vector<4x8xf32>
    %172 = vector.shape_cast %171 : vector<4x8xf32> to vector<4x8x1xf32>
    %cst_62 = arith.constant dense<0.000000e+00> : vector<4x8xf32>
    %173 = vector.multi_reduction <add>, %170, %cst_62 [2] : vector<4x8x8xf32> to vector<4x8xf32>
    %174 = vector.shape_cast %173 : vector<4x8xf32> to vector<4x8x1xf32>
    %175 = arith.addf %172, %174 : vector<4x8x1xf32>
    %176 = tpu.reciprocal %175 {approx = true} : vector<4x8x1xf32> -> vector<4x8x1xf32>
    %177 = vector.broadcast %176 : vector<4x8x1xf32> to vector<4x8x8xf32>
    %178 = arith.mulf %167, %177 : vector<4x8x8xf32>
    %179 = arith.truncf %178 : vector<4x8x8xf32> to vector<4x8x8xbf16>
    "tpu.trace_start"() <{level = 10 : i32, message = "bqk,bkd->bqd"}> : () -> ()
    %cst_63 = arith.constant dense<0.000000e+00> : vector<4x8x8xf32>
    %180 = tpu.matmul %179, %155, %cst_63 {dimension_numbers = #tpu.dot_dimension_numbers<[2], [1], [1], [2], [0, 0, 0, 1, 1, 2], [0], [0]>} : vector<4x8x8xbf16>, vector<4x8x8xbf16>, vector<4x8x8xf32> -> vector<4x8x8xf32>
    "tpu.trace_stop"() : () -> ()
    %181 = vector.broadcast %176 : vector<4x8x1xf32> to vector<4x8x8xf32>
    %182 = arith.mulf %170, %181 : vector<4x8x8xf32>
    %183 = arith.truncf %182 : vector<4x8x8xf32> to vector<4x8x8xbf16>
    "tpu.trace_start"() <{level = 10 : i32, message = "bqk,bkd->bqd"}> : () -> ()
    %cst_64 = arith.constant dense<0.000000e+00> : vector<4x8x8xf32>
    %184 = tpu.matmul %183, %157, %cst_64 {dimension_numbers = #tpu.dot_dimension_numbers<[2], [1], [1], [2], [0, 0, 0, 1, 1, 2], [0], [0]>} : vector<4x8x8xbf16>, vector<4x8x8xbf16>, vector<4x8x8xf32> -> vector<4x8x8xf32>
    "tpu.trace_stop"() : () -> ()
    %185 = arith.addf %180, %184 : vector<4x8x8xf32>
    %186 = arith.truncf %185 : vector<4x8x8xf32> to vector<4x8x8xbf16>
    %187 = vector.extract_strided_slice %78 {offsets = [0, 0, 24], sizes = [4, 8, 8], strides = [1, 1, 1]} : vector<4x8x32xbf16> to vector<4x8x8xbf16>
    %188 = vector.extract_strided_slice %81 {offsets = [0, 0, 24], sizes = [4, 8, 8], strides = [1, 1, 1]} : vector<4x8x64xbf16> to vector<4x8x8xbf16>
    %189 = vector.extract_strided_slice %81 {offsets = [0, 0, 56], sizes = [4, 8, 8], strides = [1, 1, 1]} : vector<4x8x64xbf16> to vector<4x8x8xbf16>
    %190 = vector.extract_strided_slice %84 {offsets = [0, 0, 24], sizes = [4, 8, 8], strides = [1, 1, 1]} : vector<4x8x64xbf16> to vector<4x8x8xbf16>
    %191 = vector.extract_strided_slice %84 {offsets = [0, 0, 56], sizes = [4, 8, 8], strides = [1, 1, 1]} : vector<4x8x64xbf16> to vector<4x8x8xbf16>
    "tpu.trace_start"() <{level = 10 : i32, message = "bqd,bkd->bqk"}> : () -> ()
    %cst_65 = arith.constant dense<0.000000e+00> : vector<4x8x8xf32>
    %192 = tpu.matmul %187, %188, %cst_65 {dimension_numbers = #tpu.dot_dimension_numbers<[2], [2], [1], [1], [0, 0, 0, 1, 1, 1], [0], [0]>} : vector<4x8x8xbf16>, vector<4x8x8xbf16>, vector<4x8x8xf32> -> vector<4x8x8xf32>
    %cst_66 = arith.constant dense<0.000000e+00> : vector<4x8x8xf32>
    %193 = tpu.matmul %187, %190, %cst_66 {dimension_numbers = #tpu.dot_dimension_numbers<[2], [2], [1], [1], [0, 0, 0, 1, 1, 1], [0], [0]>} : vector<4x8x8xbf16>, vector<4x8x8xbf16>, vector<4x8x8xf32> -> vector<4x8x8xf32>
    "tpu.trace_stop"() : () -> ()
    %cst_67 = arith.constant dense<0xFF800000> : vector<4x8xf32>
    %194 = vector.multi_reduction <maximumf>, %192, %cst_67 [2] : vector<4x8x8xf32> to vector<4x8xf32>
    %195 = vector.shape_cast %194 : vector<4x8xf32> to vector<4x8x1xf32>
    %cst_68 = arith.constant dense<0xFF800000> : vector<4x8xf32>
    %196 = vector.multi_reduction <maximumf>, %193, %cst_68 [2] : vector<4x8x8xf32> to vector<4x8xf32>
    %197 = vector.shape_cast %196 : vector<4x8xf32> to vector<4x8x1xf32>
    %198 = arith.maximumf %195, %197 : vector<4x8x1xf32>
    %199 = vector.broadcast %198 : vector<4x8x1xf32> to vector<4x8x8xf32>
    %200 = arith.subf %192, %199 : vector<4x8x8xf32>
    %201 = math.exp %200 : vector<4x8x8xf32>
    %202 = vector.broadcast %198 : vector<4x8x1xf32> to vector<4x8x8xf32>
    %203 = arith.subf %193, %202 : vector<4x8x8xf32>
    %204 = math.exp %203 : vector<4x8x8xf32>
    %cst_69 = arith.constant dense<0.000000e+00> : vector<4x8xf32>
    %205 = vector.multi_reduction <add>, %201, %cst_69 [2] : vector<4x8x8xf32> to vector<4x8xf32>
    %206 = vector.shape_cast %205 : vector<4x8xf32> to vector<4x8x1xf32>
    %cst_70 = arith.constant dense<0.000000e+00> : vector<4x8xf32>
    %207 = vector.multi_reduction <add>, %204, %cst_70 [2] : vector<4x8x8xf32> to vector<4x8xf32>
    %208 = vector.shape_cast %207 : vector<4x8xf32> to vector<4x8x1xf32>
    %209 = arith.addf %206, %208 : vector<4x8x1xf32>
    %210 = tpu.reciprocal %209 {approx = true} : vector<4x8x1xf32> -> vector<4x8x1xf32>
    %211 = vector.broadcast %210 : vector<4x8x1xf32> to vector<4x8x8xf32>
    %212 = arith.mulf %201, %211 : vector<4x8x8xf32>
    %213 = arith.truncf %212 : vector<4x8x8xf32> to vector<4x8x8xbf16>
    "tpu.trace_start"() <{level = 10 : i32, message = "bqk,bkd->bqd"}> : () -> ()
    %cst_71 = arith.constant dense<0.000000e+00> : vector<4x8x8xf32>
    %214 = tpu.matmul %213, %189, %cst_71 {dimension_numbers = #tpu.dot_dimension_numbers<[2], [1], [1], [2], [0, 0, 0, 1, 1, 2], [0], [0]>} : vector<4x8x8xbf16>, vector<4x8x8xbf16>, vector<4x8x8xf32> -> vector<4x8x8xf32>
    "tpu.trace_stop"() : () -> ()
    %215 = vector.broadcast %210 : vector<4x8x1xf32> to vector<4x8x8xf32>
    %216 = arith.mulf %204, %215 : vector<4x8x8xf32>
    %217 = arith.truncf %216 : vector<4x8x8xf32> to vector<4x8x8xbf16>
    "tpu.trace_start"() <{level = 10 : i32, message = "bqk,bkd->bqd"}> : () -> ()
    %cst_72 = arith.constant dense<0.000000e+00> : vector<4x8x8xf32>
    %218 = tpu.matmul %217, %191, %cst_72 {dimension_numbers = #tpu.dot_dimension_numbers<[2], [1], [1], [2], [0, 0, 0, 1, 1, 2], [0], [0]>} : vector<4x8x8xbf16>, vector<4x8x8xbf16>, vector<4x8x8xf32> -> vector<4x8x8xf32>
    "tpu.trace_stop"() : () -> ()
    %219 = arith.addf %214, %218 : vector<4x8x8xf32>
    %220 = arith.truncf %219 : vector<4x8x8xf32> to vector<4x8x8xbf16>
    %221 = tpu.concatenate %118, %152, %186, %220 in 2 : vector<4x8x8xbf16>, vector<4x8x8xbf16>, vector<4x8x8xbf16>, vector<4x8x8xbf16> -> vector<4x8x32xbf16>
    %222 = vector.shape_cast %221 : vector<4x8x32xbf16> to vector<32x32xbf16>
    %cst_73 = arith.constant dense<0.000000e+00> : vector<32x32xf32>
    %223 = tpu.matmul %222, %75, %cst_73 {dimension_numbers = #tpu.dot_dimension_numbers<[1], [0], [0], [1], [0, 0, 1, 1], [], []>} : vector<32x32xbf16>, vector<32x32xbf16>, vector<32x32xf32> -> vector<32x32xf32>
    %224 = vector.shape_cast %223 : vector<32x32xf32> to vector<4x8x32xf32>
    %225 = arith.addf %3, %224 : vector<4x8x32xf32>
    %c0_74 = arith.constant 0 : index
    %c0_75 = arith.constant 0 : index
    %c0_76 = arith.constant 0 : index
    %226 = vector.load %arg11[%c0_74, %c0_75, %c0_76] : memref<1x1x32xf32, #tpu.memory_space<vmem>>, vector<1x1x32xf32>
    %227 = vector.shape_cast %226 : vector<1x1x32xf32> to vector<1x32xf32>
    %c0_77 = arith.constant 0 : index
    %c0_78 = arith.constant 0 : index
    %c0_79 = arith.constant 0 : index
    %228 = vector.load %arg12[%c0_77, %c0_78, %c0_79] : memref<1x1x32xf32, #tpu.memory_space<vmem>>, vector<1x1x32xf32>
    %229 = vector.shape_cast %228 : vector<1x1x32xf32> to vector<1x32xf32>
    %cst_80 = arith.constant dense<0.000000e+00> : vector<4x8xf32>
    %230 = vector.multi_reduction <add>, %225, %cst_80 [2] : vector<4x8x32xf32> to vector<4x8xf32>
    %231 = vector.shape_cast %230 : vector<4x8xf32> to vector<4x8x1xf32>
    %cst_81 = arith.constant 3.200000e+01 : f32
    %232 = vector.broadcast %cst_81 : f32 to vector<4x8x1xf32>
    %233 = arith.divf %231, %232 : vector<4x8x1xf32>
    %234 = arith.mulf %225, %225 : vector<4x8x32xf32>
    %cst_82 = arith.constant dense<0.000000e+00> : vector<4x8xf32>
    %235 = vector.multi_reduction <add>, %234, %cst_82 [2] : vector<4x8x32xf32> to vector<4x8xf32>
    %236 = vector.shape_cast %235 : vector<4x8xf32> to vector<4x8x1xf32>
    %cst_83 = arith.constant 3.200000e+01 : f32
    %237 = vector.broadcast %cst_83 : f32 to vector<4x8x1xf32>
    %238 = arith.divf %236, %237 : vector<4x8x1xf32>
    %239 = arith.mulf %233, %233 : vector<4x8x1xf32>
    %240 = arith.subf %238, %239 : vector<4x8x1xf32>
    %cst_84 = arith.constant 0.000000e+00 : f32
    %241 = vector.broadcast %cst_84 : f32 to vector<4x8x1xf32>
    %242 = arith.maximumf %240, %241 : vector<4x8x1xf32>
    %243 = vector.broadcast %233 : vector<4x8x1xf32> to vector<4x8x32xf32>
    %244 = arith.subf %225, %243 : vector<4x8x32xf32>
    %cst_85 = arith.constant 9.99999974E-6 : f32
    %245 = vector.broadcast %cst_85 : f32 to vector<4x8x1xf32>
    %246 = arith.addf %242, %245 : vector<4x8x1xf32>
    %247 = math.rsqrt %246 : vector<4x8x1xf32>
    %248 = vector.broadcast %247 : vector<4x8x1xf32> to vector<4x8x32xf32>
    %249 = arith.mulf %244, %248 : vector<4x8x32xf32>
    %250 = vector.shape_cast %227 : vector<1x32xf32> to vector<1x1x32xf32>
    %251 = vector.broadcast %250 : vector<1x1x32xf32> to vector<4x8x32xf32>
    %252 = arith.mulf %249, %251 : vector<4x8x32xf32>
    %253 = vector.shape_cast %229 : vector<1x32xf32> to vector<1x1x32xf32>
    %254 = vector.broadcast %253 : vector<1x1x32xf32> to vector<4x8x32xf32>
    %255 = arith.addf %252, %254 : vector<4x8x32xf32>
    %256 = vector.shape_cast %255 : vector<4x8x32xf32> to vector<32x32xf32>
    %257 = arith.truncf %256 : vector<32x32xf32> to vector<32x32xbf16>
    %c0_86 = arith.constant 0 : index
    %c0_87 = arith.constant 0 : index
    %c0_88 = arith.constant 0 : index
    %258 = vector.load %arg13[%c0_86, %c0_87, %c0_88] : memref<1x32x128xbf16, #tpu.memory_space<vmem>>, vector<1x32x128xbf16>
    %259 = vector.shape_cast %258 : vector<1x32x128xbf16> to vector<32x128xbf16>
    %cst_89 = arith.constant dense<0.000000e+00> : vector<32x128xf32>
    %260 = tpu.matmul %257, %259, %cst_89 {dimension_numbers = #tpu.dot_dimension_numbers<[1], [0], [0], [1], [0, 0, 1, 1], [], []>} : vector<32x32xbf16>, vector<32x128xbf16>, vector<32x128xf32> -> vector<32x128xf32>
    %cst_90 = arith.constant 5.000000e-01 : f32
    %261 = vector.broadcast %cst_90 : f32 to vector<32x128xf32>
    %262 = arith.mulf %261, %260 : vector<32x128xf32>
    %cst_91 = arith.constant 0.707106769 : f32
    %263 = vector.broadcast %cst_91 : f32 to vector<32x128xf32>
    %264 = arith.mulf %260, %263 : vector<32x128xf32>
    %265 = math.erf %264 : vector<32x128xf32>
    %cst_92 = arith.constant 1.000000e+00 : f32
    %266 = vector.broadcast %cst_92 : f32 to vector<32x128xf32>
    %267 = arith.addf %266, %265 : vector<32x128xf32>
    %268 = arith.mulf %262, %267 : vector<32x128xf32>
    %269 = arith.truncf %268 : vector<32x128xf32> to vector<32x128xbf16>
    %c0_93 = arith.constant 0 : index
    %c0_94 = arith.constant 0 : index
    %c0_95 = arith.constant 0 : index
    %270 = vector.load %arg14[%c0_93, %c0_94, %c0_95] : memref<1x128x32xbf16, #tpu.memory_space<vmem>>, vector<1x128x32xbf16>
    %271 = vector.shape_cast %270 : vector<1x128x32xbf16> to vector<128x32xbf16>
    %cst_96 = arith.constant dense<0.000000e+00> : vector<32x32xf32>
    %272 = tpu.matmul %269, %271, %cst_96 {dimension_numbers = #tpu.dot_dimension_numbers<[1], [0], [0], [1], [0, 0, 1, 1], [], []>} : vector<32x128xbf16>, vector<128x32xbf16>, vector<32x32xf32> -> vector<32x32xf32>
    %273 = vector.shape_cast %272 : vector<32x32xf32> to vector<4x8x32xf32>
    %274 = arith.addf %225, %273 : vector<4x8x32xf32>
    %c0_97 = arith.constant 0 : index
    %c0_98 = arith.constant 0 : index
    %c0_99 = arith.constant 0 : index
    %275 = vector.load %arg18[%c0_97, %c0_98, %c0_99] : memref<4x8x32xf32, #tpu.memory_space<vmem>>, vector<4x8x32xf32>
    tpu.vector_store %arg18[%c0_97, %c0_98, %c0_99], %274 {strides = array<i32>} : memref<4x8x32xf32, #tpu.memory_space<vmem>>, vector<4x8x32xf32>,
    %c1_i32 = arith.constant 1 : i32
    %276 = arith.cmpi eq, %arg1, %c1_i32 : i32
    %277 = arith.extui %276 : i1 to i32
    %c0_i32_100 = arith.constant 0 : i32
    %278 = arith.cmpi ne, %277, %c0_i32_100 : i32
    scf.if %278 {
      %c0_101 = arith.constant 0 : index
      %c0_102 = arith.constant 0 : index
      %279 = vector.load %arg15[%c0_101, %c0_102] : memref<1x32xf32, #tpu.memory_space<vmem>>, vector<1x32xf32>
      %c0_103 = arith.constant 0 : index
      %c0_104 = arith.constant 0 : index
      %280 = vector.load %arg16[%c0_103, %c0_104] : memref<1x32xf32, #tpu.memory_space<vmem>>, vector<1x32xf32>
      %cst_105 = arith.constant dense<0.000000e+00> : vector<4x8xf32>
      %281 = vector.multi_reduction <add>, %274, %cst_105 [2] : vector<4x8x32xf32> to vector<4x8xf32>
      %282 = vector.shape_cast %281 : vector<4x8xf32> to vector<4x8x1xf32>
      %cst_106 = arith.constant 3.200000e+01 : f32
      %283 = vector.broadcast %cst_106 : f32 to vector<4x8x1xf32>
      %284 = arith.divf %282, %283 : vector<4x8x1xf32>
      %285 = arith.mulf %274, %274 : vector<4x8x32xf32>
      %cst_107 = arith.constant dense<0.000000e+00> : vector<4x8xf32>
      %286 = vector.multi_reduction <add>, %285, %cst_107 [2] : vector<4x8x32xf32> to vector<4x8xf32>
      %287 = vector.shape_cast %286 : vector<4x8xf32> to vector<4x8x1xf32>
      %cst_108 = arith.constant 3.200000e+01 : f32
      %288 = vector.broadcast %cst_108 : f32 to vector<4x8x1xf32>
      %289 = arith.divf %287, %288 : vector<4x8x1xf32>
      %290 = arith.mulf %284, %284 : vector<4x8x1xf32>
      %291 = arith.subf %289, %290 : vector<4x8x1xf32>
      %cst_109 = arith.constant 0.000000e+00 : f32
      %292 = vector.broadcast %cst_109 : f32 to vector<4x8x1xf32>
      %293 = arith.maximumf %291, %292 : vector<4x8x1xf32>
      %294 = vector.broadcast %284 : vector<4x8x1xf32> to vector<4x8x32xf32>
      %295 = arith.subf %274, %294 : vector<4x8x32xf32>
      %cst_110 = arith.constant 9.99999974E-6 : f32
      %296 = vector.broadcast %cst_110 : f32 to vector<4x8x1xf32>
      %297 = arith.addf %293, %296 : vector<4x8x1xf32>
      %298 = math.rsqrt %297 : vector<4x8x1xf32>
      %299 = vector.broadcast %298 : vector<4x8x1xf32> to vector<4x8x32xf32>
      %300 = arith.mulf %295, %299 : vector<4x8x32xf32>
      %301 = vector.shape_cast %279 : vector<1x32xf32> to vector<1x1x32xf32>
      %302 = vector.broadcast %301 : vector<1x1x32xf32> to vector<4x8x32xf32>
      %303 = arith.mulf %300, %302 : vector<4x8x32xf32>
      %304 = vector.shape_cast %280 : vector<1x32xf32> to vector<1x1x32xf32>
      %305 = vector.broadcast %304 : vector<1x1x32xf32> to vector<4x8x32xf32>
      %306 = arith.addf %303, %305 : vector<4x8x32xf32>
      %c0_111 = arith.constant 0 : index
      %c0_112 = arith.constant 0 : index
      %c0_113 = arith.constant 0 : index
      %307 = vector.load %arg17[%c0_111, %c0_112, %c0_113] : memref<4x8x32xf32, #tpu.memory_space<vmem>>, vector<4x8x32xf32>
      tpu.vector_store %arg17[%c0_111, %c0_112, %c0_113], %306 {strides = array<i32>} : memref<4x8x32xf32, #tpu.memory_space<vmem>>, vector<4x8x32xf32>,
    } else {
    }
    return
  }
  func.func @transform_0(%arg0: i32, %arg1: i32) -> (i32, i32, i32) {
    %c0_i32 = arith.constant 0 : i32
    %c0_i32_0 = arith.constant 0 : i32
    %c0_i32_1 = arith.constant 0 : i32
    return %arg0, %c0_i32, %c0_i32_0 : i32, i32, i32
  }
  func.func @transform_1(%arg0: i32, %arg1: i32) -> (i32, i32) {
    %c0_i32 = arith.constant 0 : i32
    %c0_i32_0 = arith.constant 0 : i32
    %c0_i32_1 = arith.constant 0 : i32
    return %c0_i32, %c0_i32_0 : i32, i32
  }
  func.func @transform_2(%arg0: i32, %arg1: i32) -> (i32, i32, i32) {
    %c0_i32 = arith.constant 0 : i32
    %c0_i32_0 = arith.constant 0 : i32
    %c0_i32_1 = arith.constant 0 : i32
    return %arg1, %c0_i32, %c0_i32_0 : i32, i32, i32
  }
  func.func @transform_3(%arg0: i32, %arg1: i32) -> (i32, i32, i32) {
    %c0_i32 = arith.constant 0 : i32
    %c0_i32_0 = arith.constant 0 : i32
    %c0_i32_1 = arith.constant 0 : i32
    return %arg1, %c0_i32, %c0_i32_0 : i32, i32, i32
  }
  func.func @transform_4(%arg0: i32, %arg1: i32) -> (i32, i32, i32) {
    %c0_i32 = arith.constant 0 : i32
    %c0_i32_0 = arith.constant 0 : i32
    %c0_i32_1 = arith.constant 0 : i32
    return %arg1, %c0_i32, %c0_i32_0 : i32, i32, i32
  }
  func.func @transform_5(%arg0: i32, %arg1: i32) -> (i32, i32, i32) {
    %c0_i32 = arith.constant 0 : i32
    %c0_i32_0 = arith.constant 0 : i32
    %c0_i32_1 = arith.constant 0 : i32
    return %arg1, %c0_i32, %c0_i32_0 : i32, i32, i32
  }
  func.func @transform_6(%arg0: i32, %arg1: i32) -> (i32, i32, i32) {
    %c0_i32 = arith.constant 0 : i32
    %c0_i32_0 = arith.constant 0 : i32
    %c0_i32_1 = arith.constant 0 : i32
    return %arg1, %c0_i32, %c0_i32_0 : i32, i32, i32
  }
  func.func @transform_7(%arg0: i32, %arg1: i32) -> (i32, i32, i32) {
    %c0_i32 = arith.constant 0 : i32
    %c0_i32_0 = arith.constant 0 : i32
    %c0_i32_1 = arith.constant 0 : i32
    return %arg1, %c0_i32, %c0_i32_0 : i32, i32, i32
  }
  func.func @transform_8(%arg0: i32, %arg1: i32) -> (i32, i32, i32) {
    %c0_i32 = arith.constant 0 : i32
    %c0_i32_0 = arith.constant 0 : i32
    %c0_i32_1 = arith.constant 0 : i32
    return %arg1, %c0_i32, %c0_i32_0 : i32, i32, i32
  }
  func.func @transform_9(%arg0: i32, %arg1: i32) -> (i32, i32, i32) {
    %c0_i32 = arith.constant 0 : i32
    %c0_i32_0 = arith.constant 0 : i32
    %c0_i32_1 = arith.constant 0 : i32
    return %arg1, %c0_i32, %c0_i32_0 : i32, i32, i32
  }
  func.func @transform_10(%arg0: i32, %arg1: i32) -> (i32, i32, i32) {
    %c0_i32 = arith.constant 0 : i32
    %c0_i32_0 = arith.constant 0 : i32
    %c0_i32_1 = arith.constant 0 : i32
    return %arg1, %c0_i32, %c0_i32_0 : i32, i32, i32
  }
  func.func @transform_11(%arg0: i32, %arg1: i32) -> (i32, i32, i32) {
    %c0_i32 = arith.constant 0 : i32
    %c0_i32_0 = arith.constant 0 : i32
    %c0_i32_1 = arith.constant 0 : i32
    return %arg1, %c0_i32, %c0_i32_0 : i32, i32, i32
  }
  func.func @transform_12(%arg0: i32, %arg1: i32) -> (i32, i32, i32) {
    %c0_i32 = arith.constant 0 : i32
    %c0_i32_0 = arith.constant 0 : i32
    %c0_i32_1 = arith.constant 0 : i32
    return %arg1, %c0_i32, %c0_i32_0 : i32, i32, i32
  }
  func.func @transform_13(%arg0: i32, %arg1: i32) -> (i32, i32) {
    %c0_i32 = arith.constant 0 : i32
    %c0_i32_0 = arith.constant 0 : i32
    %c0_i32_1 = arith.constant 0 : i32
    return %c0_i32, %c0_i32_0 : i32, i32
  }
  func.func @transform_14(%arg0: i32, %arg1: i32) -> (i32, i32) {
    %c0_i32 = arith.constant 0 : i32
    %c0_i32_0 = arith.constant 0 : i32
    %c0_i32_1 = arith.constant 0 : i32
    return %c0_i32, %c0_i32_0 : i32, i32
  }
  func.func @transform_15(%arg0: i32, %arg1: i32) -> (i32, i32, i32) {
    %c0_i32 = arith.constant 0 : i32
    %c0_i32_0 = arith.constant 0 : i32
    %c0_i32_1 = arith.constant 0 : i32
    return %arg0, %c0_i32, %c0_i32_0 : i32, i32, i32
  }
}

</mosaic_0001>

<llo_original>
// kernel: tpu_custom_call.1
$region0: #{tpu_custom_call.1}
  #allocation0 [shape = 'u32[]', space=smem, size = 0x4, offset = 0x4, fixed_abs, tag = 'smem constant byte address 0x4 - core index']
  #allocation1 [shape = 'u32[144,128]{1,0:T(1,128)}', space=vmem, size = 0x12000, scoped, tag = 'internal scratch']
  #allocation2 [shape = 'f32[4,8,32]{2,1,0:T(8,128)}', space=vmem, size = 0x4000, scoped, tag = 'scratch operand']
  %s0 = inlined_call_operand.vmem [shape: bf16[8,8,32], index: 0, kind: input, shape index: {}]
  %s1 = inlined_call_operand.hbm [shape: f32[8,32], index: 1, kind: input, shape index: {}]
  %s2 = inlined_call_operand.vmem [shape: f32[2,1,32], index: 2, kind: input, shape index: {}]
  %s3 = inlined_call_operand.vmem [shape: f32[2,1,32], index: 3, kind: input, shape index: {}]
  %s4 = inlined_call_operand.vmem [shape: f32[2,1,32], index: 4, kind: input, shape index: {}]
  %s5 = inlined_call_operand.vmem [shape: f32[2,1,32], index: 5, kind: input, shape index: {}]
  %s6 = inlined_call_operand.vmem [shape: bf16[2,32,32], index: 6, kind: input, shape index: {}]
  %s7 = inlined_call_operand.vmem [shape: bf16[2,32,64], index: 7, kind: input, shape index: {}]
  %s8 = inlined_call_operand.vmem [shape: bf16[2,32,32], index: 8, kind: input, shape index: {}]
  %s9 = inlined_call_operand.vmem [shape: f32[2,1,32], index: 9, kind: input, shape index: {}]
  %s10 = inlined_call_operand.vmem [shape: f32[2,1,32], index: 10, kind: input, shape index: {}]
  %s11 = inlined_call_operand.vmem [shape: bf16[2,32,128], index: 11, kind: input, shape index: {}]
  %s12 = inlined_call_operand.vmem [shape: bf16[2,128,32], index: 12, kind: input, shape index: {}]
  %s13 = inlined_call_operand.vmem [shape: f32[1,32], index: 13, kind: input, shape index: {}]
  %s14 = inlined_call_operand.vmem [shape: f32[1,32], index: 14, kind: input, shape index: {}]
  %s15 = inlined_call_operand.hbm [shape: f32[8,8,32], index: 15, kind: output, shape index: {}]
  %s16 = sld [smem:[#allocation0]]
  $region105: #{tpu_custom_call.1} parent=0
    _
  %s18 = ssub.s32 1, %s16
  %s19 = scalar_select 0, %s18, %s16
  $region1: #{tpu_custom_call.1} parent=0
    #allocation3 [shape = 'u8[4096]{0}', space=vmem, size = 0x1000, scoped, tag = 'input window, operand 1, single buffered']
    #allocation4 [shape = 's32[2]{0}', space=sflag, size = 0x8, scoped, tag = 'scoped memory for tpu_custom_call.1']
    #allocation5 [shape = 's32[2]{0}', space=sflag, size = 0x8, scoped, tag = 'scoped memory for tpu_custom_call.1']
    #allocation6 [shape = 'u8[32768]{0}', space=vmem, size = 0x8000, scoped, tag = 'output window, operand 0']
    %20 = vsyncpa [#allocation4], 0
    %21 = vsyncpa [#allocation5], 0
    %s22 = scalar_lea.sflag [#allocation5], 1
    %23 = vsyncpa %s22, 0
    loop: start=0, step=1, limit=6
    $region2: #{tpu_custom_call.1} parent=1 // loop_pre_header
      _
    $region3: #{tpu_custom_call.1} parent=1 // loop_header
      %s25 = sphi 0, %s29
      %p26 = scmp.ge.s32.totalorder %s25, 6
      %s32 = sphi 0, %s44
      %s33 = sphi 0, %s40
      %s34 = sphi 0, %s32
      %s35 = sphi 0, %s33
      %s36 = sphi 0, %s34
      %s37 = sphi 0, %s35
      %s47 = sphi 0, %s49
      %s50 = sphi 0, %s47
      %s51 = sphi 0, %s50
      %s67 = sphi 0, %s51
      %s71 = sphi 0, %s71
      %s73 = sphi 0, %s71
      %s74 = sphi 0, %s73
      %s88 = sphi 0, %s74
      %s94 = sphi 0, %s96
      %s97 = sphi 0, %s94
      %s98 = sphi 0, %s97
      %s114 = sphi 0, %s98
      %s120 = sphi 0, %s122
      %s123 = sphi 0, %s120
      %s124 = sphi 0, %s123
      %s140 = sphi 0, %s124
      %s146 = sphi 0, %s148
      %s149 = sphi 0, %s146
      %s150 = sphi 0, %s149
      %s166 = sphi 0, %s150
      %s172 = sphi 0, %s174
      %s175 = sphi 0, %s172
      %s176 = sphi 0, %s175
      %s192 = sphi 0, %s176
      %s198 = sphi 0, %s200
      %s201 = sphi 0, %s198
      %s202 = sphi 0, %s201
      %s218 = sphi 0, %s202
      %s224 = sphi 0, %s226
      %s227 = sphi 0, %s224
      %s228 = sphi 0, %s227
      %s244 = sphi 0, %s228
      %s250 = sphi 0, %s252
      %s253 = sphi 0, %s250
      %s254 = sphi 0, %s253
      %s270 = sphi 0, %s254
      %s276 = sphi 0, %s278
      %s279 = sphi 0, %s276
      %s280 = sphi 0, %s279
      %s296 = sphi 0, %s280
      %s302 = sphi 0, %s304
      %s305 = sphi 0, %s302
      %s306 = sphi 0, %s305
      %s322 = sphi 0, %s306
      %s328 = sphi 0, %s330
      %s331 = sphi 0, %s328
      %s332 = sphi 0, %s331
      %s348 = sphi 0, %s332
      %s354 = sphi 0, %s356
      %s357 = sphi 0, %s354
      %s358 = sphi 0, %s357
      %s374 = sphi 0, %s358
      %s378 = sphi 0, %s378
      %s380 = sphi 0, %s378
      %s381 = sphi 0, %s380
      %s395 = sphi 0, %s381
      %s399 = sphi 0, %s399
      %s401 = sphi 0, %s399
      %s402 = sphi 0, %s401
      %s416 = sphi 0, %s402
      %s422 = sphi 0, %s424
      %s425 = sphi 0, %s422
      %s426 = sphi 0, %s425
      %s442 = sphi 0, %s426
    $region4: #{tpu_custom_call.1} parent=1 // loop_header_branch
      %28 = sbr.rel (%p26) target = $region8
    $region5: #{tpu_custom_call.1} parent=1 // loop_body
      %s30 = ssub.s32 %s25, 1
      %s31 = ssub.s32 %s25, 2
      %s38 = sadd.s32 1, %s33
      %p39 = scmp.ge.s32.totalorder %s38, 2
      %s40 = scalar_select %p39, 0, %s38
      %s41 = sadd.s32 1, %s32
      %s42 = scalar_select %p39, %s41, %s32
      %p43 = scmp.ge.s32.totalorder %s42, 2
      %s44 = scalar_select %p43, 0, %s42
      %s45 = ssub.s32 %s32, %s44
      %p46 = scmp.eq.s32.totalorder %s45, 0
      %s48 = sadd.s32 %s47, 1
      %s49 = scalar_select %p46, %s47, %s48
      %p52 = pneg %p46
      %p53 = scmp.eq.s32.totalorder %s25, 3
      %p54 = por %p52, %p53
      %p55 = scmp.ne.s32.totalorder %s47, %s50
      %p56 = scmp.eq.s32.totalorder %s25, 0
      %p57 = por %p55, %p56
      %p58 = scmp.ne.s32.totalorder %s47, %s50
      %p59 = scmp.eq.s32.totalorder %s30, 3
      %p60 = por %p58, %p59
      %p61 = scmp.ne.s32.totalorder %s50, %s51
      %p62 = scmp.eq.s32.totalorder %s30, 0
      %p63 = por %p61, %p62
      %p64 = scmp.ne.s32.totalorder %s50, %s51
      %p65 = scmp.eq.s32.totalorder %s31, 3
      %p66 = por %p64, %p65
      %p68 = scmp.ne.s32.totalorder %s51, %s67
      %p69 = scmp.eq.s32.totalorder %s31, 0
      %p70 = por %p68, %p69
      %s72 = sadd.s32 %s71, 1
      %p75 = scmp.eq.s32.totalorder %s25, 3
      %p76 = scmp.ne.s32.totalorder %s71, %s73
      %p77 = scmp.eq.s32.totalorder %s25, 0
      %p78 = por %p76, %p77
      %p79 = scmp.ne.s32.totalorder %s71, %s73
      %p80 = scmp.eq.s32.totalorder %s30, 3
      %p81 = por %p79, %p80
      %p82 = scmp.ne.s32.totalorder %s73, %s74
      %p83 = scmp.eq.s32.totalorder %s30, 0
      %p84 = por %p82, %p83
      %p85 = scmp.ne.s32.totalorder %s73, %s74
      %p86 = scmp.eq.s32.totalorder %s31, 3
      %p87 = por %p85, %p86
      %p89 = scmp.ne.s32.totalorder %s74, %s88
      %p90 = scmp.eq.s32.totalorder %s31, 0
      %p91 = por %p89, %p90
      %s92 = ssub.s32 %s33, %s40
      %p93 = scmp.eq.s32.totalorder %s92, 0
      %s95 = sadd.s32 %s94, 1
      %s96 = scalar_select %p93, %s94, %s95
      %p99 = pneg %p93
      %p100 = scmp.eq.s32.totalorder %s25, 3
      %p101 = por %p99, %p100
      %p102 = scmp.ne.s32.totalorder %s94, %s97
      %p103 = scmp.eq.s32.totalorder %s25, 0
      %p104 = por %p102, %p103
      %p105 = scmp.ne.s32.totalorder %s94, %s97
      %p106 = scmp.eq.s32.totalorder %s30, 3
      %p107 = por %p105, %p106
      %p108 = scmp.ne.s32.totalorder %s97, %s98
      %p109 = scmp.eq.s32.totalorder %s30, 0
      %p110 = por %p108, %p109
      %p111 = scmp.ne.s32.totalorder %s97, %s98
      %p112 = scmp.eq.s32.totalorder %s31, 3
      %p113 = por %p111, %p112
      %p115 = scmp.ne.s32.totalorder %s98, %s114
      %p116 = scmp.eq.s32.totalorder %s31, 0
      %p117 = por %p115, %p116
      %s118 = ssub.s32 %s33, %s40
      %p119 = scmp.eq.s32.totalorder %s118, 0
      %s121 = sadd.s32 %s120, 1
      %s122 = scalar_select %p119, %s120, %s121
      %p125 = pneg %p119
      %p126 = scmp.eq.s32.totalorder %s25, 3
      %p127 = por %p125, %p126
      %p128 = scmp.ne.s32.totalorder %s120, %s123
      %p129 = scmp.eq.s32.totalorder %s25, 0
      %p130 = por %p128, %p129
      %p131 = scmp.ne.s32.totalorder %s120, %s123
      %p132 = scmp.eq.s32.totalorder %s30, 3
      %p133 = por %p131, %p132
      %p134 = scmp.ne.s32.totalorder %s123, %s124
      %p135 = scmp.eq.s32.totalorder %s30, 0
      %p136 = por %p134, %p135
      %p137 = scmp.ne.s32.totalorder %s123, %s124
      %p138 = scmp.eq.s32.totalorder %s31, 3
      %p139 = por %p137, %p138
      %p141 = scmp.ne.s32.totalorder %s124, %s140
      %p142 = scmp.eq.s32.totalorder %s31, 0
      %p143 = por %p141, %p142
      %s144 = ssub.s32 %s33, %s40
      %p145 = scmp.eq.s32.totalorder %s144, 0
      %s147 = sadd.s32 %s146, 1
      %s148 = scalar_select %p145, %s146, %s147
      %p151 = pneg %p145
      %p152 = scmp.eq.s32.totalorder %s25, 3
      %p153 = por %p151, %p152
      %p154 = scmp.ne.s32.totalorder %s146, %s149
      %p155 = scmp.eq.s32.totalorder %s25, 0
      %p156 = por %p154, %p155
      %p157 = scmp.ne.s32.totalorder %s146, %s149
      %p158 = scmp.eq.s32.totalorder %s30, 3
      %p159 = por %p157, %p158
      %p160 = scmp.ne.s32.totalorder %s149, %s150
      %p161 = scmp.eq.s32.totalorder %s30, 0
      %p162 = por %p160, %p161
      %p163 = scmp.ne.s32.totalorder %s149, %s150
      %p164 = scmp.eq.s32.totalorder %s31, 3
      %p165 = por %p163, %p164
      %p167 = scmp.ne.s32.totalorder %s150, %s166
      %p168 = scmp.eq.s32.totalorder %s31, 0
      %p169 = por %p167, %p168
      %s170 = ssub.s32 %s33, %s40
      %p171 = scmp.eq.s32.totalorder %s170, 0
      %s173 = sadd.s32 %s172, 1
      %s174 = scalar_select %p171, %s172, %s173
      %p177 = pneg %p171
      %p178 = scmp.eq.s32.totalorder %s25, 3
      %p179 = por %p177, %p178
      %p180 = scmp.ne.s32.totalorder %s172, %s175
      %p181 = scmp.eq.s32.totalorder %s25, 0
      %p182 = por %p180, %p181
      %p183 = scmp.ne.s32.totalorder %s172, %s175
      %p184 = scmp.eq.s32.totalorder %s30, 3
      %p185 = por %p183, %p184
      %p186 = scmp.ne.s32.totalorder %s175, %s176
      %p187 = scmp.eq.s32.totalorder %s30, 0
      %p188 = por %p186, %p187
      %p189 = scmp.ne.s32.totalorder %s175, %s176
      %p190 = scmp.eq.s32.totalorder %s31, 3
      %p191 = por %p189, %p190
      %p193 = scmp.ne.s32.totalorder %s176, %s192
      %p194 = scmp.eq.s32.totalorder %s31, 0
      %p195 = por %p193, %p194
      %s196 = ssub.s32 %s33, %s40
      %p197 = scmp.eq.s32.totalorder %s196, 0
      %s199 = sadd.s32 %s198, 1
      %s200 = scalar_select %p197, %s198, %s199
      %p203 = pneg %p197
      %p204 = scmp.eq.s32.totalorder %s25, 3
      %p205 = por %p203, %p204
      %p206 = scmp.ne.s32.totalorder %s198, %s201
      %p207 = scmp.eq.s32.totalorder %s25, 0
      %p208 = por %p206, %p207
      %p209 = scmp.ne.s32.totalorder %s198, %s201
      %p210 = scmp.eq.s32.totalorder %s30, 3
      %p211 = por %p209, %p210
      %p212 = scmp.ne.s32.totalorder %s201, %s202
      %p213 = scmp.eq.s32.totalorder %s30, 0
      %p214 = por %p212, %p213
      %p215 = scmp.ne.s32.totalorder %s201, %s202
      %p216 = scmp.eq.s32.totalorder %s31, 3
      %p217 = por %p215, %p216
      %p219 = scmp.ne.s32.totalorder %s202, %s218
      %p220 = scmp.eq.s32.totalorder %s31, 0
      %p221 = por %p219, %p220
      %s222 = ssub.s32 %s33, %s40
      %p223 = scmp.eq.s32.totalorder %s222, 0
      %s225 = sadd.s32 %s224, 1
      %s226 = scalar_select %p223, %s224, %s225
      %p229 = pneg %p223
      %p230 = scmp.eq.s32.totalorder %s25, 3
      %p231 = por %p229, %p230
      %p232 = scmp.ne.s32.totalorder %s224, %s227
      %p233 = scmp.eq.s32.totalorder %s25, 0
      %p234 = por %p232, %p233
      %p235 = scmp.ne.s32.totalorder %s224, %s227
      %p236 = scmp.eq.s32.totalorder %s30, 3
      %p237 = por %p235, %p236
      %p238 = scmp.ne.s32.totalorder %s227, %s228
      %p239 = scmp.eq.s32.totalorder %s30, 0
      %p240 = por %p238, %p239
      %p241 = scmp.ne.s32.totalorder %s227, %s228
      %p242 = scmp.eq.s32.totalorder %s31, 3
      %p243 = por %p241, %p242
      %p245 = scmp.ne.s32.totalorder %s228, %s244
      %p246 = scmp.eq.s32.totalorder %s31, 0
      %p247 = por %p245, %p246
      %s248 = ssub.s32 %s33, %s40
      %p249 = scmp.eq.s32.totalorder %s248, 0
      %s251 = sadd.s32 %s250, 1
      %s252 = scalar_select %p249, %s250, %s251
      %p255 = pneg %p249
      %p256 = scmp.eq.s32.totalorder %s25, 3
      %p257 = por %p255, %p256
      %p258 = scmp.ne.s32.totalorder %s250, %s253
      %p259 = scmp.eq.s32.totalorder %s25, 0
      %p260 = por %p258, %p259
      %p261 = scmp.ne.s32.totalorder %s250, %s253
      %p262 = scmp.eq.s32.totalorder %s30, 3
      %p263 = por %p261, %p262
      %p264 = scmp.ne.s32.totalorder %s253, %s254
      %p265 = scmp.eq.s32.totalorder %s30, 0
      %p266 = por %p264, %p265
      %p267 = scmp.ne.s32.totalorder %s253, %s254
      %p268 = scmp.eq.s32.totalorder %s31, 3
      %p269 = por %p267, %p268
      %p271 = scmp.ne.s32.totalorder %s254, %s270
      %p272 = scmp.eq.s32.totalorder %s31, 0
      %p273 = por %p271, %p272
      %s274 = ssub.s32 %s33, %s40
      %p275 = scmp.eq.s32.totalorder %s274, 0
      %s277 = sadd.s32 %s276, 1
      %s278 = scalar_select %p275, %s276, %s277
      %p281 = pneg %p275
      %p282 = scmp.eq.s32.totalorder %s25, 3
      %p283 = por %p281, %p282
      %p284 = scmp.ne.s32.totalorder %s276, %s279
      %p285 = scmp.eq.s32.totalorder %s25, 0
      %p286 = por %p284, %p285
      %p287 = scmp.ne.s32.totalorder %s276, %s279
      %p288 = scmp.eq.s32.totalorder %s30, 3
      %p289 = por %p287, %p288
      %p290 = scmp.ne.s32.totalorder %s279, %s280
      %p291 = scmp.eq.s32.totalorder %s30, 0
      %p292 = por %p290, %p291
      %p293 = scmp.ne.s32.totalorder %s279, %s280
      %p294 = scmp.eq.s32.totalorder %s31, 3
      %p295 = por %p293, %p294
      %p297 = scmp.ne.s32.totalorder %s280, %s296
      %p298 = scmp.eq.s32.totalorder %s31, 0
      %p299 = por %p297, %p298
      %s300 = ssub.s32 %s33, %s40
      %p301 = scmp.eq.s32.totalorder %s300, 0
      %s303 = sadd.s32 %s302, 1
      %s304 = scalar_select %p301, %s302, %s303
      %p307 = pneg %p301
      %p308 = scmp.eq.s32.totalorder %s25, 3
      %p309 = por %p307, %p308
      %p310 = scmp.ne.s32.totalorder %s302, %s305
      %p311 = scmp.eq.s32.totalorder %s25, 0
      %p312 = por %p310, %p311
      %p313 = scmp.ne.s32.totalorder %s302, %s305
      %p314 = scmp.eq.s32.totalorder %s30, 3
      %p315 = por %p313, %p314
      %p316 = scmp.ne.s32.totalorder %s305, %s306
      %p317 = scmp.eq.s32.totalorder %s30, 0
      %p318 = por %p316, %p317
      %p319 = scmp.ne.s32.totalorder %s305, %s306
      %p320 = scmp.eq.s32.totalorder %s31, 3
      %p321 = por %p319, %p320
      %p323 = scmp.ne.s32.totalorder %s306, %s322
      %p324 = scmp.eq.s32.totalorder %s31, 0
      %p325 = por %p323, %p324
      %s326 = ssub.s32 %s33, %s40
      %p327 = scmp.eq.s32.totalorder %s326, 0
      %s329 = sadd.s32 %s328, 1
      %s330 = scalar_select %p327, %s328, %s329
      %p333 = pneg %p327
      %p334 = scmp.eq.s32.totalorder %s25, 3
      %p335 = por %p333, %p334
      %p336 = scmp.ne.s32.totalorder %s328, %s331
      %p337 = scmp.eq.s32.totalorder %s25, 0
      %p338 = por %p336, %p337
      %p339 = scmp.ne.s32.totalorder %s328, %s331
      %p340 = scmp.eq.s32.totalorder %s30, 3
      %p341 = por %p339, %p340
      %p342 = scmp.ne.s32.totalorder %s331, %s332
      %p343 = scmp.eq.s32.totalorder %s30, 0
      %p344 = por %p342, %p343
      %p345 = scmp.ne.s32.totalorder %s331, %s332
      %p346 = scmp.eq.s32.totalorder %s31, 3
      %p347 = por %p345, %p346
      %p349 = scmp.ne.s32.totalorder %s332, %s348
      %p350 = scmp.eq.s32.totalorder %s31, 0
      %p351 = por %p349, %p350
      %s352 = ssub.s32 %s33, %s40
      %p353 = scmp.eq.s32.totalorder %s352, 0
      %s355 = sadd.s32 %s354, 1
      %s356 = scalar_select %p353, %s354, %s355
      %p359 = pneg %p353
      %p360 = scmp.eq.s32.totalorder %s25, 3
      %p361 = por %p359, %p360
      %p362 = scmp.ne.s32.totalorder %s354, %s357
      %p363 = scmp.eq.s32.totalorder %s25, 0
      %p364 = por %p362, %p363
      %p365 = scmp.ne.s32.totalorder %s354, %s357
      %p366 = scmp.eq.s32.totalorder %s30, 3
      %p367 = por %p365, %p366
      %p368 = scmp.ne.s32.totalorder %s357, %s358
      %p369 = scmp.eq.s32.totalorder %s30, 0
      %p370 = por %p368, %p369
      %p371 = scmp.ne.s32.totalorder %s357, %s358
      %p372 = scmp.eq.s32.totalorder %s31, 3
      %p373 = por %p371, %p372
      %p375 = scmp.ne.s32.totalorder %s358, %s374
      %p376 = scmp.eq.s32.totalorder %s31, 0
      %p377 = por %p375, %p376
      %s379 = sadd.s32 %s378, 1
      %p382 = scmp.eq.s32.totalorder %s25, 3
      %p383 = scmp.ne.s32.totalorder %s378, %s380
      %p384 = scmp.eq.s32.totalorder %s25, 0
      %p385 = por %p383, %p384
      %p386 = scmp.ne.s32.totalorder %s378, %s380
      %p387 = scmp.eq.s32.totalorder %s30, 3
      %p388 = por %p386, %p387
      %p389 = scmp.ne.s32.totalorder %s380, %s381
      %p390 = scmp.eq.s32.totalorder %s30, 0
      %p391 = por %p389, %p390
      %p392 = scmp.ne.s32.totalorder %s380, %s381
      %p393 = scmp.eq.s32.totalorder %s31, 3
      %p394 = por %p392, %p393
      %p396 = scmp.ne.s32.totalorder %s381, %s395
      %p397 = scmp.eq.s32.totalorder %s31, 0
      %p398 = por %p396, %p397
      %s400 = sadd.s32 %s399, 1
      %p403 = scmp.eq.s32.totalorder %s25, 3
      %p404 = scmp.ne.s32.totalorder %s399, %s401
      %p405 = scmp.eq.s32.totalorder %s25, 0
      %p406 = por %p404, %p405
      %p407 = scmp.ne.s32.totalorder %s399, %s401
      %p408 = scmp.eq.s32.totalorder %s30, 3
      %p409 = por %p407, %p408
      %p410 = scmp.ne.s32.totalorder %s401, %s402
      %p411 = scmp.eq.s32.totalorder %s30, 0
      %p412 = por %p410, %p411
      %p413 = scmp.ne.s32.totalorder %s401, %s402
      %p414 = scmp.eq.s32.totalorder %s31, 3
      %p415 = por %p413, %p414
      %p417 = scmp.ne.s32.totalorder %s402, %s416
      %p418 = scmp.eq.s32.totalorder %s31, 0
      %p419 = por %p417, %p418
      %s420 = ssub.s32 %s32, %s44
      %p421 = scmp.eq.s32.totalorder %s420, 0
      %s423 = sadd.s32 %s422, 1
      %s424 = scalar_select %p421, %s422, %s423
      %p427 = pneg %p421
      %p428 = scmp.eq.s32.totalorder %s25, 3
      %p429 = por %p427, %p428
      %p430 = scmp.ne.s32.totalorder %s422, %s425
      %p431 = scmp.eq.s32.totalorder %s25, 0
      %p432 = por %p430, %p431
      %p433 = scmp.ne.s32.totalorder %s422, %s425
      %p434 = scmp.eq.s32.totalorder %s30, 3
      %p435 = por %p433, %p434
      %p436 = scmp.ne.s32.totalorder %s425, %s426
      %p437 = scmp.eq.s32.totalorder %s30, 0
      %p438 = por %p436, %p437
      %p439 = scmp.ne.s32.totalorder %s425, %s426
      %p440 = scmp.eq.s32.totalorder %s31, 3
      %p441 = por %p439, %p440
      %p443 = scmp.ne.s32.totalorder %s426, %s442
      %p444 = scmp.eq.s32.totalorder %s31, 0
      %p445 = por %p443, %p444
      %p446 = scmp.le.s32.totalorder 1, %s25
      %p447 = scmp.lt.s32.totalorder %s25, 5
      %p448 = pnand %p446, %p447
      %p449 = pneg %p448
      // Predicated region
      $region9: #{tpu_custom_call.1} parent=5 // pred_check
        _
      $region10: #{tpu_custom_call.1} parent=5 // pred_check_branch
        %451 = sbr.rel (%p448) target = $region12
      $region11: #{tpu_custom_call.1} parent=5 // pred_region
        %s452 = ssub.s32 %s25, 1
        // Predicated region
        $region13: #{tpu_custom_call.1} parent=11 // pred_check
          %p453 = pneg %p84
        $region14: #{tpu_custom_call.1} parent=11 // pred_check_branch
          %455 = sbr.rel (%p453) target = $region16
        $region15: #{tpu_custom_call.1} parent=11 // pred_region
          %s457 = ssub.s32 128, 128
          %458 = vsyncadd [#allocation4], %s457
          %s460 = sshll.u32 [#allocation3], 4
          %s461 = int_to_ptr.vmem [resolvable:$true] %s460
          %463 = dma.hbm_to_vmem [thread:$0]  %s1, 128, %s461, [#allocation4]
        $region16: #{tpu_custom_call.1} parent=11 // pred_fallthru
          _
        // Predicated region
        $region17: #{tpu_custom_call.1} parent=11 // pred_check
          %p464 = pneg %p391
        $region18: #{tpu_custom_call.1} parent=11 // pred_check_branch
          %466 = sbr.rel (%p464) target = $region20
        $region19: #{tpu_custom_call.1} parent=11 // pred_region
          _
        $region20: #{tpu_custom_call.1} parent=11 // pred_fallthru
          _
        // Predicated region
        $region21: #{tpu_custom_call.1} parent=11 // pred_check
          %p467 = pneg %p412
        $region22: #{tpu_custom_call.1} parent=11 // pred_check_branch
          %469 = sbr.rel (%p467) target = $region24
        $region23: #{tpu_custom_call.1} parent=11 // pred_region
          _
        $region24: #{tpu_custom_call.1} parent=11 // pred_fallthru
          _
      $region12: #{tpu_custom_call.1} parent=5 // pred_fallthru
        _
      %p470 = scmp.lt.s32.totalorder %s25, 4
      // Predicated region
      $region25: #{tpu_custom_call.1} parent=5 // pred_check
        %p471 = pneg %p470
      $region26: #{tpu_custom_call.1} parent=5 // pred_check_branch
        %473 = sbr.rel (%p471) target = $region28
      $region27: #{tpu_custom_call.1} parent=5 // pred_region
        // Predicated region
        $region29: #{tpu_custom_call.1} parent=27 // pred_check
          %p474 = pneg %p57
        $region30: #{tpu_custom_call.1} parent=27 // pred_check_branch
          %476 = sbr.rel (%p474) target = $region32
        $region31: #{tpu_custom_call.1} parent=27 // pred_region
          %s477 = smul.u32 4, %s32
          %p478 = scmp.lt.s32.totalorder %s477, 7
          %s479 = scalar_select %p478, %s477, 7
          %s480 = smul.addr %s479, 4
          %s481 = scalar_lea.vmem %s0, %s480
          %s482 = smul.u32 4, %s32
        $region32: #{tpu_custom_call.1} parent=27 // pred_fallthru
          _
        // Predicated region
        $region33: #{tpu_custom_call.1} parent=27 // pred_check
          %p483 = pneg %p104
        $region34: #{tpu_custom_call.1} parent=27 // pred_check_branch
          %485 = sbr.rel (%p483) target = $region36
        $region35: #{tpu_custom_call.1} parent=27 // pred_region
          %p486 = scmp.lt.s32.totalorder %s33, 1
          %s487 = scalar_select %p486, %s33, 1
          %s488 = scalar_lea.vmem %s2, %s487
        $region36: #{tpu_custom_call.1} parent=27 // pred_fallthru
          _
        // Predicated region
        $region37: #{tpu_custom_call.1} parent=27 // pred_check
          %p489 = pneg %p130
        $region38: #{tpu_custom_call.1} parent=27 // pred_check_branch
          %491 = sbr.rel (%p489) target = $region40
        $region39: #{tpu_custom_call.1} parent=27 // pred_region
          %p492 = scmp.lt.s32.totalorder %s33, 1
          %s493 = scalar_select %p492, %s33, 1
          %s494 = scalar_lea.vmem %s3, %s493
        $region40: #{tpu_custom_call.1} parent=27 // pred_fallthru
          _
        // Predicated region
        $region41: #{tpu_custom_call.1} parent=27 // pred_check
          %p495 = pneg %p156
        $region42: #{tpu_custom_call.1} parent=27 // pred_check_branch
          %497 = sbr.rel (%p495) target = $region44
        $region43: #{tpu_custom_call.1} parent=27 // pred_region
          %p498 = scmp.lt.s32.totalorder %s33, 1
          %s499 = scalar_select %p498, %s33, 1
          %s500 = scalar_lea.vmem %s4, %s499
        $region44: #{tpu_custom_call.1} parent=27 // pred_fallthru
          _
        // Predicated region
        $region45: #{tpu_custom_call.1} parent=27 // pred_check
          %p501 = pneg %p182
        $region46: #{tpu_custom_call.1} parent=27 // pred_check_branch
          %503 = sbr.rel (%p501) target = $region48
        $region47: #{tpu_custom_call.1} parent=27 // pred_region
          %p504 = scmp.lt.s32.totalorder %s33, 1
          %s505 = scalar_select %p504, %s33, 1
          %s506 = scalar_lea.vmem %s5, %s505
        $region48: #{tpu_custom_call.1} parent=27 // pred_fallthru
          _
        // Predicated region
        $region49: #{tpu_custom_call.1} parent=27 // pred_check
          %p507 = pneg %p208
        $region50: #{tpu_custom_call.1} parent=27 // pred_check_branch
          %509 = sbr.rel (%p507) target = $region52
        $region51: #{tpu_custom_call.1} parent=27 // pred_region
          %p510 = scmp.lt.s32.totalorder %s33, 1
          %s511 = scalar_select %p510, %s33, 1
          %s512 = smul.addr %s511, 4
          %s513 = smul.addr %s512, 4
          %s514 = scalar_lea.vmem %s6, %s513
        $region52: #{tpu_custom_call.1} parent=27 // pred_fallthru
          _
        // Predicated region
        $region53: #{tpu_custom_call.1} parent=27 // pred_check
          %p515 = pneg %p234
        $region54: #{tpu_custom_call.1} parent=27 // pred_check_branch
          %517 = sbr.rel (%p515) target = $region56
        $region55: #{tpu_custom_call.1} parent=27 // pred_region
          %p518 = scmp.lt.s32.totalorder %s33, 1
          %s519 = scalar_select %p518, %s33, 1
          %s520 = smul.addr %s519, 4
          %s521 = smul.addr %s520, 4
          %s522 = scalar_lea.vmem %s7, %s521
        $region56: #{tpu_custom_call.1} parent=27 // pred_fallthru
          _
        // Predicated region
        $region57: #{tpu_custom_call.1} parent=27 // pred_check
          %p523 = pneg %p260
        $region58: #{tpu_custom_call.1} parent=27 // pred_check_branch
          %525 = sbr.rel (%p523) target = $region60
        $region59: #{tpu_custom_call.1} parent=27 // pred_region
          %p526 = scmp.lt.s32.totalorder %s33, 1
          %s527 = scalar_select %p526, %s33, 1
          %s528 = smul.addr %s527, 4
          %s529 = smul.addr %s528, 4
          %s530 = scalar_lea.vmem %s8, %s529
        $region60: #{tpu_custom_call.1} parent=27 // pred_fallthru
          _
        // Predicated region
        $region61: #{tpu_custom_call.1} parent=27 // pred_check
          %p531 = pneg %p286
        $region62: #{tpu_custom_call.1} parent=27 // pred_check_branch
          %533 = sbr.rel (%p531) target = $region64
        $region63: #{tpu_custom_call.1} parent=27 // pred_region
          %p534 = scmp.lt.s32.totalorder %s33, 1
          %s535 = scalar_select %p534, %s33, 1
          %s536 = scalar_lea.vmem %s9, %s535
        $region64: #{tpu_custom_call.1} parent=27 // pred_fallthru
          _
        // Predicated region
        $region65: #{tpu_custom_call.1} parent=27 // pred_check
          %p537 = pneg %p312
        $region66: #{tpu_custom_call.1} parent=27 // pred_check_branch
          %539 = sbr.rel (%p537) target = $region68
        $region67: #{tpu_custom_call.1} parent=27 // pred_region
          %p540 = scmp.lt.s32.totalorder %s33, 1
          %s541 = scalar_select %p540, %s33, 1
          %s542 = scalar_lea.vmem %s10, %s541
        $region68: #{tpu_custom_call.1} parent=27 // pred_fallthru
          _
        // Predicated region
        $region69: #{tpu_custom_call.1} parent=27 // pred_check
          %p543 = pneg %p338
        $region70: #{tpu_custom_call.1} parent=27 // pred_check_branch
          %545 = sbr.rel (%p543) target = $region72
        $region71: #{tpu_custom_call.1} parent=27 // pred_region
          %p546 = scmp.lt.s32.totalorder %s33, 1
          %s547 = scalar_select %p546, %s33, 1
          %s548 = smul.addr %s547, 4
          %s549 = smul.addr %s548, 4
          %s550 = scalar_lea.vmem %s11, %s549
        $region72: #{tpu_custom_call.1} parent=27 // pred_fallthru
          _
        // Predicated region
        $region73: #{tpu_custom_call.1} parent=27 // pred_check
          %p551 = pneg %p364
        $region74: #{tpu_custom_call.1} parent=27 // pred_check_branch
          %553 = sbr.rel (%p551) target = $region76
        $region75: #{tpu_custom_call.1} parent=27 // pred_region
          %p554 = scmp.lt.s32.totalorder %s33, 1
          %s555 = scalar_select %p554, %s33, 1
          %s556 = smul.addr %s555, 16
          %s557 = smul.addr %s556, 4
          %s558 = scalar_lea.vmem %s12, %s557
        $region76: #{tpu_custom_call.1} parent=27 // pred_fallthru
          _
      $region28: #{tpu_custom_call.1} parent=5 // pred_fallthru
        _
      %p559 = scmp.le.s32.totalorder 1, %s25
      %p560 = scmp.lt.s32.totalorder %s25, 5
      %p561 = pnand %p559, %p560
      %p562 = pneg %p561
      // Predicated region
      $region77: #{tpu_custom_call.1} parent=5 // pred_check
        _
      $region78: #{tpu_custom_call.1} parent=5 // pred_check_branch
        %564 = sbr.rel (%p561) target = $region80
      $region79: #{tpu_custom_call.1} parent=5 // pred_region
        %s565 = ssub.s32 %s25, 1
        // Predicated region
        $region81: #{tpu_custom_call.1} parent=79 // pred_check
          %p566 = pneg %p84
        $region82: #{tpu_custom_call.1} parent=79 // pred_check_branch
          %568 = sbr.rel (%p566) target = $region84
        $region83: #{tpu_custom_call.1} parent=79 // pred_region
          %569 = dma.done [#allocation4], 128
        $region84: #{tpu_custom_call.1} parent=79 // pred_fallthru
          _
        %s570 = smul.u32 4, %s34
        %p571 = scmp.lt.s32.totalorder %s570, 7
        %s572 = scalar_select %p571, %s570, 7
        %s573 = smul.addr %s572, 4
        %s574 = scalar_lea.vmem %s0, %s573
        %p575 = pneg %p63
        %p576 = pneg %p60
        %p577 = pneg %p84
        %p578 = pneg %p81
        %p579 = scmp.lt.s32.totalorder %s35, 1
        %s580 = scalar_select %p579, %s35, 1
        %s581 = scalar_lea.vmem %s2, %s580
        %p582 = pneg %p110
        %p583 = pneg %p107
        %p584 = scmp.lt.s32.totalorder %s35, 1
        %s585 = scalar_select %p584, %s35, 1
        %s586 = scalar_lea.vmem %s3, %s585
        %p587 = pneg %p136
        %p588 = pneg %p133
        %p589 = scmp.lt.s32.totalorder %s35, 1
        %s590 = scalar_select %p589, %s35, 1
        %s591 = scalar_lea.vmem %s4, %s590
        %p592 = pneg %p162
        %p593 = pneg %p159
        %p594 = scmp.lt.s32.totalorder %s35, 1
        %s595 = scalar_select %p594, %s35, 1
        %s596 = scalar_lea.vmem %s5, %s595
        %p597 = pneg %p188
        %p598 = pneg %p185
        %p599 = scmp.lt.s32.totalorder %s35, 1
        %s600 = scalar_select %p599, %s35, 1
        %s601 = smul.addr %s600, 4
        %s602 = smul.addr %s601, 4
        %s603 = scalar_lea.vmem %s6, %s602
        %p604 = pneg %p214
        %p605 = pneg %p211
        %p606 = scmp.lt.s32.totalorder %s35, 1
        %s607 = scalar_select %p606, %s35, 1
        %s608 = smul.addr %s607, 4
        %s609 = smul.addr %s608, 4
        %s610 = scalar_lea.vmem %s7, %s609
        %p611 = pneg %p240
        %p612 = pneg %p237
        %p613 = scmp.lt.s32.totalorder %s35, 1
        %s614 = scalar_select %p613, %s35, 1
        %s615 = smul.addr %s614, 4
        %s616 = smul.addr %s615, 4
        %s617 = scalar_lea.vmem %s8, %s616
        %p618 = pneg %p266
        %p619 = pneg %p263
        %p620 = scmp.lt.s32.totalorder %s35, 1
        %s621 = scalar_select %p620, %s35, 1
        %s622 = scalar_lea.vmem %s9, %s621
        %p623 = pneg %p292
        %p624 = pneg %p289
        %p625 = scmp.lt.s32.totalorder %s35, 1
        %s626 = scalar_select %p625, %s35, 1
        %s627 = scalar_lea.vmem %s10, %s626
        %p628 = pneg %p318
        %p629 = pneg %p315
        %p630 = scmp.lt.s32.totalorder %s35, 1
        %s631 = scalar_select %p630, %s35, 1
        %s632 = smul.addr %s631, 4
        %s633 = smul.addr %s632, 4
        %s634 = scalar_lea.vmem %s11, %s633
        %p635 = pneg %p344
        %p636 = pneg %p341
        %p637 = scmp.lt.s32.totalorder %s35, 1
        %s638 = scalar_select %p637, %s35, 1
        %s639 = smul.addr %s638, 16
        %s640 = smul.addr %s639, 4
        %s641 = scalar_lea.vmem %s12, %s640
        %p642 = pneg %p370
        %p643 = pneg %p367
        %p644 = pneg %p391
        %p645 = pneg %p388
        %p646 = pneg %p412
        %p647 = pneg %p409
        %p648 = pneg %p438
        %p649 = pneg %p435
        %s650 = sand.u32 %s425, 1
        %s651 = scalar_lea.sflag [#allocation5], %s650
        %s652 = sand.u32 %s425, 1
        %s653 = smul.addr %s652, 32
        %s654 = scalar_lea.vmem [#allocation6], %s653
        %s655 = smul.u32 4, %s34
        %p656 = scmp.lt.s32.totalorder %s655, 7
        %s657 = scalar_select %p656, %s655, 7
        %s658 = smul.addr %s657, 4
        %s659 = scalar_lea.vmem %s0, %s658
        %s660 = smul.u32 4, %s34
        %p661 = scmp.lt.s32.totalorder %s35, 1
        %s662 = scalar_select %p661, %s35, 1
        %s663 = scalar_lea.vmem %s2, %s662
        %p664 = scmp.lt.s32.totalorder %s35, 1
        %s665 = scalar_select %p664, %s35, 1
        %s666 = scalar_lea.vmem %s3, %s665
        %p667 = scmp.lt.s32.totalorder %s35, 1
        %s668 = scalar_select %p667, %s35, 1
        %s669 = scalar_lea.vmem %s4, %s668
        %p670 = scmp.lt.s32.totalorder %s35, 1
        %s671 = scalar_select %p670, %s35, 1
        %s672 = scalar_lea.vmem %s5, %s671
        %p673 = scmp.lt.s32.totalorder %s35, 1
        %s674 = scalar_select %p673, %s35, 1
        %s675 = smul.addr %s674, 4
        %s676 = smul.addr %s675, 4
        %s677 = scalar_lea.vmem %s6, %s676
        %p678 = scmp.lt.s32.totalorder %s35, 1
        %s679 = scalar_select %p678, %s35, 1
        %s680 = smul.addr %s679, 4
        %s681 = smul.addr %s680, 4
        %s682 = scalar_lea.vmem %s7, %s681
        %p683 = scmp.lt.s32.totalorder %s35, 1
        %s684 = scalar_select %p683, %s35, 1
        %s685 = smul.addr %s684, 4
        %s686 = smul.addr %s685, 4
        %s687 = scalar_lea.vmem %s8, %s686
        %p688 = scmp.lt.s32.totalorder %s35, 1
        %s689 = scalar_select %p688, %s35, 1
        %s690 = scalar_lea.vmem %s9, %s689
        %p691 = scmp.lt.s32.totalorder %s35, 1
        %s692 = scalar_select %p691, %s35, 1
        %s693 = scalar_lea.vmem %s10, %s692
        %p694 = scmp.lt.s32.totalorder %s35, 1
        %s695 = scalar_select %p694, %s35, 1
        %s696 = smul.addr %s695, 4
        %s697 = smul.addr %s696, 4
        %s698 = scalar_lea.vmem %s11, %s697
        %p699 = scmp.lt.s32.totalorder %s35, 1
        %s700 = scalar_select %p699, %s35, 1
        %s701 = smul.addr %s700, 16
        %s702 = smul.addr %s701, 4
        %s703 = scalar_lea.vmem %s12, %s702
        %s704 = smul.u32 4, %s34
        %p706 = scmp.eq.s32.totalorder %s35, 0
        // Predicated region
        $region85: #{tpu_custom_call.1} parent=79 // pred_check
          %p707 = pneg %p706
        $region86: #{tpu_custom_call.1} parent=79 // pred_check_branch
          %709 = sbr.rel (%p707) target = $region88
        $region87: #{tpu_custom_call.1} parent=79 // pred_region
          %v710 = vld [vmem:[#allocation3] sm:$0xff]
          %vm711 = vcmask 261120
          %712 = vst.msk [vmem:[#allocation2] sm:$0xff] %vm711, %v710
          %713 = vst.msk [vmem:[#allocation2 + $0x8] sm:$0xff] %vm711, %v710
          %714 = vst.msk [vmem:[#allocation2 + $0x10] sm:$0xff] %vm711, %v710
          %715 = vst.msk [vmem:[#allocation2 + $0x18] sm:$0xff] %vm711, %v710
        $region88: #{tpu_custom_call.1} parent=79 // pred_fallthru
          _
        %v716 = vld [vmem:[#allocation2] sm:$0xff]
        %v717 = vld [vmem:[#allocation2 + $0x8] sm:$0xff]
        %v718 = vld [vmem:[#allocation2 + $0x10] sm:$0xff]
        %v719 = vld [vmem:[#allocation2 + $0x18] sm:$0xff]
        %v720 = vld [vmem:[%s659] sm:$0xf]
        %v721 = vld [vmem:[%s659 + $0x4] sm:$0xf]
        %v722 = vld [vmem:[%s659 + $0x8] sm:$0xf]
        %v723 = vld [vmem:[%s659 + $0xc] sm:$0xf]
        %v724 = vunpack.c.l.bf16 %v720
        %v725 = vunpack.c.l.bf16 %v721
        %v726 = vunpack.c.l.bf16 %v722
        %v727 = vunpack.c.l.bf16 %v723
        %v728 = vld [vmem:[%s663] sm:$0x1]
        %v729 = vld [vmem:[%s666] sm:$0x1]
        %vm730 = vcmask 261120
        %v731 = vsel %vm730, %v724, 0.0
        %732 = vadd.xlane.f32.xlu0 %v731
        %v733 = vpop.xlane.xlu0 %732
        %v734 = vsel %vm730, %v725, 0.0
        %735 = vadd.xlane.f32.xlu0 %v734
        %v736 = vpop.xlane.xlu0 %735
        %v737 = vsel %vm730, %v726, 0.0
        %738 = vadd.xlane.f32.xlu0 %v737
        %v739 = vpop.xlane.xlu0 %738
        %v740 = vsel %vm730, %v727, 0.0
        %741 = vadd.xlane.f32.xlu0 %v740
        %v742 = vpop.xlane.xlu0 %741
        %v743 = vrcp.pop 32.0
        %v744 = vmul.f32 %v733, %v743
        %v745 = vmul.f32 %v736, %v743
        %v746 = vmul.f32 %v739, %v743
        %v747 = vmul.f32 %v742, %v743
        %v748 = vmul.f32 %v724, %v724
        %v749 = vmul.f32 %v725, %v725
        %v750 = vmul.f32 %v726, %v726
        %v751 = vmul.f32 %v727, %v727
        %v752 = vsel %vm730, %v748, 0.0
        %753 = vadd.xlane.f32.xlu0 %v752
        %v754 = vpop.xlane.xlu0 %753
        %v755 = vsel %vm730, %v749, 0.0
        %756 = vadd.xlane.f32.xlu0 %v755
        %v757 = vpop.xlane.xlu0 %756
        %v758 = vsel %vm730, %v750, 0.0
        %759 = vadd.xlane.f32.xlu0 %v758
        %v760 = vpop.xlane.xlu0 %759
        %v761 = vsel %vm730, %v751, 0.0
        %762 = vadd.xlane.f32.xlu0 %v761
        %v763 = vpop.xlane.xlu0 %762
        %v764 = vmul.f32 %v754, %v743
        %v765 = vmul.f32 %v757, %v743
        %v766 = vmul.f32 %v760, %v743
        %v767 = vmul.f32 %v763, %v743
        %v768 = vmul.f32 %v744, %v744
        %v769 = vmul.f32 %v745, %v745
        %v770 = vmul.f32 %v746, %v746
        %v771 = vmul.f32 %v747, %v747
        %v772 = vsub.f32 %v764, %v768
        %v773 = vsub.f32 %v765, %v769
        %v774 = vsub.f32 %v766, %v770
        %v775 = vsub.f32 %v767, %v771
        %v776 = vmax.f32 %v772, 0.0
        %v777 = vmax.f32 %v773, 0.0
        %v778 = vmax.f32 %v774, 0.0
        %v779 = vmax.f32 %v775, 0.0
        %v780 = vsub.f32 %v724, %v744
        %v781 = vsub.f32 %v725, %v745
        %v782 = vsub.f32 %v726, %v746
        %v783 = vsub.f32 %v727, %v747
        %v784 = vadd.f32 %v776, 1e-05
        %v785 = vadd.f32 %v777, 1e-05
        %v786 = vadd.f32 %v778, 1e-05
        %v787 = vadd.f32 %v779, 1e-05
        %v788 = vrsqrt.pop %v784
        %v789 = vrsqrt.pop %v785
        %v790 = vrsqrt.pop %v786
        %v791 = vrsqrt.pop %v787
        %v792 = vmul.f32 %v780, %v788
        %v793 = vmul.f32 %v781, %v789
        %v794 = vmul.f32 %v782, %v790
        %v795 = vmul.f32 %v783, %v791
        %v797 = vlaneseq
        %v798 = vshrl.u32 %v797, 7
        %v799 = vsub.s32 0, %v798
        %v800 = vrot.slane %v728, %v799
        %v802 = vmul.f32 %v792, %v800
        %v803 = vmul.f32 %v793, %v800
        %v804 = vmul.f32 %v794, %v800
        %v805 = vmul.f32 %v795, %v800
        %v807 = vlaneseq
        %v808 = vshrl.u32 %v807, 7
        %v809 = vsub.s32 0, %v808
        %v810 = vrot.slane %v729, %v809
        %v812 = vadd.f32 %v802, %v810
        %v813 = vadd.f32 %v803, %v810
        %v814 = vadd.f32 %v804, %v810
        %v815 = vadd.f32 %v805, %v810
        %v816 = vld [vmem:[%s669] sm:$0x1]
        %v817 = vld [vmem:[%s672] sm:$0x1]
        %v818 = vsel %vm730, %v716, 0.0
        %819 = vadd.xlane.f32.xlu0 %v818
        %v820 = vpop.xlane.xlu0 %819
        %v821 = vsel %vm730, %v717, 0.0
        %822 = vadd.xlane.f32.xlu0 %v821
        %v823 = vpop.xlane.xlu0 %822
        %v824 = vsel %vm730, %v718, 0.0
        %825 = vadd.xlane.f32.xlu0 %v824
        %v826 = vpop.xlane.xlu0 %825
        %v827 = vsel %vm730, %v719, 0.0
        %828 = vadd.xlane.f32.xlu0 %v827
        %v829 = vpop.xlane.xlu0 %828
        %v830 = vmul.f32 %v820, %v743
        %v831 = vmul.f32 %v823, %v743
        %v832 = vmul.f32 %v826, %v743
        %v833 = vmul.f32 %v829, %v743
        %v834 = vmul.f32 %v716, %v716
        %v835 = vmul.f32 %v717, %v717
        %v836 = vmul.f32 %v718, %v718
        %v837 = vmul.f32 %v719, %v719
        %v838 = vsel %vm730, %v834, 0.0
        %839 = vadd.xlane.f32.xlu0 %v838
        %v840 = vpop.xlane.xlu0 %839
        %v841 = vsel %vm730, %v835, 0.0
        %842 = vadd.xlane.f32.xlu0 %v841
        %v843 = vpop.xlane.xlu0 %842
        %v844 = vsel %vm730, %v836, 0.0
        %845 = vadd.xlane.f32.xlu0 %v844
        %v846 = vpop.xlane.xlu0 %845
        %v847 = vsel %vm730, %v837, 0.0
        %848 = vadd.xlane.f32.xlu0 %v847
        %v849 = vpop.xlane.xlu0 %848
        %v850 = vmul.f32 %v840, %v743
        %v851 = vmul.f32 %v843, %v743
        %v852 = vmul.f32 %v846, %v743
        %v853 = vmul.f32 %v849, %v743
        %v854 = vmul.f32 %v830, %v830
        %v855 = vmul.f32 %v831, %v831
        %v856 = vmul.f32 %v832, %v832
        %v857 = vmul.f32 %v833, %v833
        %v858 = vsub.f32 %v850, %v854
        %v859 = vsub.f32 %v851, %v855
        %v860 = vsub.f32 %v852, %v856
        %v861 = vsub.f32 %v853, %v857
        %v862 = vmax.f32 %v858, 0.0
        %v863 = vmax.f32 %v859, 0.0
        %v864 = vmax.f32 %v860, 0.0
        %v865 = vmax.f32 %v861, 0.0
        %v866 = vsub.f32 %v716, %v830
        %v867 = vsub.f32 %v717, %v831
        %v868 = vsub.f32 %v718, %v832
        %v869 = vsub.f32 %v719, %v833
        %v870 = vadd.f32 %v862, 1e-05
        %v871 = vadd.f32 %v863, 1e-05
        %v872 = vadd.f32 %v864, 1e-05
        %v873 = vadd.f32 %v865, 1e-05
        %v874 = vrsqrt.pop %v870
        %v875 = vrsqrt.pop %v871
        %v876 = vrsqrt.pop %v872
        %v877 = vrsqrt.pop %v873
        %v878 = vmul.f32 %v866, %v874
        %v879 = vmul.f32 %v867, %v875
        %v880 = vmul.f32 %v868, %v876
        %v881 = vmul.f32 %v869, %v877
        %v883 = vlaneseq
        %v884 = vshrl.u32 %v883, 7
        %v885 = vsub.s32 0, %v884
        %v886 = vrot.slane %v816, %v885
        %v888 = vmul.f32 %v878, %v886
        %v889 = vmul.f32 %v879, %v886
        %v890 = vmul.f32 %v880, %v886
        %v891 = vmul.f32 %v881, %v886
        %v893 = vlaneseq
        %v894 = vshrl.u32 %v893, 7
        %v895 = vsub.s32 0, %v894
        %v896 = vrot.slane %v817, %v895
        %v898 = vadd.f32 %v888, %v896
        %v899 = vadd.f32 %v889, %v896
        %v900 = vadd.f32 %v890, %v896
        %v901 = vadd.f32 %v891, %v896
        %v902 = vpack.c.bf16 %v813, %v812
        %v903 = vpack.c.bf16 %v815, %v814
        %v904 = vpack.c.bf16 %v899, %v898
        %v905 = vpack.c.bf16 %v901, %v900
        %v906 = vld [vmem:[%s677] sm:$0xf]
        %v907 = vld [vmem:[%s677 + $0x4] sm:$0xf]
        %v908 = vld [vmem:[%s677 + $0x8] sm:$0xf]
        %v909 = vld [vmem:[%s677 + $0xc] sm:$0xf]
        %v910 = vld [vmem:[%s682] sm:$0xf]
        %v911 = vld [vmem:[%s682 + $0x4] sm:$0xf]
        %v912 = vld [vmem:[%s682 + $0x8] sm:$0xf]
        %v913 = vld [vmem:[%s682 + $0xc] sm:$0xf]
        %v914 = vld [vmem:[%s687] sm:$0xf]
        %v915 = vld [vmem:[%s687 + $0x4] sm:$0xf]
        %v916 = vld [vmem:[%s687 + $0x8] sm:$0xf]
        %v917 = vld [vmem:[%s687 + $0xc] sm:$0xf]
        %v922 = vunpack.c.l.b16 %v906
        %v923 = vunpack.c.l.b16 %v907
        %v924 = vunpack.c.l.b16 %v908
        %v925 = vunpack.c.l.b16 %v909
        %v926 = vpack.c.b16 %v923, %v922
        %v927 = vpack.c.b16 %v925, %v924
        %v931 = vsel %vm730, %v904, 0
        %v934 = vsel %vm730, %v905, 0
        %936 = vmatprep.subr.bf16.mxu0 0
        %937 = vmatpush1.bf16.msra.mxu0 %v926
        %938 = vmatprep.subr.bf16.mxu0 0
        %939 = vmatpush1.bf16.msra.mxu0 %v927
        %940 = vmatprep.subr.bf16.mxu0 0
        %941 = vmatpush1.bf16.msra.mxu0 0
        %942 = vmatprep.subr.bf16.mxu0 0
        %943 = vmatpush1.bf16.msra.mxu0 0
        %944 = vmatprep.subr.bf16.mxu0 0
        %945 = vmatpush1.bf16.msra.mxu0 0
        %946 = vmatprep.subr.bf16.mxu0 0
        %947 = vmatpush1.bf16.msra.mxu0 0
        %948 = vmatprep.subr.bf16.mxu0 0
        %949 = vmatpush1.bf16.msra.mxu0 0
        %950 = vmatprep.subr.bf16.mxu0 0
        %951 = vmatpush1.bf16.msra.mxu0 0
        %952 = vmatprep.subr.bf16.mxu0 0
        %953 = vmatpush1.bf16.msra.mxu0 0
        %954 = vmatprep.subr.bf16.mxu0 0
        %955 = vmatpush1.bf16.msra.mxu0 0
        %956 = vmatprep.subr.bf16.mxu0 0
        %957 = vmatpush1.bf16.msra.mxu0 0
        %958 = vmatprep.subr.bf16.mxu0 0
        %959 = vmatpush1.bf16.msra.mxu0 0
        %960 = vmatprep.subr.bf16.mxu0 0
        %961 = vmatpush1.bf16.msra.mxu0 0
        %962 = vmatprep.subr.bf16.mxu0 0
        %963 = vmatpush1.bf16.msra.mxu0 0
        %964 = vmatprep.subr.bf16.mxu0 0
        %965 = vmatpush1.bf16.msra.mxu0 0
        %966 = vmatprep.subr.bf16.mxu0 0
        %967 = vmatpush1.bf16.msra.mxu0 0
        %968 = vmatprep.mubr.bf16.mxu0 0
        %969 = vmatmul.mubr.bf16.gmra.mrb[0].mxu0 %v931
        %v970 = vpop.f32.mrb[0].mxu0
        %v971 = vadd.f32 0.0, %v970
        %v972 = vpop.f32.mrb[0].mxu0
        %v973 = vpop.f32.mrb[0].mxu0
        %v974 = vadd.f32 0.0, %v973
        %v975 = vpop.f32.mrb[0].mxu0
        %976 = vmatprep.mubr.bf16.mxu0 0
        %977 = vmatmul.mubr.bf16.gmra.mrb[0].mxu0 %v934
        %v978 = vpop.f32.mrb[0].mxu0
        %v979 = vadd.f32 0.0, %v978
        %v980 = vpop.f32.mrb[0].mxu0
        %v981 = vpop.f32.mrb[0].mxu0
        %v982 = vadd.f32 0.0, %v981
        %v983 = vpop.f32.mrb[0].mxu0
        %984 = vdwg.mxu0
        %v985 = vpack.c.bf16 %v974, %v971
        %v986 = vpack.c.bf16 %v982, %v979
        %v989 = vunpack.c.l.b16 %v985
        %v990 = vunpack.c.h.b16 %v985
        %v991 = vunpack.c.l.b16 %v986
        %v992 = vunpack.c.h.b16 %v986
        %v993 = vpack.c.b16 %v989, %v989
        %v994 = vpack.c.b16 %v990, %v990
        %v995 = vpack.c.b16 %v991, %v991
        %v996 = vpack.c.b16 %v992, %v992
        %v1001 = vunpack.c.l.b16 %v910
        %v1002 = vunpack.c.l.b16 %v911
        %v1003 = vunpack.c.l.b16 %v912
        %v1004 = vunpack.c.l.b16 %v913
        %v1005 = vpack.c.b16 %v1002, %v1001
        %v1006 = vpack.c.b16 %v1004, %v1003
        %v1010 = vsel %vm730, %v902, 0
        %v1013 = vsel %vm730, %v903, 0
        %1015 = vmatprep.subr.bf16.mxu0 0
        %1016 = vmatpush1.bf16.msra.mxu0 %v1005
        %1017 = vmatprep.subr.bf16.mxu0 0
        %1018 = vmatpush1.bf16.msra.mxu0 %v1006
        %1019 = vmatprep.subr.bf16.mxu0 0
        %1020 = vmatpush1.bf16.msra.mxu0 0
        %1021 = vmatprep.subr.bf16.mxu0 0
        %1022 = vmatpush1.bf16.msra.mxu0 0
        %1023 = vmatprep.subr.bf16.mxu0 0
        %1024 = vmatpush1.bf16.msra.mxu0 0
        %1025 = vmatprep.subr.bf16.mxu0 0
        %1026 = vmatpush1.bf16.msra.mxu0 0
        %1027 = vmatprep.subr.bf16.mxu0 0
        %1028 = vmatpush1.bf16.msra.mxu0 0
        %1029 = vmatprep.subr.bf16.mxu0 0
        %1030 = vmatpush1.bf16.msra.mxu0 0
        %1031 = vmatprep.subr.bf16.mxu0 0
        %1032 = vmatpush1.bf16.msra.mxu0 0
        %1033 = vmatprep.subr.bf16.mxu0 0
        %1034 = vmatpush1.bf16.msra.mxu0 0
        %1035 = vmatprep.subr.bf16.mxu0 0
        %1036 = vmatpush1.bf16.msra.mxu0 0
        %1037 = vmatprep.subr.bf16.mxu0 0
        %1038 = vmatpush1.bf16.msra.mxu0 0
        %1039 = vmatprep.subr.bf16.mxu0 0
        %1040 = vmatpush1.bf16.msra.mxu0 0
        %1041 = vmatprep.subr.bf16.mxu0 0
        %1042 = vmatpush1.bf16.msra.mxu0 0
        %1043 = vmatprep.subr.bf16.mxu0 0
        %1044 = vmatpush1.bf16.msra.mxu0 0
        %1045 = vmatprep.subr.bf16.mxu0 0
        %1046 = vmatpush1.bf16.msra.mxu0 0
        %1047 = vmatprep.mubr.bf16.mxu0 0
        %1048 = vmatmul.mubr.bf16.gmra.mrb[0].mxu0 %v1010
        %v1049 = vpop.f32.mrb[0].mxu0
        %v1050 = vadd.f32 0.0, %v1049
        %v1051 = vpop.f32.mrb[0].mxu0
        %v1052 = vpop.f32.mrb[0].mxu0
        %v1053 = vadd.f32 0.0, %v1052
        %v1054 = vpop.f32.mrb[0].mxu0
        %1055 = vmatprep.mubr.bf16.mxu0 0
        %1056 = vmatmul.mubr.bf16.gmra.mrb[0].mxu0 %v1013
        %v1057 = vpop.f32.mrb[0].mxu0
        %v1058 = vadd.f32 0.0, %v1057
        %v1059 = vpop.f32.mrb[0].mxu0
        %v1060 = vpop.f32.mrb[0].mxu0
        %v1061 = vadd.f32 0.0, %v1060
        %v1062 = vpop.f32.mrb[0].mxu0
        %1063 = vdwg.mxu0
        %v1064 = vpack.c.bf16 %v1053, %v1050
        %v1065 = vpack.c.bf16 %v1061, %v1058
        %v1068 = vunpack.c.l.b16 %v1064
        %v1069 = vunpack.c.h.b16 %v1064
        %v1070 = vunpack.c.l.b16 %v1065
        %v1071 = vunpack.c.h.b16 %v1065
        %v1072 = vpack.c.b16 %v1068, %v1068
        %v1073 = vpack.c.b16 %v1069, %v1069
        %v1074 = vpack.c.b16 %v1070, %v1070
        %v1075 = vpack.c.b16 %v1071, %v1071
        %1076 = vmatprep.subr.bf16.mxu0 0
        %1077 = vmatpush1.bf16.msra.mxu0 %v1005
        %1078 = vmatprep.subr.bf16.mxu0 0
        %1079 = vmatpush1.bf16.msra.mxu0 %v1006
        %1080 = vmatprep.subr.bf16.mxu0 0
        %1081 = vmatpush1.bf16.msra.mxu0 0
        %1082 = vmatprep.subr.bf16.mxu0 0
        %1083 = vmatpush1.bf16.msra.mxu0 0
        %1084 = vmatprep.subr.bf16.mxu0 0
        %1085 = vmatpush1.bf16.msra.mxu0 0
        %1086 = vmatprep.subr.bf16.mxu0 0
        %1087 = vmatpush1.bf16.msra.mxu0 0
        %1088 = vmatprep.subr.bf16.mxu0 0
        %1089 = vmatpush1.bf16.msra.mxu0 0
        %1090 = vmatprep.subr.bf16.mxu0 0
        %1091 = vmatpush1.bf16.msra.mxu0 0
        %1092 = vmatprep.subr.bf16.mxu0 0
        %1093 = vmatpush1.bf16.msra.mxu0 0
        %1094 = vmatprep.subr.bf16.mxu0 0
        %1095 = vmatpush1.bf16.msra.mxu0 0
        %1096 = vmatprep.subr.bf16.mxu0 0
        %1097 = vmatpush1.bf16.msra.mxu0 0
        %1098 = vmatprep.subr.bf16.mxu0 0
        %1099 = vmatpush1.bf16.msra.mxu0 0
        %1100 = vmatprep.subr.bf16.mxu0 0
        %1101 = vmatpush1.bf16.msra.mxu0 0
        %1102 = vmatprep.subr.bf16.mxu0 0
        %1103 = vmatpush1.bf16.msra.mxu0 0
        %1104 = vmatprep.subr.bf16.mxu0 0
        %1105 = vmatpush1.bf16.msra.mxu0 0
        %1106 = vmatprep.subr.bf16.mxu0 0
        %1107 = vmatpush1.bf16.msra.mxu0 0
        %1108 = vmatprep.mubr.bf16.mxu0 0
        %1109 = vmatmul.mubr.bf16.gmra.mrb[0].mxu0 %v931
        %v1110 = vpop.f32.mrb[0].mxu0
        %v1111 = vadd.f32 0.0, %v1110
        %v1112 = vpop.f32.mrb[0].mxu0
        %v1113 = vpop.f32.mrb[0].mxu0
        %v1114 = vadd.f32 0.0, %v1113
        %v1115 = vpop.f32.mrb[0].mxu0
        %1116 = vmatprep.mubr.bf16.mxu0 0
        %1117 = vmatmul.mubr.bf16.gmra.mrb[0].mxu0 %v934
        %v1118 = vpop.f32.mrb[0].mxu0
        %v1119 = vadd.f32 0.0, %v1118
        %v1120 = vpop.f32.mrb[0].mxu0
        %v1121 = vpop.f32.mrb[0].mxu0
        %v1122 = vadd.f32 0.0, %v1121
        %v1123 = vpop.f32.mrb[0].mxu0
        %1124 = vdwg.mxu0
        %v1125 = vpack.c.bf16 %v1114, %v1111
        %v1126 = vpack.c.bf16 %v1122, %v1119
        %v1129 = vunpack.c.l.b16 %v1125
        %v1130 = vunpack.c.h.b16 %v1125
        %v1131 = vunpack.c.l.b16 %v1126
        %v1132 = vunpack.c.h.b16 %v1126
        %v1133 = vpack.c.b16 %v1129, %v1129
        %v1134 = vpack.c.b16 %v1130, %v1130
        %v1135 = vpack.c.b16 %v1131, %v1131
        %v1136 = vpack.c.b16 %v1132, %v1132
        %vm1137 = vcmask 64512
        %v1139 = vsel %vm1137, %v993, 0
        %v1142 = vsel %vm1137, %v1072, 0
        %1144 = vmatprep.subr.bf16.mxu0 0
        %1145 = vmatpush1.bf16.xpose.msra.mxu0 %v1142
        %1146 = vmatprep.subr.bf16.mxu0 0
        %1147 = vmatpush1.bf16.xpose.msra.mxu0 0
        %1148 = vmatprep.subr.bf16.mxu0 0
        %1149 = vmatpush1.bf16.xpose.msra.mxu0 0
        %1150 = vmatprep.subr.bf16.mxu0 0
        %1151 = vmatpush1.bf16.xpose.msra.mxu0 0
        %1152 = vmatprep.subr.bf16.mxu0 0
        %1153 = vmatpush1.bf16.xpose.msra.mxu0 0
        %1154 = vmatprep.subr.bf16.mxu0 0
        %1155 = vmatpush1.bf16.xpose.msra.mxu0 0
        %1156 = vmatprep.subr.bf16.mxu0 0
        %1157 = vmatpush1.bf16.xpose.msra.mxu0 0
        %1158 = vmatprep.subr.bf16.mxu0 0
        %1159 = vmatpush1.bf16.xpose.msra.mxu0 0
        %1160 = vmatprep.subr.bf16.mxu0 0
        %1161 = vmatpush1.bf16.xpose.msra.mxu0 0
        %1162 = vmatprep.subr.bf16.mxu0 0
        %1163 = vmatpush1.bf16.xpose.msra.mxu0 0
        %1164 = vmatprep.subr.bf16.mxu0 0
        %1165 = vmatpush1.bf16.xpose.msra.mxu0 0
        %1166 = vmatprep.subr.bf16.mxu0 0
        %1167 = vmatpush1.bf16.xpose.msra.mxu0 0
        %1168 = vmatprep.subr.bf16.mxu0 0
        %1169 = vmatpush1.bf16.xpose.msra.mxu0 0
        %1170 = vmatprep.subr.bf16.mxu0 0
        %1171 = vmatpush1.bf16.xpose.msra.mxu0 0
        %1172 = vmatprep.subr.bf16.mxu0 0
        %1173 = vmatpush1.bf16.xpose.msra.mxu0 0
        %1174 = vmatprep.subr.bf16.mxu0 0
        %1175 = vmatpush1.bf16.xpose.msra.mxu0 0
        %1176 = vmatprep.mubr.bf16.mxu0 0
        %1177 = vmatmul.mubr.bf16.gmra.mrb[0].mxu0 %v1139
        %v1178 = vpop.f32.mrb[0].mxu0
        %v1179 = vadd.f32 0.0, %v1178
        %v1180 = vpop.f32.mrb[0].mxu0
        %v1181 = vpop.f32.mrb[0].mxu0
        %v1182 = vpop.f32.mrb[0].mxu0
        %1183 = vdwg.mxu0
        %v1185 = vsel %vm1137, %v994, 0
        %v1188 = vsel %vm1137, %v1073, 0
        %1190 = vmatprep.subr.bf16.mxu0 0
        %1191 = vmatpush1.bf16.xpose.msra.mxu0 %v1188
        %1192 = vmatprep.subr.bf16.mxu0 0
        %1193 = vmatpush1.bf16.xpose.msra.mxu0 0
        %1194 = vmatprep.subr.bf16.mxu0 0
        %1195 = vmatpush1.bf16.xpose.msra.mxu0 0
        %1196 = vmatprep.subr.bf16.mxu0 0
        %1197 = vmatpush1.bf16.xpose.msra.mxu0 0
        %1198 = vmatprep.subr.bf16.mxu0 0
        %1199 = vmatpush1.bf16.xpose.msra.mxu0 0
        %1200 = vmatprep.subr.bf16.mxu0 0
        %1201 = vmatpush1.bf16.xpose.msra.mxu0 0
        %1202 = vmatprep.subr.bf16.mxu0 0
        %1203 = vmatpush1.bf16.xpose.msra.mxu0 0
        %1204 = vmatprep.subr.bf16.mxu0 0
        %1205 = vmatpush1.bf16.xpose.msra.mxu0 0
        %1206 = vmatprep.subr.bf16.mxu0 0
        %1207 = vmatpush1.bf16.xpose.msra.mxu0 0
        %1208 = vmatprep.subr.bf16.mxu0 0
        %1209 = vmatpush1.bf16.xpose.msra.mxu0 0
        %1210 = vmatprep.subr.bf16.mxu0 0
        %1211 = vmatpush1.bf16.xpose.msra.mxu0 0
        %1212 = vmatprep.subr.bf16.mxu0 0
        %1213 = vmatpush1.bf16.xpose.msra.mxu0 0
        %1214 = vmatprep.subr.bf16.mxu0 0
        %1215 = vmatpush1.bf16.xpose.msra.mxu0 0
        %1216 = vmatprep.subr.bf16.mxu0 0
        %1217 = vmatpush1.bf16.xpose.msra.mxu0 0
        %1218 = vmatprep.subr.bf16.mxu0 0
        %1219 = vmatpush1.bf16.xpose.msra.mxu0 0
        %1220 = vmatprep.subr.bf16.mxu0 0
        %1221 = vmatpush1.bf16.xpose.msra.mxu0 0
        %1222 = vmatprep.mubr.bf16.mxu0 0
        %1223 = vmatmul.mubr.bf16.gmra.mrb[0].mxu0 %v1185
        %v1224 = vpop.f32.mrb[0].mxu0
        %v1225 = vadd.f32 0.0, %v1224
        %v1226 = vpop.f32.mrb[0].mxu0
        %v1227 = vpop.f32.mrb[0].mxu0
        %v1228 = vpop.f32.mrb[0].mxu0
        %1229 = vdwg.mxu0
        %v1231 = vsel %vm1137, %v995, 0
        %v1234 = vsel %vm1137, %v1074, 0
        %1236 = vmatprep.subr.bf16.mxu0 0
        %1237 = vmatpush1.bf16.xpose.msra.mxu0 %v1234
        %1238 = vmatprep.subr.bf16.mxu0 0
        %1239 = vmatpush1.bf16.xpose.msra.mxu0 0
        %1240 = vmatprep.subr.bf16.mxu0 0
        %1241 = vmatpush1.bf16.xpose.msra.mxu0 0
        %1242 = vmatprep.subr.bf16.mxu0 0
        %1243 = vmatpush1.bf16.xpose.msra.mxu0 0
        %1244 = vmatprep.subr.bf16.mxu0 0
        %1245 = vmatpush1.bf16.xpose.msra.mxu0 0
        %1246 = vmatprep.subr.bf16.mxu0 0
        %1247 = vmatpush1.bf16.xpose.msra.mxu0 0
        %1248 = vmatprep.subr.bf16.mxu0 0
        %1249 = vmatpush1.bf16.xpose.msra.mxu0 0
        %1250 = vmatprep.subr.bf16.mxu0 0
        %1251 = vmatpush1.bf16.xpose.msra.mxu0 0
        %1252 = vmatprep.subr.bf16.mxu0 0
        %1253 = vmatpush1.bf16.xpose.msra.mxu0 0
        %1254 = vmatprep.subr.bf16.mxu0 0
        %1255 = vmatpush1.bf16.xpose.msra.mxu0 0
        %1256 = vmatprep.subr.bf16.mxu0 0
        %1257 = vmatpush1.bf16.xpose.msra.mxu0 0
        %1258 = vmatprep.subr.bf16.mxu0 0
        %1259 = vmatpush1.bf16.xpose.msra.mxu0 0
        %1260 = vmatprep.subr.bf16.mxu0 0
        %1261 = vmatpush1.bf16.xpose.msra.mxu0 0
        %1262 = vmatprep.subr.bf16.mxu0 0
        %1263 = vmatpush1.bf16.xpose.msra.mxu0 0
        %1264 = vmatprep.subr.bf16.mxu0 0
        %1265 = vmatpush1.bf16.xpose.msra.mxu0 0
        %1266 = vmatprep.subr.bf16.mxu0 0
        %1267 = vmatpush1.bf16.xpose.msra.mxu0 0
        %1268 = vmatprep.mubr.bf16.mxu0 0
        %1269 = vmatmul.mubr.bf16.gmra.mrb[0].mxu0 %v1231
        %v1270 = vpop.f32.mrb[0].mxu0
        %v1271 = vadd.f32 0.0, %v1270
        %v1272 = vpop.f32.mrb[0].mxu0
        %v1273 = vpop.f32.mrb[0].mxu0
        %v1274 = vpop.f32.mrb[0].mxu0
        %1275 = vdwg.mxu0
        %v1277 = vsel %vm1137, %v996, 0
        %v1280 = vsel %vm1137, %v1075, 0
        %1282 = vmatprep.subr.bf16.mxu0 0
        %1283 = vmatpush1.bf16.xpose.msra.mxu0 %v1280
        %1284 = vmatprep.subr.bf16.mxu0 0
        %1285 = vmatpush1.bf16.xpose.msra.mxu0 0
        %1286 = vmatprep.subr.bf16.mxu0 0
        %1287 = vmatpush1.bf16.xpose.msra.mxu0 0
        %1288 = vmatprep.subr.bf16.mxu0 0
        %1289 = vmatpush1.bf16.xpose.msra.mxu0 0
        %1290 = vmatprep.subr.bf16.mxu0 0
        %1291 = vmatpush1.bf16.xpose.msra.mxu0 0
        %1292 = vmatprep.subr.bf16.mxu0 0
        %1293 = vmatpush1.bf16.xpose.msra.mxu0 0
        %1294 = vmatprep.subr.bf16.mxu0 0
        %1295 = vmatpush1.bf16.xpose.msra.mxu0 0
        %1296 = vmatprep.subr.bf16.mxu0 0
        %1297 = vmatpush1.bf16.xpose.msra.mxu0 0
        %1298 = vmatprep.subr.bf16.mxu0 0
        %1299 = vmatpush1.bf16.xpose.msra.mxu0 0
        %1300 = vmatprep.subr.bf16.mxu0 0
        %1301 = vmatpush1.bf16.xpose.msra.mxu0 0
        %1302 = vmatprep.subr.bf16.mxu0 0
        %1303 = vmatpush1.bf16.xpose.msra.mxu0 0
        %1304 = vmatprep.subr.bf16.mxu0 0
        %1305 = vmatpush1.bf16.xpose.msra.mxu0 0
        %1306 = vmatprep.subr.bf16.mxu0 0
        %1307 = vmatpush1.bf16.xpose.msra.mxu0 0
        %1308 = vmatprep.subr.bf16.mxu0 0
        %1309 = vmatpush1.bf16.xpose.msra.mxu0 0
        %1310 = vmatprep.subr.bf16.mxu0 0
        %1311 = vmatpush1.bf16.xpose.msra.mxu0 0
        %1312 = vmatprep.subr.bf16.mxu0 0
        %1313 = vmatpush1.bf16.xpose.msra.mxu0 0
        %1314 = vmatprep.mubr.bf16.mxu0 0
        %1315 = vmatmul.mubr.bf16.gmra.mrb[0].mxu0 %v1277
        %v1316 = vpop.f32.mrb[0].mxu0
        %v1317 = vadd.f32 0.0, %v1316
        %v1318 = vpop.f32.mrb[0].mxu0
        %v1319 = vpop.f32.mrb[0].mxu0
        %v1320 = vpop.f32.mrb[0].mxu0
        %1321 = vdwg.mxu0
        %v1323 = vsel %vm1137, %v1133, 0
        %1325 = vmatprep.subr.bf16.mxu0 0
        %1326 = vmatpush1.bf16.xpose.msra.mxu0 %v1323
        %1327 = vmatprep.subr.bf16.mxu0 0
        %1328 = vmatpush1.bf16.xpose.msra.mxu0 0
        %1329 = vmatprep.subr.bf16.mxu0 0
        %1330 = vmatpush1.bf16.xpose.msra.mxu0 0
        %1331 = vmatprep.subr.bf16.mxu0 0
        %1332 = vmatpush1.bf16.xpose.msra.mxu0 0
        %1333 = vmatprep.subr.bf16.mxu0 0
        %1334 = vmatpush1.bf16.xpose.msra.mxu0 0
        %1335 = vmatprep.subr.bf16.mxu0 0
        %1336 = vmatpush1.bf16.xpose.msra.mxu0 0
        %1337 = vmatprep.subr.bf16.mxu0 0
        %1338 = vmatpush1.bf16.xpose.msra.mxu0 0
        %1339 = vmatprep.subr.bf16.mxu0 0
        %1340 = vmatpush1.bf16.xpose.msra.mxu0 0
        %1341 = vmatprep.subr.bf16.mxu0 0
        %1342 = vmatpush1.bf16.xpose.msra.mxu0 0
        %1343 = vmatprep.subr.bf16.mxu0 0
        %1344 = vmatpush1.bf16.xpose.msra.mxu0 0
        %1345 = vmatprep.subr.bf16.mxu0 0
        %1346 = vmatpush1.bf16.xpose.msra.mxu0 0
        %1347 = vmatprep.subr.bf16.mxu0 0
        %1348 = vmatpush1.bf16.xpose.msra.mxu0 0
        %1349 = vmatprep.subr.bf16.mxu0 0
        %1350 = vmatpush1.bf16.xpose.msra.mxu0 0
        %1351 = vmatprep.subr.bf16.mxu0 0
        %1352 = vmatpush1.bf16.xpose.msra.mxu0 0
        %1353 = vmatprep.subr.bf16.mxu0 0
        %1354 = vmatpush1.bf16.xpose.msra.mxu0 0
        %1355 = vmatprep.subr.bf16.mxu0 0
        %1356 = vmatpush1.bf16.xpose.msra.mxu0 0
        %1357 = vmatprep.mubr.bf16.mxu0 0
        %1358 = vmatmul.mubr.bf16.gmra.mrb[0].mxu0 %v1139
        %v1359 = vpop.f32.mrb[0].mxu0
        %v1360 = vadd.f32 0.0, %v1359
        %v1361 = vpop.f32.mrb[0].mxu0
        %v1362 = vpop.f32.mrb[0].mxu0
        %v1363 = vpop.f32.mrb[0].mxu0
        %1364 = vdwg.mxu0
        %v1366 = vsel %vm1137, %v1134, 0
        %1368 = vmatprep.subr.bf16.mxu0 0
        %1369 = vmatpush1.bf16.xpose.msra.mxu0 %v1366
        %1370 = vmatprep.subr.bf16.mxu0 0
        %1371 = vmatpush1.bf16.xpose.msra.mxu0 0
        %1372 = vmatprep.subr.bf16.mxu0 0
        %1373 = vmatpush1.bf16.xpose.msra.mxu0 0
        %1374 = vmatprep.subr.bf16.mxu0 0
        %1375 = vmatpush1.bf16.xpose.msra.mxu0 0
        %1376 = vmatprep.subr.bf16.mxu0 0
        %1377 = vmatpush1.bf16.xpose.msra.mxu0 0
        %1378 = vmatprep.subr.bf16.mxu0 0
        %1379 = vmatpush1.bf16.xpose.msra.mxu0 0
        %1380 = vmatprep.subr.bf16.mxu0 0
        %1381 = vmatpush1.bf16.xpose.msra.mxu0 0
        %1382 = vmatprep.subr.bf16.mxu0 0
        %1383 = vmatpush1.bf16.xpose.msra.mxu0 0
        %1384 = vmatprep.subr.bf16.mxu0 0
        %1385 = vmatpush1.bf16.xpose.msra.mxu0 0
        %1386 = vmatprep.subr.bf16.mxu0 0
        %1387 = vmatpush1.bf16.xpose.msra.mxu0 0
        %1388 = vmatprep.subr.bf16.mxu0 0
        %1389 = vmatpush1.bf16.xpose.msra.mxu0 0
        %1390 = vmatprep.subr.bf16.mxu0 0
        %1391 = vmatpush1.bf16.xpose.msra.mxu0 0
        %1392 = vmatprep.subr.bf16.mxu0 0
        %1393 = vmatpush1.bf16.xpose.msra.mxu0 0
        %1394 = vmatprep.subr.bf16.mxu0 0
        %1395 = vmatpush1.bf16.xpose.msra.mxu0 0
        %1396 = vmatprep.subr.bf16.mxu0 0
        %1397 = vmatpush1.bf16.xpose.msra.mxu0 0
        %1398 = vmatprep.subr.bf16.mxu0 0
        %1399 = vmatpush1.bf16.xpose.msra.mxu0 0
        %1400 = vmatprep.mubr.bf16.mxu0 0
        %1401 = vmatmul.mubr.bf16.gmra.mrb[0].mxu0 %v1185
        %v1402 = vpop.f32.mrb[0].mxu0
        %v1403 = vadd.f32 0.0, %v1402
        %v1404 = vpop.f32.mrb[0].mxu0
        %v1405 = vpop.f32.mrb[0].mxu0
        %v1406 = vpop.f32.mrb[0].mxu0
        %1407 = vdwg.mxu0
        %v1409 = vsel %vm1137, %v1135, 0
        %1411 = vmatprep.subr.bf16.mxu0 0
        %1412 = vmatpush1.bf16.xpose.msra.mxu0 %v1409
        %1413 = vmatprep.subr.bf16.mxu0 0
        %1414 = vmatpush1.bf16.xpose.msra.mxu0 0
        %1415 = vmatprep.subr.bf16.mxu0 0
        %1416 = vmatpush1.bf16.xpose.msra.mxu0 0
        %1417 = vmatprep.subr.bf16.mxu0 0
        %1418 = vmatpush1.bf16.xpose.msra.mxu0 0
        %1419 = vmatprep.subr.bf16.mxu0 0
        %1420 = vmatpush1.bf16.xpose.msra.mxu0 0
        %1421 = vmatprep.subr.bf16.mxu0 0
        %1422 = vmatpush1.bf16.xpose.msra.mxu0 0
        %1423 = vmatprep.subr.bf16.mxu0 0
        %1424 = vmatpush1.bf16.xpose.msra.mxu0 0
        %1425 = vmatprep.subr.bf16.mxu0 0
        %1426 = vmatpush1.bf16.xpose.msra.mxu0 0
        %1427 = vmatprep.subr.bf16.mxu0 0
        %1428 = vmatpush1.bf16.xpose.msra.mxu0 0
        %1429 = vmatprep.subr.bf16.mxu0 0
        %1430 = vmatpush1.bf16.xpose.msra.mxu0 0
        %1431 = vmatprep.subr.bf16.mxu0 0
        %1432 = vmatpush1.bf16.xpose.msra.mxu0 0
        %1433 = vmatprep.subr.bf16.mxu0 0
        %1434 = vmatpush1.bf16.xpose.msra.mxu0 0
        %1435 = vmatprep.subr.bf16.mxu0 0
        %1436 = vmatpush1.bf16.xpose.msra.mxu0 0
        %1437 = vmatprep.subr.bf16.mxu0 0
        %1438 = vmatpush1.bf16.xpose.msra.mxu0 0
        %1439 = vmatprep.subr.bf16.mxu0 0
        %1440 = vmatpush1.bf16.xpose.msra.mxu0 0
        %1441 = vmatprep.subr.bf16.mxu0 0
        %1442 = vmatpush1.bf16.xpose.msra.mxu0 0
        %1443 = vmatprep.mubr.bf16.mxu0 0
        %1444 = vmatmul.mubr.bf16.gmra.mrb[0].mxu0 %v1231
        %v1445 = vpop.f32.mrb[0].mxu0
        %v1446 = vadd.f32 0.0, %v1445
        %v1447 = vpop.f32.mrb[0].mxu0
        %v1448 = vpop.f32.mrb[0].mxu0
        %v1449 = vpop.f32.mrb[0].mxu0
        %1450 = vdwg.mxu0
        %v1452 = vsel %vm1137, %v1136, 0
        %1454 = vmatprep.subr.bf16.mxu0 0
        %1455 = vmatpush1.bf16.xpose.msra.mxu0 %v1452
        %1456 = vmatprep.subr.bf16.mxu0 0
        %1457 = vmatpush1.bf16.xpose.msra.mxu0 0
        %1458 = vmatprep.subr.bf16.mxu0 0
        %1459 = vmatpush1.bf16.xpose.msra.mxu0 0
        %1460 = vmatprep.subr.bf16.mxu0 0
        %1461 = vmatpush1.bf16.xpose.msra.mxu0 0
        %1462 = vmatprep.subr.bf16.mxu0 0
        %1463 = vmatpush1.bf16.xpose.msra.mxu0 0
        %1464 = vmatprep.subr.bf16.mxu0 0
        %1465 = vmatpush1.bf16.xpose.msra.mxu0 0
        %1466 = vmatprep.subr.bf16.mxu0 0
        %1467 = vmatpush1.bf16.xpose.msra.mxu0 0
        %1468 = vmatprep.subr.bf16.mxu0 0
        %1469 = vmatpush1.bf16.xpose.msra.mxu0 0
        %1470 = vmatprep.subr.bf16.mxu0 0
        %1471 = vmatpush1.bf16.xpose.msra.mxu0 0
        %1472 = vmatprep.subr.bf16.mxu0 0
        %1473 = vmatpush1.bf16.xpose.msra.mxu0 0
        %1474 = vmatprep.subr.bf16.mxu0 0
        %1475 = vmatpush1.bf16.xpose.msra.mxu0 0
        %1476 = vmatprep.subr.bf16.mxu0 0
        %1477 = vmatpush1.bf16.xpose.msra.mxu0 0
        %1478 = vmatprep.subr.bf16.mxu0 0
        %1479 = vmatpush1.bf16.xpose.msra.mxu0 0
        %1480 = vmatprep.subr.bf16.mxu0 0
        %1481 = vmatpush1.bf16.xpose.msra.mxu0 0
        %1482 = vmatprep.subr.bf16.mxu0 0
        %1483 = vmatpush1.bf16.xpose.msra.mxu0 0
        %1484 = vmatprep.subr.bf16.mxu0 0
        %1485 = vmatpush1.bf16.xpose.msra.mxu0 0
        %1486 = vmatprep.mubr.bf16.mxu0 0
        %1487 = vmatmul.mubr.bf16.gmra.mrb[0].mxu0 %v1277
        %v1488 = vpop.f32.mrb[0].mxu0
        %v1489 = vadd.f32 0.0, %v1488
        %v1490 = vpop.f32.mrb[0].mxu0
        %v1491 = vpop.f32.mrb[0].mxu0
        %v1492 = vpop.f32.mrb[0].mxu0
        %1493 = vdwg.mxu0
        %v1494 = vsel %vm1137, %v1179, -inf
        %1495 = vmax.xlane.f32.xlu0 %v1494
        %v1496 = vpop.xlane.xlu0 %1495
        %v1497 = vsel %vm1137, %v1225, -inf
        %1498 = vmax.xlane.f32.xlu0 %v1497
        %v1499 = vpop.xlane.xlu0 %1498
        %v1500 = vsel %vm1137, %v1271, -inf
        %1501 = vmax.xlane.f32.xlu0 %v1500
        %v1502 = vpop.xlane.xlu0 %1501
        %v1503 = vsel %vm1137, %v1317, -inf
        %1504 = vmax.xlane.f32.xlu0 %v1503
        %v1505 = vpop.xlane.xlu0 %1504
        %v1506 = vsel %vm1137, %v1360, -inf
        %1507 = vmax.xlane.f32.xlu0 %v1506
        %v1508 = vpop.xlane.xlu0 %1507
        %v1509 = vsel %vm1137, %v1403, -inf
        %1510 = vmax.xlane.f32.xlu0 %v1509
        %v1511 = vpop.xlane.xlu0 %1510
        %v1512 = vsel %vm1137, %v1446, -inf
        %1513 = vmax.xlane.f32.xlu0 %v1512
        %v1514 = vpop.xlane.xlu0 %1513
        %v1515 = vsel %vm1137, %v1489, -inf
        %1516 = vmax.xlane.f32.xlu0 %v1515
        %v1517 = vpop.xlane.xlu0 %1516
        %v1518 = vmax.f32 %v1496, %v1508
        %v1519 = vmax.f32 %v1499, %v1511
        %v1520 = vmax.f32 %v1502, %v1514
        %v1521 = vmax.f32 %v1505, %v1517
        %v1522 = vsub.f32 %v1179, %v1518
        %v1523 = vsub.f32 %v1225, %v1519
        %v1524 = vsub.f32 %v1271, %v1520
        %v1525 = vsub.f32 %v1317, %v1521
        %v1526 = vmul.f32 %v1522, 1.442695
        %v1527 = vpow.pop %v1526
        %v1528 = vmul.f32 %v1523, 1.442695
        %v1529 = vpow.pop %v1528
        %v1530 = vmul.f32 %v1524, 1.442695
        %v1531 = vpow.pop %v1530
        %v1532 = vmul.f32 %v1525, 1.442695
        %v1533 = vpow.pop %v1532
        %v1534 = vsub.f32 %v1360, %v1518
        %v1535 = vsub.f32 %v1403, %v1519
        %v1536 = vsub.f32 %v1446, %v1520
        %v1537 = vsub.f32 %v1489, %v1521
        %v1538 = vmul.f32 %v1534, 1.442695
        %v1539 = vpow.pop %v1538
        %v1540 = vmul.f32 %v1535, 1.442695
        %v1541 = vpow.pop %v1540
        %v1542 = vmul.f32 %v1536, 1.442695
        %v1543 = vpow.pop %v1542
        %v1544 = vmul.f32 %v1537, 1.442695
        %v1545 = vpow.pop %v1544
        %v1546 = vsel %vm1137, %v1527, 0.0
        %1547 = vadd.xlane.f32.xlu0 %v1546
        %v1548 = vpop.xlane.xlu0 %1547
        %v1549 = vsel %vm1137, %v1529, 0.0
        %1550 = vadd.xlane.f32.xlu0 %v1549
        %v1551 = vpop.xlane.xlu0 %1550
        %v1552 = vsel %vm1137, %v1531, 0.0
        %1553 = vadd.xlane.f32.xlu0 %v1552
        %v1554 = vpop.xlane.xlu0 %1553
        %v1555 = vsel %vm1137, %v1533, 0.0
        %1556 = vadd.xlane.f32.xlu0 %v1555
        %v1557 = vpop.xlane.xlu0 %1556
        %v1558 = vsel %vm1137, %v1539, 0.0
        %1559 = vadd.xlane.f32.xlu0 %v1558
        %v1560 = vpop.xlane.xlu0 %1559
        %v1561 = vsel %vm1137, %v1541, 0.0
        %1562 = vadd.xlane.f32.xlu0 %v1561
        %v1563 = vpop.xlane.xlu0 %1562
        %v1564 = vsel %vm1137, %v1543, 0.0
        %1565 = vadd.xlane.f32.xlu0 %v1564
        %v1566 = vpop.xlane.xlu0 %1565
        %v1567 = vsel %vm1137, %v1545, 0.0
        %1568 = vadd.xlane.f32.xlu0 %v1567
        %v1569 = vpop.xlane.xlu0 %1568
        %v1570 = vadd.f32 %v1548, %v1560
        %v1571 = vadd.f32 %v1551, %v1563
        %v1572 = vadd.f32 %v1554, %v1566
        %v1573 = vadd.f32 %v1557, %v1569
        %v1574 = vrcp.pop %v1570
        %v1575 = vrcp.pop %v1571
        %v1576 = vrcp.pop %v1572
        %v1577 = vrcp.pop %v1573
        %v1578 = vmul.f32 %v1527, %v1574
        %v1579 = vmul.f32 %v1529, %v1575
        %v1580 = vmul.f32 %v1531, %v1576
        %v1581 = vmul.f32 %v1533, %v1577
        %v1582 = vpack.c.bf16 %v1578, %v1578
        %v1583 = vpack.c.bf16 %v1579, %v1579
        %v1584 = vpack.c.bf16 %v1580, %v1580
        %v1585 = vpack.c.bf16 %v1581, %v1581
        %v1586 = vmul.f32 %v1539, %v1574
        %v1587 = vmul.f32 %v1541, %v1575
        %v1588 = vmul.f32 %v1543, %v1576
        %v1589 = vmul.f32 %v1545, %v1577
        %v1590 = vpack.c.bf16 %v1586, %v1586
        %v1591 = vpack.c.bf16 %v1587, %v1587
        %v1592 = vpack.c.bf16 %v1588, %v1588
        %v1593 = vpack.c.bf16 %v1589, %v1589
        %1594 = vrot.lane.b32.xlu0 %v1133, 96
        %v1595 = vpop.permute.xlu0 %1594
        %v1597 = vsel %vm1137, %v1590, 0
        %vm1599 = vcmask 1043456
        %v1601 = vsel %vm1599, %v1595, 0
        %1603 = vmatprep.subr.bf16.mxu0 0
        %1604 = vmatpush1.bf16.msra.mxu0 %v1601
        %1605 = vmatprep.subr.bf16.mxu0 0
        %1606 = vmatpush1.bf16.msra.mxu0 0
        %1607 = vmatprep.subr.bf16.mxu0 0
        %1608 = vmatpush1.bf16.msra.mxu0 0
        %1609 = vmatprep.subr.bf16.mxu0 0
        %1610 = vmatpush1.bf16.msra.mxu0 0
        %1611 = vmatprep.subr.bf16.mxu0 0
        %1612 = vmatpush1.bf16.msra.mxu0 0
        %1613 = vmatprep.subr.bf16.mxu0 0
        %1614 = vmatpush1.bf16.msra.mxu0 0
        %1615 = vmatprep.subr.bf16.mxu0 0
        %1616 = vmatpush1.bf16.msra.mxu0 0
        %1617 = vmatprep.subr.bf16.mxu0 0
        %1618 = vmatpush1.bf16.msra.mxu0 0
        %1619 = vmatprep.subr.bf16.mxu0 0
        %1620 = vmatpush1.bf16.msra.mxu0 0
        %1621 = vmatprep.subr.bf16.mxu0 0
        %1622 = vmatpush1.bf16.msra.mxu0 0
        %1623 = vmatprep.subr.bf16.mxu0 0
        %1624 = vmatpush1.bf16.msra.mxu0 0
        %1625 = vmatprep.subr.bf16.mxu0 0
        %1626 = vmatpush1.bf16.msra.mxu0 0
        %1627 = vmatprep.subr.bf16.mxu0 0
        %1628 = vmatpush1.bf16.msra.mxu0 0
        %1629 = vmatprep.subr.bf16.mxu0 0
        %1630 = vmatpush1.bf16.msra.mxu0 0
        %1631 = vmatprep.subr.bf16.mxu0 0
        %1632 = vmatpush1.bf16.msra.mxu0 0
        %1633 = vmatprep.subr.bf16.mxu0 0
        %1634 = vmatpush1.bf16.msra.mxu0 0
        %1635 = vmatprep.mubr.bf16.mxu0 0
        %1636 = vmatmul.mubr.bf16.gmra.mrb[0].mxu0 %v1597
        %v1637 = vpop.f32.mrb[0].mxu0
        %v1638 = vadd.f32 0.0, %v1637
        %v1639 = vpop.f32.mrb[0].mxu0
        %v1640 = vpop.f32.mrb[0].mxu0
        %v1641 = vpop.f32.mrb[0].mxu0
        %1642 = vdwg.mxu0
        %1643 = vrot.lane.b32.xlu0 %v1134, 96
        %v1644 = vpop.permute.xlu0 %1643
        %v1646 = vsel %vm1137, %v1591, 0
        %v1649 = vsel %vm1599, %v1644, 0
        %1651 = vmatprep.subr.bf16.mxu0 0
        %1652 = vmatpush1.bf16.msra.mxu0 %v1649
        %1653 = vmatprep.subr.bf16.mxu0 0
        %1654 = vmatpush1.bf16.msra.mxu0 0
        %1655 = vmatprep.subr.bf16.mxu0 0
        %1656 = vmatpush1.bf16.msra.mxu0 0
        %1657 = vmatprep.subr.bf16.mxu0 0
        %1658 = vmatpush1.bf16.msra.mxu0 0
        %1659 = vmatprep.subr.bf16.mxu0 0
        %1660 = vmatpush1.bf16.msra.mxu0 0
        %1661 = vmatprep.subr.bf16.mxu0 0
        %1662 = vmatpush1.bf16.msra.mxu0 0
        %1663 = vmatprep.subr.bf16.mxu0 0
        %1664 = vmatpush1.bf16.msra.mxu0 0
        %1665 = vmatprep.subr.bf16.mxu0 0
        %1666 = vmatpush1.bf16.msra.mxu0 0
        %1667 = vmatprep.subr.bf16.mxu0 0
        %1668 = vmatpush1.bf16.msra.mxu0 0
        %1669 = vmatprep.subr.bf16.mxu0 0
        %1670 = vmatpush1.bf16.msra.mxu0 0
        %1671 = vmatprep.subr.bf16.mxu0 0
        %1672 = vmatpush1.bf16.msra.mxu0 0
        %1673 = vmatprep.subr.bf16.mxu0 0
        %1674 = vmatpush1.bf16.msra.mxu0 0
        %1675 = vmatprep.subr.bf16.mxu0 0
        %1676 = vmatpush1.bf16.msra.mxu0 0
        %1677 = vmatprep.subr.bf16.mxu0 0
        %1678 = vmatpush1.bf16.msra.mxu0 0
        %1679 = vmatprep.subr.bf16.mxu0 0
        %1680 = vmatpush1.bf16.msra.mxu0 0
        %1681 = vmatprep.subr.bf16.mxu0 0
        %1682 = vmatpush1.bf16.msra.mxu0 0
        %1683 = vmatprep.mubr.bf16.mxu0 0
        %1684 = vmatmul.mubr.bf16.gmra.mrb[0].mxu0 %v1646
        %v1685 = vpop.f32.mrb[0].mxu0
        %v1686 = vadd.f32 0.0, %v1685
        %v1687 = vpop.f32.mrb[0].mxu0
        %v1688 = vpop.f32.mrb[0].mxu0
        %v1689 = vpop.f32.mrb[0].mxu0
        %1690 = vdwg.mxu0
        %1691 = vrot.lane.b32.xlu0 %v1135, 96
        %v1692 = vpop.permute.xlu0 %1691
        %v1694 = vsel %vm1137, %v1592, 0
        %v1697 = vsel %vm1599, %v1692, 0
        %1699 = vmatprep.subr.bf16.mxu0 0
        %1700 = vmatpush1.bf16.msra.mxu0 %v1697
        %1701 = vmatprep.subr.bf16.mxu0 0
        %1702 = vmatpush1.bf16.msra.mxu0 0
        %1703 = vmatprep.subr.bf16.mxu0 0
        %1704 = vmatpush1.bf16.msra.mxu0 0
        %1705 = vmatprep.subr.bf16.mxu0 0
        %1706 = vmatpush1.bf16.msra.mxu0 0
        %1707 = vmatprep.subr.bf16.mxu0 0
        %1708 = vmatpush1.bf16.msra.mxu0 0
        %1709 = vmatprep.subr.bf16.mxu0 0
        %1710 = vmatpush1.bf16.msra.mxu0 0
        %1711 = vmatprep.subr.bf16.mxu0 0
        %1712 = vmatpush1.bf16.msra.mxu0 0
        %1713 = vmatprep.subr.bf16.mxu0 0
        %1714 = vmatpush1.bf16.msra.mxu0 0
        %1715 = vmatprep.subr.bf16.mxu0 0
        %1716 = vmatpush1.bf16.msra.mxu0 0
        %1717 = vmatprep.subr.bf16.mxu0 0
        %1718 = vmatpush1.bf16.msra.mxu0 0
        %1719 = vmatprep.subr.bf16.mxu0 0
        %1720 = vmatpush1.bf16.msra.mxu0 0
        %1721 = vmatprep.subr.bf16.mxu0 0
        %1722 = vmatpush1.bf16.msra.mxu0 0
        %1723 = vmatprep.subr.bf16.mxu0 0
        %1724 = vmatpush1.bf16.msra.mxu0 0
        %1725 = vmatprep.subr.bf16.mxu0 0
        %1726 = vmatpush1.bf16.msra.mxu0 0
        %1727 = vmatprep.subr.bf16.mxu0 0
        %1728 = vmatpush1.bf16.msra.mxu0 0
        %1729 = vmatprep.subr.bf16.mxu0 0
        %1730 = vmatpush1.bf16.msra.mxu0 0
        %1731 = vmatprep.mubr.bf16.mxu0 0
        %1732 = vmatmul.mubr.bf16.gmra.mrb[0].mxu0 %v1694
        %v1733 = vpop.f32.mrb[0].mxu0
        %v1734 = vadd.f32 0.0, %v1733
        %v1735 = vpop.f32.mrb[0].mxu0
        %v1736 = vpop.f32.mrb[0].mxu0
        %v1737 = vpop.f32.mrb[0].mxu0
        %1738 = vdwg.mxu0
        %1739 = vrot.lane.b32.xlu0 %v1136, 96
        %v1740 = vpop.permute.xlu0 %1739
        %v1742 = vsel %vm1137, %v1593, 0
        %v1745 = vsel %vm1599, %v1740, 0
        %1747 = vmatprep.subr.bf16.mxu0 0
        %1748 = vmatpush1.bf16.msra.mxu0 %v1745
        %1749 = vmatprep.subr.bf16.mxu0 0
        %1750 = vmatpush1.bf16.msra.mxu0 0
        %1751 = vmatprep.subr.bf16.mxu0 0
        %1752 = vmatpush1.bf16.msra.mxu0 0
        %1753 = vmatprep.subr.bf16.mxu0 0
        %1754 = vmatpush1.bf16.msra.mxu0 0
        %1755 = vmatprep.subr.bf16.mxu0 0
        %1756 = vmatpush1.bf16.msra.mxu0 0
        %1757 = vmatprep.subr.bf16.mxu0 0
        %1758 = vmatpush1.bf16.msra.mxu0 0
        %1759 = vmatprep.subr.bf16.mxu0 0
        %1760 = vmatpush1.bf16.msra.mxu0 0
        %1761 = vmatprep.subr.bf16.mxu0 0
        %1762 = vmatpush1.bf16.msra.mxu0 0
        %1763 = vmatprep.subr.bf16.mxu0 0
        %1764 = vmatpush1.bf16.msra.mxu0 0
        %1765 = vmatprep.subr.bf16.mxu0 0
        %1766 = vmatpush1.bf16.msra.mxu0 0
        %1767 = vmatprep.subr.bf16.mxu0 0
        %1768 = vmatpush1.bf16.msra.mxu0 0
        %1769 = vmatprep.subr.bf16.mxu0 0
        %1770 = vmatpush1.bf16.msra.mxu0 0
        %1771 = vmatprep.subr.bf16.mxu0 0
        %1772 = vmatpush1.bf16.msra.mxu0 0
        %1773 = vmatprep.subr.bf16.mxu0 0
        %1774 = vmatpush1.bf16.msra.mxu0 0
        %1775 = vmatprep.subr.bf16.mxu0 0
        %1776 = vmatpush1.bf16.msra.mxu0 0
        %1777 = vmatprep.subr.bf16.mxu0 0
        %1778 = vmatpush1.bf16.msra.mxu0 0
        %1779 = vmatprep.mubr.bf16.mxu0 0
        %1780 = vmatmul.mubr.bf16.gmra.mrb[0].mxu0 %v1742
        %v1781 = vpop.f32.mrb[0].mxu0
        %v1782 = vadd.f32 0.0, %v1781
        %v1783 = vpop.f32.mrb[0].mxu0
        %v1784 = vpop.f32.mrb[0].mxu0
        %v1785 = vpop.f32.mrb[0].mxu0
        %1786 = vdwg.mxu0
        %1787 = vrot.lane.b32.xlu0 %v1072, 96
        %v1788 = vpop.permute.xlu0 %1787
        %v1790 = vsel %vm1137, %v1582, 0
        %v1793 = vsel %vm1599, %v1788, 0
        %1795 = vmatprep.subr.bf16.mxu0 0
        %1796 = vmatpush1.bf16.msra.mxu0 %v1793
        %1797 = vmatprep.subr.bf16.mxu0 0
        %1798 = vmatpush1.bf16.msra.mxu0 0
        %1799 = vmatprep.subr.bf16.mxu0 0
        %1800 = vmatpush1.bf16.msra.mxu0 0
        %1801 = vmatprep.subr.bf16.mxu0 0
        %1802 = vmatpush1.bf16.msra.mxu0 0
        %1803 = vmatprep.subr.bf16.mxu0 0
        %1804 = vmatpush1.bf16.msra.mxu0 0
        %1805 = vmatprep.subr.bf16.mxu0 0
        %1806 = vmatpush1.bf16.msra.mxu0 0
        %1807 = vmatprep.subr.bf16.mxu0 0
        %1808 = vmatpush1.bf16.msra.mxu0 0
        %1809 = vmatprep.subr.bf16.mxu0 0
        %1810 = vmatpush1.bf16.msra.mxu0 0
        %1811 = vmatprep.subr.bf16.mxu0 0
        %1812 = vmatpush1.bf16.msra.mxu0 0
        %1813 = vmatprep.subr.bf16.mxu0 0
        %1814 = vmatpush1.bf16.msra.mxu0 0
        %1815 = vmatprep.subr.bf16.mxu0 0
        %1816 = vmatpush1.bf16.msra.mxu0 0
        %1817 = vmatprep.subr.bf16.mxu0 0
        %1818 = vmatpush1.bf16.msra.mxu0 0
        %1819 = vmatprep.subr.bf16.mxu0 0
        %1820 = vmatpush1.bf16.msra.mxu0 0
        %1821 = vmatprep.subr.bf16.mxu0 0
        %1822 = vmatpush1.bf16.msra.mxu0 0
        %1823 = vmatprep.subr.bf16.mxu0 0
        %1824 = vmatpush1.bf16.msra.mxu0 0
        %1825 = vmatprep.subr.bf16.mxu0 0
        %1826 = vmatpush1.bf16.msra.mxu0 0
        %1827 = vmatprep.mubr.bf16.mxu0 0
        %1828 = vmatmul.mubr.bf16.gmra.mrb[0].mxu0 %v1790
        %v1829 = vpop.f32.mrb[0].mxu0
        %v1830 = vadd.f32 %v1638, %v1829
        %v1831 = vpop.f32.mrb[0].mxu0
        %v1832 = vpop.f32.mrb[0].mxu0
        %v1833 = vpop.f32.mrb[0].mxu0
        %1834 = vdwg.mxu0
        %1835 = vrot.lane.b32.xlu0 %v1073, 96
        %v1836 = vpop.permute.xlu0 %1835
        %v1838 = vsel %vm1137, %v1583, 0
        %v1841 = vsel %vm1599, %v1836, 0
        %1843 = vmatprep.subr.bf16.mxu0 0
        %1844 = vmatpush1.bf16.msra.mxu0 %v1841
        %1845 = vmatprep.subr.bf16.mxu0 0
        %1846 = vmatpush1.bf16.msra.mxu0 0
        %1847 = vmatprep.subr.bf16.mxu0 0
        %1848 = vmatpush1.bf16.msra.mxu0 0
        %1849 = vmatprep.subr.bf16.mxu0 0
        %1850 = vmatpush1.bf16.msra.mxu0 0
        %1851 = vmatprep.subr.bf16.mxu0 0
        %1852 = vmatpush1.bf16.msra.mxu0 0
        %1853 = vmatprep.subr.bf16.mxu0 0
        %1854 = vmatpush1.bf16.msra.mxu0 0
        %1855 = vmatprep.subr.bf16.mxu0 0
        %1856 = vmatpush1.bf16.msra.mxu0 0
        %1857 = vmatprep.subr.bf16.mxu0 0
        %1858 = vmatpush1.bf16.msra.mxu0 0
        %1859 = vmatprep.subr.bf16.mxu0 0
        %1860 = vmatpush1.bf16.msra.mxu0 0
        %1861 = vmatprep.subr.bf16.mxu0 0
        %1862 = vmatpush1.bf16.msra.mxu0 0
        %1863 = vmatprep.subr.bf16.mxu0 0
        %1864 = vmatpush1.bf16.msra.mxu0 0
        %1865 = vmatprep.subr.bf16.mxu0 0
        %1866 = vmatpush1.bf16.msra.mxu0 0
        %1867 = vmatprep.subr.bf16.mxu0 0
        %1868 = vmatpush1.bf16.msra.mxu0 0
        %1869 = vmatprep.subr.bf16.mxu0 0
        %1870 = vmatpush1.bf16.msra.mxu0 0
        %1871 = vmatprep.subr.bf16.mxu0 0
        %1872 = vmatpush1.bf16.msra.mxu0 0
        %1873 = vmatprep.subr.bf16.mxu0 0
        %1874 = vmatpush1.bf16.msra.mxu0 0
        %1875 = vmatprep.mubr.bf16.mxu0 0
        %1876 = vmatmul.mubr.bf16.gmra.mrb[0].mxu0 %v1838
        %v1877 = vpop.f32.mrb[0].mxu0
        %v1878 = vadd.f32 %v1686, %v1877
        %v1879 = vpop.f32.mrb[0].mxu0
        %v1880 = vpop.f32.mrb[0].mxu0
        %v1881 = vpop.f32.mrb[0].mxu0
        %1882 = vdwg.mxu0
        %1883 = vrot.lane.b32.xlu0 %v1074, 96
        %v1884 = vpop.permute.xlu0 %1883
        %v1886 = vsel %vm1137, %v1584, 0
        %v1889 = vsel %vm1599, %v1884, 0
        %1891 = vmatprep.subr.bf16.mxu0 0
        %1892 = vmatpush1.bf16.msra.mxu0 %v1889
        %1893 = vmatprep.subr.bf16.mxu0 0
        %1894 = vmatpush1.bf16.msra.mxu0 0
        %1895 = vmatprep.subr.bf16.mxu0 0
        %1896 = vmatpush1.bf16.msra.mxu0 0
        %1897 = vmatprep.subr.bf16.mxu0 0
        %1898 = vmatpush1.bf16.msra.mxu0 0
        %1899 = vmatprep.subr.bf16.mxu0 0
        %1900 = vmatpush1.bf16.msra.mxu0 0
        %1901 = vmatprep.subr.bf16.mxu0 0
        %1902 = vmatpush1.bf16.msra.mxu0 0
        %1903 = vmatprep.subr.bf16.mxu0 0
        %1904 = vmatpush1.bf16.msra.mxu0 0
        %1905 = vmatprep.subr.bf16.mxu0 0
        %1906 = vmatpush1.bf16.msra.mxu0 0
        %1907 = vmatprep.subr.bf16.mxu0 0
        %1908 = vmatpush1.bf16.msra.mxu0 0
        %1909 = vmatprep.subr.bf16.mxu0 0
        %1910 = vmatpush1.bf16.msra.mxu0 0
        %1911 = vmatprep.subr.bf16.mxu0 0
        %1912 = vmatpush1.bf16.msra.mxu0 0
        %1913 = vmatprep.subr.bf16.mxu0 0
        %1914 = vmatpush1.bf16.msra.mxu0 0
        %1915 = vmatprep.subr.bf16.mxu0 0
        %1916 = vmatpush1.bf16.msra.mxu0 0
        %1917 = vmatprep.subr.bf16.mxu0 0
        %1918 = vmatpush1.bf16.msra.mxu0 0
        %1919 = vmatprep.subr.bf16.mxu0 0
        %1920 = vmatpush1.bf16.msra.mxu0 0
        %1921 = vmatprep.subr.bf16.mxu0 0
        %1922 = vmatpush1.bf16.msra.mxu0 0
        %1923 = vmatprep.mubr.bf16.mxu0 0
        %1924 = vmatmul.mubr.bf16.gmra.mrb[0].mxu0 %v1886
        %v1925 = vpop.f32.mrb[0].mxu0
        %v1926 = vadd.f32 %v1734, %v1925
        %v1927 = vpop.f32.mrb[0].mxu0
        %v1928 = vpop.f32.mrb[0].mxu0
        %v1929 = vpop.f32.mrb[0].mxu0
        %1930 = vdwg.mxu0
        %1931 = vrot.lane.b32.xlu0 %v1075, 96
        %v1932 = vpop.permute.xlu0 %1931
        %v1934 = vsel %vm1137, %v1585, 0
        %v1937 = vsel %vm1599, %v1932, 0
        %1939 = vmatprep.subr.bf16.mxu0 0
        %1940 = vmatpush1.bf16.msra.mxu0 %v1937
        %1941 = vmatprep.subr.bf16.mxu0 0
        %1942 = vmatpush1.bf16.msra.mxu0 0
        %1943 = vmatprep.subr.bf16.mxu0 0
        %1944 = vmatpush1.bf16.msra.mxu0 0
        %1945 = vmatprep.subr.bf16.mxu0 0
        %1946 = vmatpush1.bf16.msra.mxu0 0
        %1947 = vmatprep.subr.bf16.mxu0 0
        %1948 = vmatpush1.bf16.msra.mxu0 0
        %1949 = vmatprep.subr.bf16.mxu0 0
        %1950 = vmatpush1.bf16.msra.mxu0 0
        %1951 = vmatprep.subr.bf16.mxu0 0
        %1952 = vmatpush1.bf16.msra.mxu0 0
        %1953 = vmatprep.subr.bf16.mxu0 0
        %1954 = vmatpush1.bf16.msra.mxu0 0
        %1955 = vmatprep.subr.bf16.mxu0 0
        %1956 = vmatpush1.bf16.msra.mxu0 0
        %1957 = vmatprep.subr.bf16.mxu0 0
        %1958 = vmatpush1.bf16.msra.mxu0 0
        %1959 = vmatprep.subr.bf16.mxu0 0
        %1960 = vmatpush1.bf16.msra.mxu0 0
        %1961 = vmatprep.subr.bf16.mxu0 0
        %1962 = vmatpush1.bf16.msra.mxu0 0
        %1963 = vmatprep.subr.bf16.mxu0 0
        %1964 = vmatpush1.bf16.msra.mxu0 0
        %1965 = vmatprep.subr.bf16.mxu0 0
        %1966 = vmatpush1.bf16.msra.mxu0 0
        %1967 = vmatprep.subr.bf16.mxu0 0
        %1968 = vmatpush1.bf16.msra.mxu0 0
        %1969 = vmatprep.subr.bf16.mxu0 0
        %1970 = vmatpush1.bf16.msra.mxu0 0
        %1971 = vmatprep.mubr.bf16.mxu0 0
        %1972 = vmatmul.mubr.bf16.gmra.mrb[0].mxu0 %v1934
        %v1973 = vpop.f32.mrb[0].mxu0
        %v1974 = vadd.f32 %v1782, %v1973
        %v1975 = vpop.f32.mrb[0].mxu0
        %v1976 = vpop.f32.mrb[0].mxu0
        %v1977 = vpop.f32.mrb[0].mxu0
        %1978 = vdwg.mxu0
        %v1979 = vpack.c.bf16 %v1830, %v1830
        %v1980 = vpack.c.bf16 %v1878, %v1878
        %v1981 = vpack.c.bf16 %v1926, %v1926
        %v1982 = vpack.c.bf16 %v1974, %v1974
        %1983 = vrot.lane.b32.xlu0 %v993, 120
        %v1984 = vpop.permute.xlu0 %1983
        %1985 = vrot.lane.b32.xlu0 %v1072, 120
        %v1986 = vpop.permute.xlu0 %1985
        %v1988 = vsel %vm1137, %v1984, 0
        %v1991 = vsel %vm1137, %v1986, 0
        %1993 = vmatprep.subr.bf16.mxu0 0
        %1994 = vmatpush1.bf16.xpose.msra.mxu0 %v1991
        %1995 = vmatprep.subr.bf16.mxu0 0
        %1996 = vmatpush1.bf16.xpose.msra.mxu0 0
        %1997 = vmatprep.subr.bf16.mxu0 0
        %1998 = vmatpush1.bf16.xpose.msra.mxu0 0
        %1999 = vmatprep.subr.bf16.mxu0 0
        %2000 = vmatpush1.bf16.xpose.msra.mxu0 0
        %2001 = vmatprep.subr.bf16.mxu0 0
        %2002 = vmatpush1.bf16.xpose.msra.mxu0 0
        %2003 = vmatprep.subr.bf16.mxu0 0
        %2004 = vmatpush1.bf16.xpose.msra.mxu0 0
        %2005 = vmatprep.subr.bf16.mxu0 0
        %2006 = vmatpush1.bf16.xpose.msra.mxu0 0
        %2007 = vmatprep.subr.bf16.mxu0 0
        %2008 = vmatpush1.bf16.xpose.msra.mxu0 0
        %2009 = vmatprep.subr.bf16.mxu0 0
        %2010 = vmatpush1.bf16.xpose.msra.mxu0 0
        %2011 = vmatprep.subr.bf16.mxu0 0
        %2012 = vmatpush1.bf16.xpose.msra.mxu0 0
        %2013 = vmatprep.subr.bf16.mxu0 0
        %2014 = vmatpush1.bf16.xpose.msra.mxu0 0
        %2015 = vmatprep.subr.bf16.mxu0 0
        %2016 = vmatpush1.bf16.xpose.msra.mxu0 0
        %2017 = vmatprep.subr.bf16.mxu0 0
        %2018 = vmatpush1.bf16.xpose.msra.mxu0 0
        %2019 = vmatprep.subr.bf16.mxu0 0
        %2020 = vmatpush1.bf16.xpose.msra.mxu0 0
        %2021 = vmatprep.subr.bf16.mxu0 0
        %2022 = vmatpush1.bf16.xpose.msra.mxu0 0
        %2023 = vmatprep.subr.bf16.mxu0 0
        %2024 = vmatpush1.bf16.xpose.msra.mxu0 0
        %2025 = vmatprep.mubr.bf16.mxu0 0
        %2026 = vmatmul.mubr.bf16.gmra.mrb[0].mxu0 %v1988
        %v2027 = vpop.f32.mrb[0].mxu0
        %v2028 = vadd.f32 0.0, %v2027
        %v2029 = vpop.f32.mrb[0].mxu0
        %v2030 = vpop.f32.mrb[0].mxu0
        %v2031 = vpop.f32.mrb[0].mxu0
        %2032 = vdwg.mxu0
        %2033 = vrot.lane.b32.xlu0 %v994, 120
        %v2034 = vpop.permute.xlu0 %2033
        %2035 = vrot.lane.b32.xlu0 %v1073, 120
        %v2036 = vpop.permute.xlu0 %2035
        %v2038 = vsel %vm1137, %v2034, 0
        %v2041 = vsel %vm1137, %v2036, 0
        %2043 = vmatprep.subr.bf16.mxu0 0
        %2044 = vmatpush1.bf16.xpose.msra.mxu0 %v2041
        %2045 = vmatprep.subr.bf16.mxu0 0
        %2046 = vmatpush1.bf16.xpose.msra.mxu0 0
        %2047 = vmatprep.subr.bf16.mxu0 0
        %2048 = vmatpush1.bf16.xpose.msra.mxu0 0
        %2049 = vmatprep.subr.bf16.mxu0 0
        %2050 = vmatpush1.bf16.xpose.msra.mxu0 0
        %2051 = vmatprep.subr.bf16.mxu0 0
        %2052 = vmatpush1.bf16.xpose.msra.mxu0 0
        %2053 = vmatprep.subr.bf16.mxu0 0
        %2054 = vmatpush1.bf16.xpose.msra.mxu0 0
        %2055 = vmatprep.subr.bf16.mxu0 0
        %2056 = vmatpush1.bf16.xpose.msra.mxu0 0
        %2057 = vmatprep.subr.bf16.mxu0 0
        %2058 = vmatpush1.bf16.xpose.msra.mxu0 0
        %2059 = vmatprep.subr.bf16.mxu0 0
        %2060 = vmatpush1.bf16.xpose.msra.mxu0 0
        %2061 = vmatprep.subr.bf16.mxu0 0
        %2062 = vmatpush1.bf16.xpose.msra.mxu0 0
        %2063 = vmatprep.subr.bf16.mxu0 0
        %2064 = vmatpush1.bf16.xpose.msra.mxu0 0
        %2065 = vmatprep.subr.bf16.mxu0 0
        %2066 = vmatpush1.bf16.xpose.msra.mxu0 0
        %2067 = vmatprep.subr.bf16.mxu0 0
        %2068 = vmatpush1.bf16.xpose.msra.mxu0 0
        %2069 = vmatprep.subr.bf16.mxu0 0
        %2070 = vmatpush1.bf16.xpose.msra.mxu0 0
        %2071 = vmatprep.subr.bf16.mxu0 0
        %2072 = vmatpush1.bf16.xpose.msra.mxu0 0
        %2073 = vmatprep.subr.bf16.mxu0 0
        %2074 = vmatpush1.bf16.xpose.msra.mxu0 0
        %2075 = vmatprep.mubr.bf16.mxu0 0
        %2076 = vmatmul.mubr.bf16.gmra.mrb[0].mxu0 %v2038
        %v2077 = vpop.f32.mrb[0].mxu0
        %v2078 = vadd.f32 0.0, %v2077
        %v2079 = vpop.f32.mrb[0].mxu0
        %v2080 = vpop.f32.mrb[0].mxu0
        %v2081 = vpop.f32.mrb[0].mxu0
        %2082 = vdwg.mxu0
        %2083 = vrot.lane.b32.xlu0 %v995, 120
        %v2084 = vpop.permute.xlu0 %2083
        %2085 = vrot.lane.b32.xlu0 %v1074, 120
        %v2086 = vpop.permute.xlu0 %2085
        %v2088 = vsel %vm1137, %v2084, 0
        %v2091 = vsel %vm1137, %v2086, 0
        %2093 = vmatprep.subr.bf16.mxu0 0
        %2094 = vmatpush1.bf16.xpose.msra.mxu0 %v2091
        %2095 = vmatprep.subr.bf16.mxu0 0
        %2096 = vmatpush1.bf16.xpose.msra.mxu0 0
        %2097 = vmatprep.subr.bf16.mxu0 0
        %2098 = vmatpush1.bf16.xpose.msra.mxu0 0
        %2099 = vmatprep.subr.bf16.mxu0 0
        %2100 = vmatpush1.bf16.xpose.msra.mxu0 0
        %2101 = vmatprep.subr.bf16.mxu0 0
        %2102 = vmatpush1.bf16.xpose.msra.mxu0 0
        %2103 = vmatprep.subr.bf16.mxu0 0
        %2104 = vmatpush1.bf16.xpose.msra.mxu0 0
        %2105 = vmatprep.subr.bf16.mxu0 0
        %2106 = vmatpush1.bf16.xpose.msra.mxu0 0
        %2107 = vmatprep.subr.bf16.mxu0 0
        %2108 = vmatpush1.bf16.xpose.msra.mxu0 0
        %2109 = vmatprep.subr.bf16.mxu0 0
        %2110 = vmatpush1.bf16.xpose.msra.mxu0 0
        %2111 = vmatprep.subr.bf16.mxu0 0
        %2112 = vmatpush1.bf16.xpose.msra.mxu0 0
        %2113 = vmatprep.subr.bf16.mxu0 0
        %2114 = vmatpush1.bf16.xpose.msra.mxu0 0
        %2115 = vmatprep.subr.bf16.mxu0 0
        %2116 = vmatpush1.bf16.xpose.msra.mxu0 0
        %2117 = vmatprep.subr.bf16.mxu0 0
        %2118 = vmatpush1.bf16.xpose.msra.mxu0 0
        %2119 = vmatprep.subr.bf16.mxu0 0
        %2120 = vmatpush1.bf16.xpose.msra.mxu0 0
        %2121 = vmatprep.subr.bf16.mxu0 0
        %2122 = vmatpush1.bf16.xpose.msra.mxu0 0
        %2123 = vmatprep.subr.bf16.mxu0 0
        %2124 = vmatpush1.bf16.xpose.msra.mxu0 0
        %2125 = vmatprep.mubr.bf16.mxu0 0
        %2126 = vmatmul.mubr.bf16.gmra.mrb[0].mxu0 %v2088
        %v2127 = vpop.f32.mrb[0].mxu0
        %v2128 = vadd.f32 0.0, %v2127
        %v2129 = vpop.f32.mrb[0].mxu0
        %v2130 = vpop.f32.mrb[0].mxu0
        %v2131 = vpop.f32.mrb[0].mxu0
        %2132 = vdwg.mxu0
        %2133 = vrot.lane.b32.xlu0 %v996, 120
        %v2134 = vpop.permute.xlu0 %2133
        %2135 = vrot.lane.b32.xlu0 %v1075, 120
        %v2136 = vpop.permute.xlu0 %2135
        %v2138 = vsel %vm1137, %v2134, 0
        %v2141 = vsel %vm1137, %v2136, 0
        %2143 = vmatprep.subr.bf16.mxu0 0
        %2144 = vmatpush1.bf16.xpose.msra.mxu0 %v2141
        %2145 = vmatprep.subr.bf16.mxu0 0
        %2146 = vmatpush1.bf16.xpose.msra.mxu0 0
        %2147 = vmatprep.subr.bf16.mxu0 0
        %2148 = vmatpush1.bf16.xpose.msra.mxu0 0
        %2149 = vmatprep.subr.bf16.mxu0 0
        %2150 = vmatpush1.bf16.xpose.msra.mxu0 0
        %2151 = vmatprep.subr.bf16.mxu0 0
        %2152 = vmatpush1.bf16.xpose.msra.mxu0 0
        %2153 = vmatprep.subr.bf16.mxu0 0
        %2154 = vmatpush1.bf16.xpose.msra.mxu0 0
        %2155 = vmatprep.subr.bf16.mxu0 0
        %2156 = vmatpush1.bf16.xpose.msra.mxu0 0
        %2157 = vmatprep.subr.bf16.mxu0 0
        %2158 = vmatpush1.bf16.xpose.msra.mxu0 0
        %2159 = vmatprep.subr.bf16.mxu0 0
        %2160 = vmatpush1.bf16.xpose.msra.mxu0 0
        %2161 = vmatprep.subr.bf16.mxu0 0
        %2162 = vmatpush1.bf16.xpose.msra.mxu0 0
        %2163 = vmatprep.subr.bf16.mxu0 0
        %2164 = vmatpush1.bf16.xpose.msra.mxu0 0
        %2165 = vmatprep.subr.bf16.mxu0 0
        %2166 = vmatpush1.bf16.xpose.msra.mxu0 0
        %2167 = vmatprep.subr.bf16.mxu0 0
        %2168 = vmatpush1.bf16.xpose.msra.mxu0 0
        %2169 = vmatprep.subr.bf16.mxu0 0
        %2170 = vmatpush1.bf16.xpose.msra.mxu0 0
        %2171 = vmatprep.subr.bf16.mxu0 0
        %2172 = vmatpush1.bf16.xpose.msra.mxu0 0
        %2173 = vmatprep.subr.bf16.mxu0 0
        %2174 = vmatpush1.bf16.xpose.msra.mxu0 0
        %2175 = vmatprep.mubr.bf16.mxu0 0
        %2176 = vmatmul.mubr.bf16.gmra.mrb[0].mxu0 %v2138
        %v2177 = vpop.f32.mrb[0].mxu0
        %v2178 = vadd.f32 0.0, %v2177
        %v2179 = vpop.f32.mrb[0].mxu0
        %v2180 = vpop.f32.mrb[0].mxu0
        %v2181 = vpop.f32.mrb[0].mxu0
        %2182 = vdwg.mxu0
        %2183 = vrot.lane.b32.xlu0 %v1133, 120
        %v2184 = vpop.permute.xlu0 %2183
        %v2186 = vsel %vm1137, %v2184, 0
        %2188 = vmatprep.subr.bf16.mxu0 0
        %2189 = vmatpush1.bf16.xpose.msra.mxu0 %v2186
        %2190 = vmatprep.subr.bf16.mxu0 0
        %2191 = vmatpush1.bf16.xpose.msra.mxu0 0
        %2192 = vmatprep.subr.bf16.mxu0 0
        %2193 = vmatpush1.bf16.xpose.msra.mxu0 0
        %2194 = vmatprep.subr.bf16.mxu0 0
        %2195 = vmatpush1.bf16.xpose.msra.mxu0 0
        %2196 = vmatprep.subr.bf16.mxu0 0
        %2197 = vmatpush1.bf16.xpose.msra.mxu0 0
        %2198 = vmatprep.subr.bf16.mxu0 0
        %2199 = vmatpush1.bf16.xpose.msra.mxu0 0
        %2200 = vmatprep.subr.bf16.mxu0 0
        %2201 = vmatpush1.bf16.xpose.msra.mxu0 0
        %2202 = vmatprep.subr.bf16.mxu0 0
        %2203 = vmatpush1.bf16.xpose.msra.mxu0 0
        %2204 = vmatprep.subr.bf16.mxu0 0
        %2205 = vmatpush1.bf16.xpose.msra.mxu0 0
        %2206 = vmatprep.subr.bf16.mxu0 0
        %2207 = vmatpush1.bf16.xpose.msra.mxu0 0
        %2208 = vmatprep.subr.bf16.mxu0 0
        %2209 = vmatpush1.bf16.xpose.msra.mxu0 0
        %2210 = vmatprep.subr.bf16.mxu0 0
        %2211 = vmatpush1.bf16.xpose.msra.mxu0 0
        %2212 = vmatprep.subr.bf16.mxu0 0
        %2213 = vmatpush1.bf16.xpose.msra.mxu0 0
        %2214 = vmatprep.subr.bf16.mxu0 0
        %2215 = vmatpush1.bf16.xpose.msra.mxu0 0
        %2216 = vmatprep.subr.bf16.mxu0 0
        %2217 = vmatpush1.bf16.xpose.msra.mxu0 0
        %2218 = vmatprep.subr.bf16.mxu0 0
        %2219 = vmatpush1.bf16.xpose.msra.mxu0 0
        %2220 = vmatprep.mubr.bf16.mxu0 0
        %2221 = vmatmul.mubr.bf16.gmra.mrb[0].mxu0 %v1988
        %v2222 = vpop.f32.mrb[0].mxu0
        %v2223 = vadd.f32 0.0, %v2222
        %v2224 = vpop.f32.mrb[0].mxu0
        %v2225 = vpop.f32.mrb[0].mxu0
        %v2226 = vpop.f32.mrb[0].mxu0
        %2227 = vdwg.mxu0
        %2228 = vrot.lane.b32.xlu0 %v1134, 120
        %v2229 = vpop.permute.xlu0 %2228
        %v2231 = vsel %vm1137, %v2229, 0
        %2233 = vmatprep.subr.bf16.mxu0 0
        %2234 = vmatpush1.bf16.xpose.msra.mxu0 %v2231
        %2235 = vmatprep.subr.bf16.mxu0 0
        %2236 = vmatpush1.bf16.xpose.msra.mxu0 0
        %2237 = vmatprep.subr.bf16.mxu0 0
        %2238 = vmatpush1.bf16.xpose.msra.mxu0 0
        %2239 = vmatprep.subr.bf16.mxu0 0
        %2240 = vmatpush1.bf16.xpose.msra.mxu0 0
        %2241 = vmatprep.subr.bf16.mxu0 0
        %2242 = vmatpush1.bf16.xpose.msra.mxu0 0
        %2243 = vmatprep.subr.bf16.mxu0 0
        %2244 = vmatpush1.bf16.xpose.msra.mxu0 0
        %2245 = vmatprep.subr.bf16.mxu0 0
        %2246 = vmatpush1.bf16.xpose.msra.mxu0 0
        %2247 = vmatprep.subr.bf16.mxu0 0
        %2248 = vmatpush1.bf16.xpose.msra.mxu0 0
        %2249 = vmatprep.subr.bf16.mxu0 0
        %2250 = vmatpush1.bf16.xpose.msra.mxu0 0
        %2251 = vmatprep.subr.bf16.mxu0 0
        %2252 = vmatpush1.bf16.xpose.msra.mxu0 0
        %2253 = vmatprep.subr.bf16.mxu0 0
        %2254 = vmatpush1.bf16.xpose.msra.mxu0 0
        %2255 = vmatprep.subr.bf16.mxu0 0
        %2256 = vmatpush1.bf16.xpose.msra.mxu0 0
        %2257 = vmatprep.subr.bf16.mxu0 0
        %2258 = vmatpush1.bf16.xpose.msra.mxu0 0
        %2259 = vmatprep.subr.bf16.mxu0 0
        %2260 = vmatpush1.bf16.xpose.msra.mxu0 0
        %2261 = vmatprep.subr.bf16.mxu0 0
        %2262 = vmatpush1.bf16.xpose.msra.mxu0 0
        %2263 = vmatprep.subr.bf16.mxu0 0
        %2264 = vmatpush1.bf16.xpose.msra.mxu0 0
        %2265 = vmatprep.mubr.bf16.mxu0 0
        %2266 = vmatmul.mubr.bf16.gmra.mrb[0].mxu0 %v2038
        %v2267 = vpop.f32.mrb[0].mxu0
        %v2268 = vadd.f32 0.0, %v2267
        %v2269 = vpop.f32.mrb[0].mxu0
        %v2270 = vpop.f32.mrb[0].mxu0
        %v2271 = vpop.f32.mrb[0].mxu0
        %2272 = vdwg.mxu0
        %2273 = vrot.lane.b32.xlu0 %v1135, 120
        %v2274 = vpop.permute.xlu0 %2273
        %v2276 = vsel %vm1137, %v2274, 0
        %2278 = vmatprep.subr.bf16.mxu0 0
        %2279 = vmatpush1.bf16.xpose.msra.mxu0 %v2276
        %2280 = vmatprep.subr.bf16.mxu0 0
        %2281 = vmatpush1.bf16.xpose.msra.mxu0 0
        %2282 = vmatprep.subr.bf16.mxu0 0
        %2283 = vmatpush1.bf16.xpose.msra.mxu0 0
        %2284 = vmatprep.subr.bf16.mxu0 0
        %2285 = vmatpush1.bf16.xpose.msra.mxu0 0
        %2286 = vmatprep.subr.bf16.mxu0 0
        %2287 = vmatpush1.bf16.xpose.msra.mxu0 0
        %2288 = vmatprep.subr.bf16.mxu0 0
        %2289 = vmatpush1.bf16.xpose.msra.mxu0 0
        %2290 = vmatprep.subr.bf16.mxu0 0
        %2291 = vmatpush1.bf16.xpose.msra.mxu0 0
        %2292 = vmatprep.subr.bf16.mxu0 0
        %2293 = vmatpush1.bf16.xpose.msra.mxu0 0
        %2294 = vmatprep.subr.bf16.mxu0 0
        %2295 = vmatpush1.bf16.xpose.msra.mxu0 0
        %2296 = vmatprep.subr.bf16.mxu0 0
        %2297 = vmatpush1.bf16.xpose.msra.mxu0 0
        %2298 = vmatprep.subr.bf16.mxu0 0
        %2299 = vmatpush1.bf16.xpose.msra.mxu0 0
        %2300 = vmatprep.subr.bf16.mxu0 0
        %2301 = vmatpush1.bf16.xpose.msra.mxu0 0
        %2302 = vmatprep.subr.bf16.mxu0 0
        %2303 = vmatpush1.bf16.xpose.msra.mxu0 0
        %2304 = vmatprep.subr.bf16.mxu0 0
        %2305 = vmatpush1.bf16.xpose.msra.mxu0 0
        %2306 = vmatprep.subr.bf16.mxu0 0
        %2307 = vmatpush1.bf16.xpose.msra.mxu0 0
        %2308 = vmatprep.subr.bf16.mxu0 0
        %2309 = vmatpush1.bf16.xpose.msra.mxu0 0
        %2310 = vmatprep.mubr.bf16.mxu0 0
        %2311 = vmatmul.mubr.bf16.gmra.mrb[0].mxu0 %v2088
        %v2312 = vpop.f32.mrb[0].mxu0
        %v2313 = vadd.f32 0.0, %v2312
        %v2314 = vpop.f32.mrb[0].mxu0
        %v2315 = vpop.f32.mrb[0].mxu0
        %v2316 = vpop.f32.mrb[0].mxu0
        %2317 = vdwg.mxu0
        %2318 = vrot.lane.b32.xlu0 %v1136, 120
        %v2319 = vpop.permute.xlu0 %2318
        %v2321 = vsel %vm1137, %v2319, 0
        %2323 = vmatprep.subr.bf16.mxu0 0
        %2324 = vmatpush1.bf16.xpose.msra.mxu0 %v2321
        %2325 = vmatprep.subr.bf16.mxu0 0
        %2326 = vmatpush1.bf16.xpose.msra.mxu0 0
        %2327 = vmatprep.subr.bf16.mxu0 0
        %2328 = vmatpush1.bf16.xpose.msra.mxu0 0
        %2329 = vmatprep.subr.bf16.mxu0 0
        %2330 = vmatpush1.bf16.xpose.msra.mxu0 0
        %2331 = vmatprep.subr.bf16.mxu0 0
        %2332 = vmatpush1.bf16.xpose.msra.mxu0 0
        %2333 = vmatprep.subr.bf16.mxu0 0
        %2334 = vmatpush1.bf16.xpose.msra.mxu0 0
        %2335 = vmatprep.subr.bf16.mxu0 0
        %2336 = vmatpush1.bf16.xpose.msra.mxu0 0
        %2337 = vmatprep.subr.bf16.mxu0 0
        %2338 = vmatpush1.bf16.xpose.msra.mxu0 0
        %2339 = vmatprep.subr.bf16.mxu0 0
        %2340 = vmatpush1.bf16.xpose.msra.mxu0 0
        %2341 = vmatprep.subr.bf16.mxu0 0
        %2342 = vmatpush1.bf16.xpose.msra.mxu0 0
        %2343 = vmatprep.subr.bf16.mxu0 0
        %2344 = vmatpush1.bf16.xpose.msra.mxu0 0
        %2345 = vmatprep.subr.bf16.mxu0 0
        %2346 = vmatpush1.bf16.xpose.msra.mxu0 0
        %2347 = vmatprep.subr.bf16.mxu0 0
        %2348 = vmatpush1.bf16.xpose.msra.mxu0 0
        %2349 = vmatprep.subr.bf16.mxu0 0
        %2350 = vmatpush1.bf16.xpose.msra.mxu0 0
        %2351 = vmatprep.subr.bf16.mxu0 0
        %2352 = vmatpush1.bf16.xpose.msra.mxu0 0
        %2353 = vmatprep.subr.bf16.mxu0 0
        %2354 = vmatpush1.bf16.xpose.msra.mxu0 0
        %2355 = vmatprep.mubr.bf16.mxu0 0
        %2356 = vmatmul.mubr.bf16.gmra.mrb[0].mxu0 %v2138
        %v2357 = vpop.f32.mrb[0].mxu0
        %v2358 = vadd.f32 0.0, %v2357
        %v2359 = vpop.f32.mrb[0].mxu0
        %v2360 = vpop.f32.mrb[0].mxu0
        %v2361 = vpop.f32.mrb[0].mxu0
        %2362 = vdwg.mxu0
        %v2363 = vsel %vm1137, %v2028, -inf
        %2364 = vmax.xlane.f32.xlu0 %v2363
        %v2365 = vpop.xlane.xlu0 %2364
        %v2366 = vsel %vm1137, %v2078, -inf
        %2367 = vmax.xlane.f32.xlu0 %v2366
        %v2368 = vpop.xlane.xlu0 %2367
        %v2369 = vsel %vm1137, %v2128, -inf
        %2370 = vmax.xlane.f32.xlu0 %v2369
        %v2371 = vpop.xlane.xlu0 %2370
        %v2372 = vsel %vm1137, %v2178, -inf
        %2373 = vmax.xlane.f32.xlu0 %v2372
        %v2374 = vpop.xlane.xlu0 %2373
        %v2375 = vsel %vm1137, %v2223, -inf
        %2376 = vmax.xlane.f32.xlu0 %v2375
        %v2377 = vpop.xlane.xlu0 %2376
        %v2378 = vsel %vm1137, %v2268, -inf
        %2379 = vmax.xlane.f32.xlu0 %v2378
        %v2380 = vpop.xlane.xlu0 %2379
        %v2381 = vsel %vm1137, %v2313, -inf
        %2382 = vmax.xlane.f32.xlu0 %v2381
        %v2383 = vpop.xlane.xlu0 %2382
        %v2384 = vsel %vm1137, %v2358, -inf
        %2385 = vmax.xlane.f32.xlu0 %v2384
        %v2386 = vpop.xlane.xlu0 %2385
        %v2387 = vmax.f32 %v2365, %v2377
        %v2388 = vmax.f32 %v2368, %v2380
        %v2389 = vmax.f32 %v2371, %v2383
        %v2390 = vmax.f32 %v2374, %v2386
        %v2391 = vsub.f32 %v2028, %v2387
        %v2392 = vsub.f32 %v2078, %v2388
        %v2393 = vsub.f32 %v2128, %v2389
        %v2394 = vsub.f32 %v2178, %v2390
        %v2395 = vmul.f32 %v2391, 1.442695
        %v2396 = vpow.pop %v2395
        %v2397 = vmul.f32 %v2392, 1.442695
        %v2398 = vpow.pop %v2397
        %v2399 = vmul.f32 %v2393, 1.442695
        %v2400 = vpow.pop %v2399
        %v2401 = vmul.f32 %v2394, 1.442695
        %v2402 = vpow.pop %v2401
        %v2403 = vsub.f32 %v2223, %v2387
        %v2404 = vsub.f32 %v2268, %v2388
        %v2405 = vsub.f32 %v2313, %v2389
        %v2406 = vsub.f32 %v2358, %v2390
        %v2407 = vmul.f32 %v2403, 1.442695
        %v2408 = vpow.pop %v2407
        %v2409 = vmul.f32 %v2404, 1.442695
        %v2410 = vpow.pop %v2409
        %v2411 = vmul.f32 %v2405, 1.442695
        %v2412 = vpow.pop %v2411
        %v2413 = vmul.f32 %v2406, 1.442695
        %v2414 = vpow.pop %v2413
        %v2415 = vsel %vm1137, %v2396, 0.0
        %2416 = vadd.xlane.f32.xlu0 %v2415
        %v2417 = vpop.xlane.xlu0 %2416
        %v2418 = vsel %vm1137, %v2398, 0.0
        %2419 = vadd.xlane.f32.xlu0 %v2418
        %v2420 = vpop.xlane.xlu0 %2419
        %v2421 = vsel %vm1137, %v2400, 0.0
        %2422 = vadd.xlane.f32.xlu0 %v2421
        %v2423 = vpop.xlane.xlu0 %2422
        %v2424 = vsel %vm1137, %v2402, 0.0
        %2425 = vadd.xlane.f32.xlu0 %v2424
        %v2426 = vpop.xlane.xlu0 %2425
        %v2427 = vsel %vm1137, %v2408, 0.0
        %2428 = vadd.xlane.f32.xlu0 %v2427
        %v2429 = vpop.xlane.xlu0 %2428
        %v2430 = vsel %vm1137, %v2410, 0.0
        %2431 = vadd.xlane.f32.xlu0 %v2430
        %v2432 = vpop.xlane.xlu0 %2431
        %v2433 = vsel %vm1137, %v2412, 0.0
        %2434 = vadd.xlane.f32.xlu0 %v2433
        %v2435 = vpop.xlane.xlu0 %2434
        %v2436 = vsel %vm1137, %v2414, 0.0
        %2437 = vadd.xlane.f32.xlu0 %v2436
        %v2438 = vpop.xlane.xlu0 %2437
        %v2439 = vadd.f32 %v2417, %v2429
        %v2440 = vadd.f32 %v2420, %v2432
        %v2441 = vadd.f32 %v2423, %v2435
        %v2442 = vadd.f32 %v2426, %v2438
        %v2443 = vrcp.pop %v2439
        %v2444 = vrcp.pop %v2440
        %v2445 = vrcp.pop %v2441
        %v2446 = vrcp.pop %v2442
        %v2447 = vmul.f32 %v2396, %v2443
        %v2448 = vmul.f32 %v2398, %v2444
        %v2449 = vmul.f32 %v2400, %v2445
        %v2450 = vmul.f32 %v2402, %v2446
        %v2451 = vpack.c.bf16 %v2447, %v2447
        %v2452 = vpack.c.bf16 %v2448, %v2448
        %v2453 = vpack.c.bf16 %v2449, %v2449
        %v2454 = vpack.c.bf16 %v2450, %v2450
        %v2455 = vmul.f32 %v2408, %v2443
        %v2456 = vmul.f32 %v2410, %v2444
        %v2457 = vmul.f32 %v2412, %v2445
        %v2458 = vmul.f32 %v2414, %v2446
        %v2459 = vpack.c.bf16 %v2455, %v2455
        %v2460 = vpack.c.bf16 %v2456, %v2456
        %v2461 = vpack.c.bf16 %v2457, %v2457
        %v2462 = vpack.c.bf16 %v2458, %v2458
        %2463 = vrot.lane.b32.xlu0 %v1133, 88
        %v2464 = vpop.permute.xlu0 %2463
        %v2466 = vsel %vm1137, %v2459, 0
        %v2469 = vsel %vm1599, %v2464, 0
        %2471 = vmatprep.subr.bf16.mxu0 0
        %2472 = vmatpush1.bf16.msra.mxu0 %v2469
        %2473 = vmatprep.subr.bf16.mxu0 0
        %2474 = vmatpush1.bf16.msra.mxu0 0
        %2475 = vmatprep.subr.bf16.mxu0 0
        %2476 = vmatpush1.bf16.msra.mxu0 0
        %2477 = vmatprep.subr.bf16.mxu0 0
        %2478 = vmatpush1.bf16.msra.mxu0 0
        %2479 = vmatprep.subr.bf16.mxu0 0
        %2480 = vmatpush1.bf16.msra.mxu0 0
        %2481 = vmatprep.subr.bf16.mxu0 0
        %2482 = vmatpush1.bf16.msra.mxu0 0
        %2483 = vmatprep.subr.bf16.mxu0 0
        %2484 = vmatpush1.bf16.msra.mxu0 0
        %2485 = vmatprep.subr.bf16.mxu0 0
        %2486 = vmatpush1.bf16.msra.mxu0 0
        %2487 = vmatprep.subr.bf16.mxu0 0
        %2488 = vmatpush1.bf16.msra.mxu0 0
        %2489 = vmatprep.subr.bf16.mxu0 0
        %2490 = vmatpush1.bf16.msra.mxu0 0
        %2491 = vmatprep.subr.bf16.mxu0 0
        %2492 = vmatpush1.bf16.msra.mxu0 0
        %2493 = vmatprep.subr.bf16.mxu0 0
        %2494 = vmatpush1.bf16.msra.mxu0 0
        %2495 = vmatprep.subr.bf16.mxu0 0
        %2496 = vmatpush1.bf16.msra.mxu0 0
        %2497 = vmatprep.subr.bf16.mxu0 0
        %2498 = vmatpush1.bf16.msra.mxu0 0
        %2499 = vmatprep.subr.bf16.mxu0 0
        %2500 = vmatpush1.bf16.msra.mxu0 0
        %2501 = vmatprep.subr.bf16.mxu0 0
        %2502 = vmatpush1.bf16.msra.mxu0 0
        %2503 = vmatprep.mubr.bf16.mxu0 0
        %2504 = vmatmul.mubr.bf16.gmra.mrb[0].mxu0 %v2466
        %v2505 = vpop.f32.mrb[0].mxu0
        %v2506 = vadd.f32 0.0, %v2505
        %v2507 = vpop.f32.mrb[0].mxu0
        %v2508 = vpop.f32.mrb[0].mxu0
        %v2509 = vpop.f32.mrb[0].mxu0
        %2510 = vdwg.mxu0
        %2511 = vrot.lane.b32.xlu0 %v1134, 88
        %v2512 = vpop.permute.xlu0 %2511
        %v2514 = vsel %vm1137, %v2460, 0
        %v2517 = vsel %vm1599, %v2512, 0
        %2519 = vmatprep.subr.bf16.mxu0 0
        %2520 = vmatpush1.bf16.msra.mxu0 %v2517
        %2521 = vmatprep.subr.bf16.mxu0 0
        %2522 = vmatpush1.bf16.msra.mxu0 0
        %2523 = vmatprep.subr.bf16.mxu0 0
        %2524 = vmatpush1.bf16.msra.mxu0 0
        %2525 = vmatprep.subr.bf16.mxu0 0
        %2526 = vmatpush1.bf16.msra.mxu0 0
        %2527 = vmatprep.subr.bf16.mxu0 0
        %2528 = vmatpush1.bf16.msra.mxu0 0
        %2529 = vmatprep.subr.bf16.mxu0 0
        %2530 = vmatpush1.bf16.msra.mxu0 0
        %2531 = vmatprep.subr.bf16.mxu0 0
        %2532 = vmatpush1.bf16.msra.mxu0 0
        %2533 = vmatprep.subr.bf16.mxu0 0
        %2534 = vmatpush1.bf16.msra.mxu0 0
        %2535 = vmatprep.subr.bf16.mxu0 0
        %2536 = vmatpush1.bf16.msra.mxu0 0
        %2537 = vmatprep.subr.bf16.mxu0 0
        %2538 = vmatpush1.bf16.msra.mxu0 0
        %2539 = vmatprep.subr.bf16.mxu0 0
        %2540 = vmatpush1.bf16.msra.mxu0 0
        %2541 = vmatprep.subr.bf16.mxu0 0
        %2542 = vmatpush1.bf16.msra.mxu0 0
        %2543 = vmatprep.subr.bf16.mxu0 0
        %2544 = vmatpush1.bf16.msra.mxu0 0
        %2545 = vmatprep.subr.bf16.mxu0 0
        %2546 = vmatpush1.bf16.msra.mxu0 0
        %2547 = vmatprep.subr.bf16.mxu0 0
        %2548 = vmatpush1.bf16.msra.mxu0 0
        %2549 = vmatprep.subr.bf16.mxu0 0
        %2550 = vmatpush1.bf16.msra.mxu0 0
        %2551 = vmatprep.mubr.bf16.mxu0 0
        %2552 = vmatmul.mubr.bf16.gmra.mrb[0].mxu0 %v2514
        %v2553 = vpop.f32.mrb[0].mxu0
        %v2554 = vadd.f32 0.0, %v2553
        %v2555 = vpop.f32.mrb[0].mxu0
        %v2556 = vpop.f32.mrb[0].mxu0
        %v2557 = vpop.f32.mrb[0].mxu0
        %2558 = vdwg.mxu0
        %2559 = vrot.lane.b32.xlu0 %v1135, 88
        %v2560 = vpop.permute.xlu0 %2559
        %v2562 = vsel %vm1137, %v2461, 0
        %v2565 = vsel %vm1599, %v2560, 0
        %2567 = vmatprep.subr.bf16.mxu0 0
        %2568 = vmatpush1.bf16.msra.mxu0 %v2565
        %2569 = vmatprep.subr.bf16.mxu0 0
        %2570 = vmatpush1.bf16.msra.mxu0 0
        %2571 = vmatprep.subr.bf16.mxu0 0
        %2572 = vmatpush1.bf16.msra.mxu0 0
        %2573 = vmatprep.subr.bf16.mxu0 0
        %2574 = vmatpush1.bf16.msra.mxu0 0
        %2575 = vmatprep.subr.bf16.mxu0 0
        %2576 = vmatpush1.bf16.msra.mxu0 0
        %2577 = vmatprep.subr.bf16.mxu0 0
        %2578 = vmatpush1.bf16.msra.mxu0 0
        %2579 = vmatprep.subr.bf16.mxu0 0
        %2580 = vmatpush1.bf16.msra.mxu0 0
        %2581 = vmatprep.subr.bf16.mxu0 0
        %2582 = vmatpush1.bf16.msra.mxu0 0
        %2583 = vmatprep.subr.bf16.mxu0 0
        %2584 = vmatpush1.bf16.msra.mxu0 0
        %2585 = vmatprep.subr.bf16.mxu0 0
        %2586 = vmatpush1.bf16.msra.mxu0 0
        %2587 = vmatprep.subr.bf16.mxu0 0
        %2588 = vmatpush1.bf16.msra.mxu0 0
        %2589 = vmatprep.subr.bf16.mxu0 0
        %2590 = vmatpush1.bf16.msra.mxu0 0
        %2591 = vmatprep.subr.bf16.mxu0 0
        %2592 = vmatpush1.bf16.msra.mxu0 0
        %2593 = vmatprep.subr.bf16.mxu0 0
        %2594 = vmatpush1.bf16.msra.mxu0 0
        %2595 = vmatprep.subr.bf16.mxu0 0
        %2596 = vmatpush1.bf16.msra.mxu0 0
        %2597 = vmatprep.subr.bf16.mxu0 0
        %2598 = vmatpush1.bf16.msra.mxu0 0
        %2599 = vmatprep.mubr.bf16.mxu0 0
        %2600 = vmatmul.mubr.bf16.gmra.mrb[0].mxu0 %v2562
        %v2601 = vpop.f32.mrb[0].mxu0
        %v2602 = vadd.f32 0.0, %v2601
        %v2603 = vpop.f32.mrb[0].mxu0
        %v2604 = vpop.f32.mrb[0].mxu0
        %v2605 = vpop.f32.mrb[0].mxu0
        %2606 = vdwg.mxu0
        %2607 = vrot.lane.b32.xlu0 %v1136, 88
        %v2608 = vpop.permute.xlu0 %2607
        %v2610 = vsel %vm1137, %v2462, 0
        %v2613 = vsel %vm1599, %v2608, 0
        %2615 = vmatprep.subr.bf16.mxu0 0
        %2616 = vmatpush1.bf16.msra.mxu0 %v2613
        %2617 = vmatprep.subr.bf16.mxu0 0
        %2618 = vmatpush1.bf16.msra.mxu0 0
        %2619 = vmatprep.subr.bf16.mxu0 0
        %2620 = vmatpush1.bf16.msra.mxu0 0
        %2621 = vmatprep.subr.bf16.mxu0 0
        %2622 = vmatpush1.bf16.msra.mxu0 0
        %2623 = vmatprep.subr.bf16.mxu0 0
        %2624 = vmatpush1.bf16.msra.mxu0 0
        %2625 = vmatprep.subr.bf16.mxu0 0
        %2626 = vmatpush1.bf16.msra.mxu0 0
        %2627 = vmatprep.subr.bf16.mxu0 0
        %2628 = vmatpush1.bf16.msra.mxu0 0
        %2629 = vmatprep.subr.bf16.mxu0 0
        %2630 = vmatpush1.bf16.msra.mxu0 0
        %2631 = vmatprep.subr.bf16.mxu0 0
        %2632 = vmatpush1.bf16.msra.mxu0 0
        %2633 = vmatprep.subr.bf16.mxu0 0
        %2634 = vmatpush1.bf16.msra.mxu0 0
        %2635 = vmatprep.subr.bf16.mxu0 0
        %2636 = vmatpush1.bf16.msra.mxu0 0
        %2637 = vmatprep.subr.bf16.mxu0 0
        %2638 = vmatpush1.bf16.msra.mxu0 0
        %2639 = vmatprep.subr.bf16.mxu0 0
        %2640 = vmatpush1.bf16.msra.mxu0 0
        %2641 = vmatprep.subr.bf16.mxu0 0
        %2642 = vmatpush1.bf16.msra.mxu0 0
        %2643 = vmatprep.subr.bf16.mxu0 0
        %2644 = vmatpush1.bf16.msra.mxu0 0
        %2645 = vmatprep.subr.bf16.mxu0 0
        %2646 = vmatpush1.bf16.msra.mxu0 0
        %2647 = vmatprep.mubr.bf16.mxu0 0
        %2648 = vmatmul.mubr.bf16.gmra.mrb[0].mxu0 %v2610
        %v2649 = vpop.f32.mrb[0].mxu0
        %v2650 = vadd.f32 0.0, %v2649
        %v2651 = vpop.f32.mrb[0].mxu0
        %v2652 = vpop.f32.mrb[0].mxu0
        %v2653 = vpop.f32.mrb[0].mxu0
        %2654 = vdwg.mxu0
        %2655 = vrot.lane.b32.xlu0 %v1072, 88
        %v2656 = vpop.permute.xlu0 %2655
        %v2658 = vsel %vm1137, %v2451, 0
        %v2661 = vsel %vm1599, %v2656, 0
        %2663 = vmatprep.subr.bf16.mxu0 0
        %2664 = vmatpush1.bf16.msra.mxu0 %v2661
        %2665 = vmatprep.subr.bf16.mxu0 0
        %2666 = vmatpush1.bf16.msra.mxu0 0
        %2667 = vmatprep.subr.bf16.mxu0 0
        %2668 = vmatpush1.bf16.msra.mxu0 0
        %2669 = vmatprep.subr.bf16.mxu0 0
        %2670 = vmatpush1.bf16.msra.mxu0 0
        %2671 = vmatprep.subr.bf16.mxu0 0
        %2672 = vmatpush1.bf16.msra.mxu0 0
        %2673 = vmatprep.subr.bf16.mxu0 0
        %2674 = vmatpush1.bf16.msra.mxu0 0
        %2675 = vmatprep.subr.bf16.mxu0 0
        %2676 = vmatpush1.bf16.msra.mxu0 0
        %2677 = vmatprep.subr.bf16.mxu0 0
        %2678 = vmatpush1.bf16.msra.mxu0 0
        %2679 = vmatprep.subr.bf16.mxu0 0
        %2680 = vmatpush1.bf16.msra.mxu0 0
        %2681 = vmatprep.subr.bf16.mxu0 0
        %2682 = vmatpush1.bf16.msra.mxu0 0
        %2683 = vmatprep.subr.bf16.mxu0 0
        %2684 = vmatpush1.bf16.msra.mxu0 0
        %2685 = vmatprep.subr.bf16.mxu0 0
        %2686 = vmatpush1.bf16.msra.mxu0 0
        %2687 = vmatprep.subr.bf16.mxu0 0
        %2688 = vmatpush1.bf16.msra.mxu0 0
        %2689 = vmatprep.subr.bf16.mxu0 0
        %2690 = vmatpush1.bf16.msra.mxu0 0
        %2691 = vmatprep.subr.bf16.mxu0 0
        %2692 = vmatpush1.bf16.msra.mxu0 0
        %2693 = vmatprep.subr.bf16.mxu0 0
        %2694 = vmatpush1.bf16.msra.mxu0 0
        %2695 = vmatprep.mubr.bf16.mxu0 0
        %2696 = vmatmul.mubr.bf16.gmra.mrb[0].mxu0 %v2658
        %v2697 = vpop.f32.mrb[0].mxu0
        %v2698 = vadd.f32 %v2506, %v2697
        %v2699 = vpop.f32.mrb[0].mxu0
        %v2700 = vpop.f32.mrb[0].mxu0
        %v2701 = vpop.f32.mrb[0].mxu0
        %2702 = vdwg.mxu0
        %2703 = vrot.lane.b32.xlu0 %v1073, 88
        %v2704 = vpop.permute.xlu0 %2703
        %v2706 = vsel %vm1137, %v2452, 0
        %v2709 = vsel %vm1599, %v2704, 0
        %2711 = vmatprep.subr.bf16.mxu0 0
        %2712 = vmatpush1.bf16.msra.mxu0 %v2709
        %2713 = vmatprep.subr.bf16.mxu0 0
        %2714 = vmatpush1.bf16.msra.mxu0 0
        %2715 = vmatprep.subr.bf16.mxu0 0
        %2716 = vmatpush1.bf16.msra.mxu0 0
        %2717 = vmatprep.subr.bf16.mxu0 0
        %2718 = vmatpush1.bf16.msra.mxu0 0
        %2719 = vmatprep.subr.bf16.mxu0 0
        %2720 = vmatpush1.bf16.msra.mxu0 0
        %2721 = vmatprep.subr.bf16.mxu0 0
        %2722 = vmatpush1.bf16.msra.mxu0 0
        %2723 = vmatprep.subr.bf16.mxu0 0
        %2724 = vmatpush1.bf16.msra.mxu0 0
        %2725 = vmatprep.subr.bf16.mxu0 0
        %2726 = vmatpush1.bf16.msra.mxu0 0
        %2727 = vmatprep.subr.bf16.mxu0 0
        %2728 = vmatpush1.bf16.msra.mxu0 0
        %2729 = vmatprep.subr.bf16.mxu0 0
        %2730 = vmatpush1.bf16.msra.mxu0 0
        %2731 = vmatprep.subr.bf16.mxu0 0
        %2732 = vmatpush1.bf16.msra.mxu0 0
        %2733 = vmatprep.subr.bf16.mxu0 0
        %2734 = vmatpush1.bf16.msra.mxu0 0
        %2735 = vmatprep.subr.bf16.mxu0 0
        %2736 = vmatpush1.bf16.msra.mxu0 0
        %2737 = vmatprep.subr.bf16.mxu0 0
        %2738 = vmatpush1.bf16.msra.mxu0 0
        %2739 = vmatprep.subr.bf16.mxu0 0
        %2740 = vmatpush1.bf16.msra.mxu0 0
        %2741 = vmatprep.subr.bf16.mxu0 0
        %2742 = vmatpush1.bf16.msra.mxu0 0
        %2743 = vmatprep.mubr.bf16.mxu0 0
        %2744 = vmatmul.mubr.bf16.gmra.mrb[0].mxu0 %v2706
        %v2745 = vpop.f32.mrb[0].mxu0
        %v2746 = vadd.f32 %v2554, %v2745
        %v2747 = vpop.f32.mrb[0].mxu0
        %v2748 = vpop.f32.mrb[0].mxu0
        %v2749 = vpop.f32.mrb[0].mxu0
        %2750 = vdwg.mxu0
        %2751 = vrot.lane.b32.xlu0 %v1074, 88
        %v2752 = vpop.permute.xlu0 %2751
        %v2754 = vsel %vm1137, %v2453, 0
        %v2757 = vsel %vm1599, %v2752, 0
        %2759 = vmatprep.subr.bf16.mxu0 0
        %2760 = vmatpush1.bf16.msra.mxu0 %v2757
        %2761 = vmatprep.subr.bf16.mxu0 0
        %2762 = vmatpush1.bf16.msra.mxu0 0
        %2763 = vmatprep.subr.bf16.mxu0 0
        %2764 = vmatpush1.bf16.msra.mxu0 0
        %2765 = vmatprep.subr.bf16.mxu0 0
        %2766 = vmatpush1.bf16.msra.mxu0 0
        %2767 = vmatprep.subr.bf16.mxu0 0
        %2768 = vmatpush1.bf16.msra.mxu0 0
        %2769 = vmatprep.subr.bf16.mxu0 0
        %2770 = vmatpush1.bf16.msra.mxu0 0
        %2771 = vmatprep.subr.bf16.mxu0 0
        %2772 = vmatpush1.bf16.msra.mxu0 0
        %2773 = vmatprep.subr.bf16.mxu0 0
        %2774 = vmatpush1.bf16.msra.mxu0 0
        %2775 = vmatprep.subr.bf16.mxu0 0
        %2776 = vmatpush1.bf16.msra.mxu0 0
        %2777 = vmatprep.subr.bf16.mxu0 0
        %2778 = vmatpush1.bf16.msra.mxu0 0
        %2779 = vmatprep.subr.bf16.mxu0 0
        %2780 = vmatpush1.bf16.msra.mxu0 0
        %2781 = vmatprep.subr.bf16.mxu0 0
        %2782 = vmatpush1.bf16.msra.mxu0 0
        %2783 = vmatprep.subr.bf16.mxu0 0
        %2784 = vmatpush1.bf16.msra.mxu0 0
        %2785 = vmatprep.subr.bf16.mxu0 0
        %2786 = vmatpush1.bf16.msra.mxu0 0
        %2787 = vmatprep.subr.bf16.mxu0 0
        %2788 = vmatpush1.bf16.msra.mxu0 0
        %2789 = vmatprep.subr.bf16.mxu0 0
        %2790 = vmatpush1.bf16.msra.mxu0 0
        %2791 = vmatprep.mubr.bf16.mxu0 0
        %2792 = vmatmul.mubr.bf16.gmra.mrb[0].mxu0 %v2754
        %v2793 = vpop.f32.mrb[0].mxu0
        %v2794 = vadd.f32 %v2602, %v2793
        %v2795 = vpop.f32.mrb[0].mxu0
        %v2796 = vpop.f32.mrb[0].mxu0
        %v2797 = vpop.f32.mrb[0].mxu0
        %2798 = vdwg.mxu0
        %2799 = vrot.lane.b32.xlu0 %v1075, 88
        %v2800 = vpop.permute.xlu0 %2799
        %v2802 = vsel %vm1137, %v2454, 0
        %v2805 = vsel %vm1599, %v2800, 0
        %2807 = vmatprep.subr.bf16.mxu0 0
        %2808 = vmatpush1.bf16.msra.mxu0 %v2805
        %2809 = vmatprep.subr.bf16.mxu0 0
        %2810 = vmatpush1.bf16.msra.mxu0 0
        %2811 = vmatprep.subr.bf16.mxu0 0
        %2812 = vmatpush1.bf16.msra.mxu0 0
        %2813 = vmatprep.subr.bf16.mxu0 0
        %2814 = vmatpush1.bf16.msra.mxu0 0
        %2815 = vmatprep.subr.bf16.mxu0 0
        %2816 = vmatpush1.bf16.msra.mxu0 0
        %2817 = vmatprep.subr.bf16.mxu0 0
        %2818 = vmatpush1.bf16.msra.mxu0 0
        %2819 = vmatprep.subr.bf16.mxu0 0
        %2820 = vmatpush1.bf16.msra.mxu0 0
        %2821 = vmatprep.subr.bf16.mxu0 0
        %2822 = vmatpush1.bf16.msra.mxu0 0
        %2823 = vmatprep.subr.bf16.mxu0 0
        %2824 = vmatpush1.bf16.msra.mxu0 0
        %2825 = vmatprep.subr.bf16.mxu0 0
        %2826 = vmatpush1.bf16.msra.mxu0 0
        %2827 = vmatprep.subr.bf16.mxu0 0
        %2828 = vmatpush1.bf16.msra.mxu0 0
        %2829 = vmatprep.subr.bf16.mxu0 0
        %2830 = vmatpush1.bf16.msra.mxu0 0
        %2831 = vmatprep.subr.bf16.mxu0 0
        %2832 = vmatpush1.bf16.msra.mxu0 0
        %2833 = vmatprep.subr.bf16.mxu0 0
        %2834 = vmatpush1.bf16.msra.mxu0 0
        %2835 = vmatprep.subr.bf16.mxu0 0
        %2836 = vmatpush1.bf16.msra.mxu0 0
        %2837 = vmatprep.subr.bf16.mxu0 0
        %2838 = vmatpush1.bf16.msra.mxu0 0
        %2839 = vmatprep.mubr.bf16.mxu0 0
        %2840 = vmatmul.mubr.bf16.gmra.mrb[0].mxu0 %v2802
        %v2841 = vpop.f32.mrb[0].mxu0
        %v2842 = vadd.f32 %v2650, %v2841
        %v2843 = vpop.f32.mrb[0].mxu0
        %v2844 = vpop.f32.mrb[0].mxu0
        %v2845 = vpop.f32.mrb[0].mxu0
        %2846 = vdwg.mxu0
        %v2847 = vpack.c.bf16 %v2698, %v2698
        %v2848 = vpack.c.bf16 %v2746, %v2746
        %v2849 = vpack.c.bf16 %v2794, %v2794
        %v2850 = vpack.c.bf16 %v2842, %v2842
        %2851 = vrot.lane.b32.xlu0 %v993, 112
        %v2852 = vpop.permute.xlu0 %2851
        %2853 = vrot.lane.b32.xlu0 %v1072, 112
        %v2854 = vpop.permute.xlu0 %2853
        %v2856 = vsel %vm1137, %v2852, 0
        %v2859 = vsel %vm1137, %v2854, 0
        %2861 = vmatprep.subr.bf16.mxu0 0
        %2862 = vmatpush1.bf16.xpose.msra.mxu0 %v2859
        %2863 = vmatprep.subr.bf16.mxu0 0
        %2864 = vmatpush1.bf16.xpose.msra.mxu0 0
        %2865 = vmatprep.subr.bf16.mxu0 0
        %2866 = vmatpush1.bf16.xpose.msra.mxu0 0
        %2867 = vmatprep.subr.bf16.mxu0 0
        %2868 = vmatpush1.bf16.xpose.msra.mxu0 0
        %2869 = vmatprep.subr.bf16.mxu0 0
        %2870 = vmatpush1.bf16.xpose.msra.mxu0 0
        %2871 = vmatprep.subr.bf16.mxu0 0
        %2872 = vmatpush1.bf16.xpose.msra.mxu0 0
        %2873 = vmatprep.subr.bf16.mxu0 0
        %2874 = vmatpush1.bf16.xpose.msra.mxu0 0
        %2875 = vmatprep.subr.bf16.mxu0 0
        %2876 = vmatpush1.bf16.xpose.msra.mxu0 0
        %2877 = vmatprep.subr.bf16.mxu0 0
        %2878 = vmatpush1.bf16.xpose.msra.mxu0 0
        %2879 = vmatprep.subr.bf16.mxu0 0
        %2880 = vmatpush1.bf16.xpose.msra.mxu0 0
        %2881 = vmatprep.subr.bf16.mxu0 0
        %2882 = vmatpush1.bf16.xpose.msra.mxu0 0
        %2883 = vmatprep.subr.bf16.mxu0 0
        %2884 = vmatpush1.bf16.xpose.msra.mxu0 0
        %2885 = vmatprep.subr.bf16.mxu0 0
        %2886 = vmatpush1.bf16.xpose.msra.mxu0 0
        %2887 = vmatprep.subr.bf16.mxu0 0
        %2888 = vmatpush1.bf16.xpose.msra.mxu0 0
        %2889 = vmatprep.subr.bf16.mxu0 0
        %2890 = vmatpush1.bf16.xpose.msra.mxu0 0
        %2891 = vmatprep.subr.bf16.mxu0 0
        %2892 = vmatpush1.bf16.xpose.msra.mxu0 0
        %2893 = vmatprep.mubr.bf16.mxu0 0
        %2894 = vmatmul.mubr.bf16.gmra.mrb[0].mxu0 %v2856
        %v2895 = vpop.f32.mrb[0].mxu0
        %v2896 = vadd.f32 0.0, %v2895
        %v2897 = vpop.f32.mrb[0].mxu0
        %v2898 = vpop.f32.mrb[0].mxu0
        %v2899 = vpop.f32.mrb[0].mxu0
        %2900 = vdwg.mxu0
        %2901 = vrot.lane.b32.xlu0 %v994, 112
        %v2902 = vpop.permute.xlu0 %2901
        %2903 = vrot.lane.b32.xlu0 %v1073, 112
        %v2904 = vpop.permute.xlu0 %2903
        %v2906 = vsel %vm1137, %v2902, 0
        %v2909 = vsel %vm1137, %v2904, 0
        %2911 = vmatprep.subr.bf16.mxu0 0
        %2912 = vmatpush1.bf16.xpose.msra.mxu0 %v2909
        %2913 = vmatprep.subr.bf16.mxu0 0
        %2914 = vmatpush1.bf16.xpose.msra.mxu0 0
        %2915 = vmatprep.subr.bf16.mxu0 0
        %2916 = vmatpush1.bf16.xpose.msra.mxu0 0
        %2917 = vmatprep.subr.bf16.mxu0 0
        %2918 = vmatpush1.bf16.xpose.msra.mxu0 0
        %2919 = vmatprep.subr.bf16.mxu0 0
        %2920 = vmatpush1.bf16.xpose.msra.mxu0 0
        %2921 = vmatprep.subr.bf16.mxu0 0
        %2922 = vmatpush1.bf16.xpose.msra.mxu0 0
        %2923 = vmatprep.subr.bf16.mxu0 0
        %2924 = vmatpush1.bf16.xpose.msra.mxu0 0
        %2925 = vmatprep.subr.bf16.mxu0 0
        %2926 = vmatpush1.bf16.xpose.msra.mxu0 0
        %2927 = vmatprep.subr.bf16.mxu0 0
        %2928 = vmatpush1.bf16.xpose.msra.mxu0 0
        %2929 = vmatprep.subr.bf16.mxu0 0
        %2930 = vmatpush1.bf16.xpose.msra.mxu0 0
        %2931 = vmatprep.subr.bf16.mxu0 0
        %2932 = vmatpush1.bf16.xpose.msra.mxu0 0
        %2933 = vmatprep.subr.bf16.mxu0 0
        %2934 = vmatpush1.bf16.xpose.msra.mxu0 0
        %2935 = vmatprep.subr.bf16.mxu0 0
        %2936 = vmatpush1.bf16.xpose.msra.mxu0 0
        %2937 = vmatprep.subr.bf16.mxu0 0
        %2938 = vmatpush1.bf16.xpose.msra.mxu0 0
        %2939 = vmatprep.subr.bf16.mxu0 0
        %2940 = vmatpush1.bf16.xpose.msra.mxu0 0
        %2941 = vmatprep.subr.bf16.mxu0 0
        %2942 = vmatpush1.bf16.xpose.msra.mxu0 0
        %2943 = vmatprep.mubr.bf16.mxu0 0
        %2944 = vmatmul.mubr.bf16.gmra.mrb[0].mxu0 %v2906
        %v2945 = vpop.f32.mrb[0].mxu0
        %v2946 = vadd.f32 0.0, %v2945
        %v2947 = vpop.f32.mrb[0].mxu0
        %v2948 = vpop.f32.mrb[0].mxu0
        %v2949 = vpop.f32.mrb[0].mxu0
        %2950 = vdwg.mxu0
        %2951 = vrot.lane.b32.xlu0 %v995, 112
        %v2952 = vpop.permute.xlu0 %2951
        %2953 = vrot.lane.b32.xlu0 %v1074, 112
        %v2954 = vpop.permute.xlu0 %2953
        %v2956 = vsel %vm1137, %v2952, 0
        %v2959 = vsel %vm1137, %v2954, 0
        %2961 = vmatprep.subr.bf16.mxu0 0
        %2962 = vmatpush1.bf16.xpose.msra.mxu0 %v2959
        %2963 = vmatprep.subr.bf16.mxu0 0
        %2964 = vmatpush1.bf16.xpose.msra.mxu0 0
        %2965 = vmatprep.subr.bf16.mxu0 0
        %2966 = vmatpush1.bf16.xpose.msra.mxu0 0
        %2967 = vmatprep.subr.bf16.mxu0 0
        %2968 = vmatpush1.bf16.xpose.msra.mxu0 0
        %2969 = vmatprep.subr.bf16.mxu0 0
        %2970 = vmatpush1.bf16.xpose.msra.mxu0 0
        %2971 = vmatprep.subr.bf16.mxu0 0
        %2972 = vmatpush1.bf16.xpose.msra.mxu0 0
        %2973 = vmatprep.subr.bf16.mxu0 0
        %2974 = vmatpush1.bf16.xpose.msra.mxu0 0
        %2975 = vmatprep.subr.bf16.mxu0 0
        %2976 = vmatpush1.bf16.xpose.msra.mxu0 0
        %2977 = vmatprep.subr.bf16.mxu0 0
        %2978 = vmatpush1.bf16.xpose.msra.mxu0 0
        %2979 = vmatprep.subr.bf16.mxu0 0
        %2980 = vmatpush1.bf16.xpose.msra.mxu0 0
        %2981 = vmatprep.subr.bf16.mxu0 0
        %2982 = vmatpush1.bf16.xpose.msra.mxu0 0
        %2983 = vmatprep.subr.bf16.mxu0 0
        %2984 = vmatpush1.bf16.xpose.msra.mxu0 0
        %2985 = vmatprep.subr.bf16.mxu0 0
        %2986 = vmatpush1.bf16.xpose.msra.mxu0 0
        %2987 = vmatprep.subr.bf16.mxu0 0
        %2988 = vmatpush1.bf16.xpose.msra.mxu0 0
        %2989 = vmatprep.subr.bf16.mxu0 0
        %2990 = vmatpush1.bf16.xpose.msra.mxu0 0
        %2991 = vmatprep.subr.bf16.mxu0 0
        %2992 = vmatpush1.bf16.xpose.msra.mxu0 0
        %2993 = vmatprep.mubr.bf16.mxu0 0
        %2994 = vmatmul.mubr.bf16.gmra.mrb[0].mxu0 %v2956
        %v2995 = vpop.f32.mrb[0].mxu0
        %v2996 = vadd.f32 0.0, %v2995
        %v2997 = vpop.f32.mrb[0].mxu0
        %v2998 = vpop.f32.mrb[0].mxu0
        %v2999 = vpop.f32.mrb[0].mxu0
        %3000 = vdwg.mxu0
        %3001 = vrot.lane.b32.xlu0 %v996, 112
        %v3002 = vpop.permute.xlu0 %3001
        %3003 = vrot.lane.b32.xlu0 %v1075, 112
        %v3004 = vpop.permute.xlu0 %3003
        %v3006 = vsel %vm1137, %v3002, 0
        %v3009 = vsel %vm1137, %v3004, 0
        %3011 = vmatprep.subr.bf16.mxu0 0
        %3012 = vmatpush1.bf16.xpose.msra.mxu0 %v3009
        %3013 = vmatprep.subr.bf16.mxu0 0
        %3014 = vmatpush1.bf16.xpose.msra.mxu0 0
        %3015 = vmatprep.subr.bf16.mxu0 0
        %3016 = vmatpush1.bf16.xpose.msra.mxu0 0
        %3017 = vmatprep.subr.bf16.mxu0 0
        %3018 = vmatpush1.bf16.xpose.msra.mxu0 0
        %3019 = vmatprep.subr.bf16.mxu0 0
        %3020 = vmatpush1.bf16.xpose.msra.mxu0 0
        %3021 = vmatprep.subr.bf16.mxu0 0
        %3022 = vmatpush1.bf16.xpose.msra.mxu0 0
        %3023 = vmatprep.subr.bf16.mxu0 0
        %3024 = vmatpush1.bf16.xpose.msra.mxu0 0
        %3025 = vmatprep.subr.bf16.mxu0 0
        %3026 = vmatpush1.bf16.xpose.msra.mxu0 0
        %3027 = vmatprep.subr.bf16.mxu0 0
        %3028 = vmatpush1.bf16.xpose.msra.mxu0 0
        %3029 = vmatprep.subr.bf16.mxu0 0
        %3030 = vmatpush1.bf16.xpose.msra.mxu0 0
        %3031 = vmatprep.subr.bf16.mxu0 0
        %3032 = vmatpush1.bf16.xpose.msra.mxu0 0
        %3033 = vmatprep.subr.bf16.mxu0 0
        %3034 = vmatpush1.bf16.xpose.msra.mxu0 0
        %3035 = vmatprep.subr.bf16.mxu0 0
        %3036 = vmatpush1.bf16.xpose.msra.mxu0 0
        %3037 = vmatprep.subr.bf16.mxu0 0
        %3038 = vmatpush1.bf16.xpose.msra.mxu0 0
        %3039 = vmatprep.subr.bf16.mxu0 0
        %3040 = vmatpush1.bf16.xpose.msra.mxu0 0
        %3041 = vmatprep.subr.bf16.mxu0 0
        %3042 = vmatpush1.bf16.xpose.msra.mxu0 0
        %3043 = vmatprep.mubr.bf16.mxu0 0
        %3044 = vmatmul.mubr.bf16.gmra.mrb[0].mxu0 %v3006
        %v3045 = vpop.f32.mrb[0].mxu0
        %v3046 = vadd.f32 0.0, %v3045
        %v3047 = vpop.f32.mrb[0].mxu0
        %v3048 = vpop.f32.mrb[0].mxu0
        %v3049 = vpop.f32.mrb[0].mxu0
        %3050 = vdwg.mxu0
        %3051 = vrot.lane.b32.xlu0 %v1133, 112
        %v3052 = vpop.permute.xlu0 %3051
        %v3054 = vsel %vm1137, %v3052, 0
        %3056 = vmatprep.subr.bf16.mxu0 0
        %3057 = vmatpush1.bf16.xpose.msra.mxu0 %v3054
        %3058 = vmatprep.subr.bf16.mxu0 0
        %3059 = vmatpush1.bf16.xpose.msra.mxu0 0
        %3060 = vmatprep.subr.bf16.mxu0 0
        %3061 = vmatpush1.bf16.xpose.msra.mxu0 0
        %3062 = vmatprep.subr.bf16.mxu0 0
        %3063 = vmatpush1.bf16.xpose.msra.mxu0 0
        %3064 = vmatprep.subr.bf16.mxu0 0
        %3065 = vmatpush1.bf16.xpose.msra.mxu0 0
        %3066 = vmatprep.subr.bf16.mxu0 0
        %3067 = vmatpush1.bf16.xpose.msra.mxu0 0
        %3068 = vmatprep.subr.bf16.mxu0 0
        %3069 = vmatpush1.bf16.xpose.msra.mxu0 0
        %3070 = vmatprep.subr.bf16.mxu0 0
        %3071 = vmatpush1.bf16.xpose.msra.mxu0 0
        %3072 = vmatprep.subr.bf16.mxu0 0
        %3073 = vmatpush1.bf16.xpose.msra.mxu0 0
        %3074 = vmatprep.subr.bf16.mxu0 0
        %3075 = vmatpush1.bf16.xpose.msra.mxu0 0
        %3076 = vmatprep.subr.bf16.mxu0 0
        %3077 = vmatpush1.bf16.xpose.msra.mxu0 0
        %3078 = vmatprep.subr.bf16.mxu0 0
        %3079 = vmatpush1.bf16.xpose.msra.mxu0 0
        %3080 = vmatprep.subr.bf16.mxu0 0
        %3081 = vmatpush1.bf16.xpose.msra.mxu0 0
        %3082 = vmatprep.subr.bf16.mxu0 0
        %3083 = vmatpush1.bf16.xpose.msra.mxu0 0
        %3084 = vmatprep.subr.bf16.mxu0 0
        %3085 = vmatpush1.bf16.xpose.msra.mxu0 0
        %3086 = vmatprep.subr.bf16.mxu0 0
        %3087 = vmatpush1.bf16.xpose.msra.mxu0 0
        %3088 = vmatprep.mubr.bf16.mxu0 0
        %3089 = vmatmul.mubr.bf16.gmra.mrb[0].mxu0 %v2856
        %v3090 = vpop.f32.mrb[0].mxu0
        %v3091 = vadd.f32 0.0, %v3090
        %v3092 = vpop.f32.mrb[0].mxu0
        %v3093 = vpop.f32.mrb[0].mxu0
        %v3094 = vpop.f32.mrb[0].mxu0
        %3095 = vdwg.mxu0
        %3096 = vrot.lane.b32.xlu0 %v1134, 112
        %v3097 = vpop.permute.xlu0 %3096
        %v3099 = vsel %vm1137, %v3097, 0
        %3101 = vmatprep.subr.bf16.mxu0 0
        %3102 = vmatpush1.bf16.xpose.msra.mxu0 %v3099
        %3103 = vmatprep.subr.bf16.mxu0 0
        %3104 = vmatpush1.bf16.xpose.msra.mxu0 0
        %3105 = vmatprep.subr.bf16.mxu0 0
        %3106 = vmatpush1.bf16.xpose.msra.mxu0 0
        %3107 = vmatprep.subr.bf16.mxu0 0
        %3108 = vmatpush1.bf16.xpose.msra.mxu0 0
        %3109 = vmatprep.subr.bf16.mxu0 0
        %3110 = vmatpush1.bf16.xpose.msra.mxu0 0
        %3111 = vmatprep.subr.bf16.mxu0 0
        %3112 = vmatpush1.bf16.xpose.msra.mxu0 0
        %3113 = vmatprep.subr.bf16.mxu0 0
        %3114 = vmatpush1.bf16.xpose.msra.mxu0 0
        %3115 = vmatprep.subr.bf16.mxu0 0
        %3116 = vmatpush1.bf16.xpose.msra.mxu0 0
        %3117 = vmatprep.subr.bf16.mxu0 0
        %3118 = vmatpush1.bf16.xpose.msra.mxu0 0
        %3119 = vmatprep.subr.bf16.mxu0 0
        %3120 = vmatpush1.bf16.xpose.msra.mxu0 0
        %3121 = vmatprep.subr.bf16.mxu0 0
        %3122 = vmatpush1.bf16.xpose.msra.mxu0 0
        %3123 = vmatprep.subr.bf16.mxu0 0
        %3124 = vmatpush1.bf16.xpose.msra.mxu0 0
        %3125 = vmatprep.subr.bf16.mxu0 0
        %3126 = vmatpush1.bf16.xpose.msra.mxu0 0
        %3127 = vmatprep.subr.bf16.mxu0 0
        %3128 = vmatpush1.bf16.xpose.msra.mxu0 0
        %3129 = vmatprep.subr.bf16.mxu0 0
        %3130 = vmatpush1.bf16.xpose.msra.mxu0 0
        %3131 = vmatprep.subr.bf16.mxu0 0
        %3132 = vmatpush1.bf16.xpose.msra.mxu0 0
        %3133 = vmatprep.mubr.bf16.mxu0 0
        %3134 = vmatmul.mubr.bf16.gmra.mrb[0].mxu0 %v2906
        %v3135 = vpop.f32.mrb[0].mxu0
        %v3136 = vadd.f32 0.0, %v3135
        %v3137 = vpop.f32.mrb[0].mxu0
        %v3138 = vpop.f32.mrb[0].mxu0
        %v3139 = vpop.f32.mrb[0].mxu0
        %3140 = vdwg.mxu0
        %3141 = vrot.lane.b32.xlu0 %v1135, 112
        %v3142 = vpop.permute.xlu0 %3141
        %v3144 = vsel %vm1137, %v3142, 0
        %3146 = vmatprep.subr.bf16.mxu0 0
        %3147 = vmatpush1.bf16.xpose.msra.mxu0 %v3144
        %3148 = vmatprep.subr.bf16.mxu0 0
        %3149 = vmatpush1.bf16.xpose.msra.mxu0 0
        %3150 = vmatprep.subr.bf16.mxu0 0
        %3151 = vmatpush1.bf16.xpose.msra.mxu0 0
        %3152 = vmatprep.subr.bf16.mxu0 0
        %3153 = vmatpush1.bf16.xpose.msra.mxu0 0
        %3154 = vmatprep.subr.bf16.mxu0 0
        %3155 = vmatpush1.bf16.xpose.msra.mxu0 0
        %3156 = vmatprep.subr.bf16.mxu0 0
        %3157 = vmatpush1.bf16.xpose.msra.mxu0 0
        %3158 = vmatprep.subr.bf16.mxu0 0
        %3159 = vmatpush1.bf16.xpose.msra.mxu0 0
        %3160 = vmatprep.subr.bf16.mxu0 0
        %3161 = vmatpush1.bf16.xpose.msra.mxu0 0
        %3162 = vmatprep.subr.bf16.mxu0 0
        %3163 = vmatpush1.bf16.xpose.msra.mxu0 0
        %3164 = vmatprep.subr.bf16.mxu0 0
        %3165 = vmatpush1.bf16.xpose.msra.mxu0 0
        %3166 = vmatprep.subr.bf16.mxu0 0
        %3167 = vmatpush1.bf16.xpose.msra.mxu0 0
        %3168 = vmatprep.subr.bf16.mxu0 0
        %3169 = vmatpush1.bf16.xpose.msra.mxu0 0
        %3170 = vmatprep.subr.bf16.mxu0 0
        %3171 = vmatpush1.bf16.xpose.msra.mxu0 0
        %3172 = vmatprep.subr.bf16.mxu0 0
        %3173 = vmatpush1.bf16.xpose.msra.mxu0 0
        %3174 = vmatprep.subr.bf16.mxu0 0
        %3175 = vmatpush1.bf16.xpose.msra.mxu0 0
        %3176 = vmatprep.subr.bf16.mxu0 0
        %3177 = vmatpush1.bf16.xpose.msra.mxu0 0
        %3178 = vmatprep.mubr.bf16.mxu0 0
        %3179 = vmatmul.mubr.bf16.gmra.mrb[0].mxu0 %v2956
        %v3180 = vpop.f32.mrb[0].mxu0
        %v3181 = vadd.f32 0.0, %v3180
        %v3182 = vpop.f32.mrb[0].mxu0
        %v3183 = vpop.f32.mrb[0].mxu0
        %v3184 = vpop.f32.mrb[0].mxu0
        %3185 = vdwg.mxu0
        %3186 = vrot.lane.b32.xlu0 %v1136, 112
        %v3187 = vpop.permute.xlu0 %3186
        %v3189 = vsel %vm1137, %v3187, 0
        %3191 = vmatprep.subr.bf16.mxu0 0
        %3192 = vmatpush1.bf16.xpose.msra.mxu0 %v3189
        %3193 = vmatprep.subr.bf16.mxu0 0
        %3194 = vmatpush1.bf16.xpose.msra.mxu0 0
        %3195 = vmatprep.subr.bf16.mxu0 0
        %3196 = vmatpush1.bf16.xpose.msra.mxu0 0
        %3197 = vmatprep.subr.bf16.mxu0 0
        %3198 = vmatpush1.bf16.xpose.msra.mxu0 0
        %3199 = vmatprep.subr.bf16.mxu0 0
        %3200 = vmatpush1.bf16.xpose.msra.mxu0 0
        %3201 = vmatprep.subr.bf16.mxu0 0
        %3202 = vmatpush1.bf16.xpose.msra.mxu0 0
        %3203 = vmatprep.subr.bf16.mxu0 0
        %3204 = vmatpush1.bf16.xpose.msra.mxu0 0
        %3205 = vmatprep.subr.bf16.mxu0 0
        %3206 = vmatpush1.bf16.xpose.msra.mxu0 0
        %3207 = vmatprep.subr.bf16.mxu0 0
        %3208 = vmatpush1.bf16.xpose.msra.mxu0 0
        %3209 = vmatprep.subr.bf16.mxu0 0
        %3210 = vmatpush1.bf16.xpose.msra.mxu0 0
        %3211 = vmatprep.subr.bf16.mxu0 0
        %3212 = vmatpush1.bf16.xpose.msra.mxu0 0
        %3213 = vmatprep.subr.bf16.mxu0 0
        %3214 = vmatpush1.bf16.xpose.msra.mxu0 0
        %3215 = vmatprep.subr.bf16.mxu0 0
        %3216 = vmatpush1.bf16.xpose.msra.mxu0 0
        %3217 = vmatprep.subr.bf16.mxu0 0
        %3218 = vmatpush1.bf16.xpose.msra.mxu0 0
        %3219 = vmatprep.subr.bf16.mxu0 0
        %3220 = vmatpush1.bf16.xpose.msra.mxu0 0
        %3221 = vmatprep.subr.bf16.mxu0 0
        %3222 = vmatpush1.bf16.xpose.msra.mxu0 0
        %3223 = vmatprep.mubr.bf16.mxu0 0
        %3224 = vmatmul.mubr.bf16.gmra.mrb[0].mxu0 %v3006
        %v3225 = vpop.f32.mrb[0].mxu0
        %v3226 = vadd.f32 0.0, %v3225
        %v3227 = vpop.f32.mrb[0].mxu0
        %v3228 = vpop.f32.mrb[0].mxu0
        %v3229 = vpop.f32.mrb[0].mxu0
        %3230 = vdwg.mxu0
        %v3231 = vsel %vm1137, %v2896, -inf
        %3232 = vmax.xlane.f32.xlu0 %v3231
        %v3233 = vpop.xlane.xlu0 %3232
        %v3234 = vsel %vm1137, %v2946, -inf
        %3235 = vmax.xlane.f32.xlu0 %v3234
        %v3236 = vpop.xlane.xlu0 %3235
        %v3237 = vsel %vm1137, %v2996, -inf
        %3238 = vmax.xlane.f32.xlu0 %v3237
        %v3239 = vpop.xlane.xlu0 %3238
        %v3240 = vsel %vm1137, %v3046, -inf
        %3241 = vmax.xlane.f32.xlu0 %v3240
        %v3242 = vpop.xlane.xlu0 %3241
        %v3243 = vsel %vm1137, %v3091, -inf
        %3244 = vmax.xlane.f32.xlu0 %v3243
        %v3245 = vpop.xlane.xlu0 %3244
        %v3246 = vsel %vm1137, %v3136, -inf
        %3247 = vmax.xlane.f32.xlu0 %v3246
        %v3248 = vpop.xlane.xlu0 %3247
        %v3249 = vsel %vm1137, %v3181, -inf
        %3250 = vmax.xlane.f32.xlu0 %v3249
        %v3251 = vpop.xlane.xlu0 %3250
        %v3252 = vsel %vm1137, %v3226, -inf
        %3253 = vmax.xlane.f32.xlu0 %v3252
        %v3254 = vpop.xlane.xlu0 %3253
        %v3255 = vmax.f32 %v3233, %v3245
        %v3256 = vmax.f32 %v3236, %v3248
        %v3257 = vmax.f32 %v3239, %v3251
        %v3258 = vmax.f32 %v3242, %v3254
        %v3259 = vsub.f32 %v2896, %v3255
        %v3260 = vsub.f32 %v2946, %v3256
        %v3261 = vsub.f32 %v2996, %v3257
        %v3262 = vsub.f32 %v3046, %v3258
        %v3263 = vmul.f32 %v3259, 1.442695
        %v3264 = vpow.pop %v3263
        %v3265 = vmul.f32 %v3260, 1.442695
        %v3266 = vpow.pop %v3265
        %v3267 = vmul.f32 %v3261, 1.442695
        %v3268 = vpow.pop %v3267
        %v3269 = vmul.f32 %v3262, 1.442695
        %v3270 = vpow.pop %v3269
        %v3271 = vsub.f32 %v3091, %v3255
        %v3272 = vsub.f32 %v3136, %v3256
        %v3273 = vsub.f32 %v3181, %v3257
        %v3274 = vsub.f32 %v3226, %v3258
        %v3275 = vmul.f32 %v3271, 1.442695
        %v3276 = vpow.pop %v3275
        %v3277 = vmul.f32 %v3272, 1.442695
        %v3278 = vpow.pop %v3277
        %v3279 = vmul.f32 %v3273, 1.442695
        %v3280 = vpow.pop %v3279
        %v3281 = vmul.f32 %v3274, 1.442695
        %v3282 = vpow.pop %v3281
        %v3283 = vsel %vm1137, %v3264, 0.0
        %3284 = vadd.xlane.f32.xlu0 %v3283
        %v3285 = vpop.xlane.xlu0 %3284
        %v3286 = vsel %vm1137, %v3266, 0.0
        %3287 = vadd.xlane.f32.xlu0 %v3286
        %v3288 = vpop.xlane.xlu0 %3287
        %v3289 = vsel %vm1137, %v3268, 0.0
        %3290 = vadd.xlane.f32.xlu0 %v3289
        %v3291 = vpop.xlane.xlu0 %3290
        %v3292 = vsel %vm1137, %v3270, 0.0
        %3293 = vadd.xlane.f32.xlu0 %v3292
        %v3294 = vpop.xlane.xlu0 %3293
        %v3295 = vsel %vm1137, %v3276, 0.0
        %3296 = vadd.xlane.f32.xlu0 %v3295
        %v3297 = vpop.xlane.xlu0 %3296
        %v3298 = vsel %vm1137, %v3278, 0.0
        %3299 = vadd.xlane.f32.xlu0 %v3298
        %v3300 = vpop.xlane.xlu0 %3299
        %v3301 = vsel %vm1137, %v3280, 0.0
        %3302 = vadd.xlane.f32.xlu0 %v3301
        %v3303 = vpop.xlane.xlu0 %3302
        %v3304 = vsel %vm1137, %v3282, 0.0
        %3305 = vadd.xlane.f32.xlu0 %v3304
        %v3306 = vpop.xlane.xlu0 %3305
        %v3307 = vadd.f32 %v3285, %v3297
        %v3308 = vadd.f32 %v3288, %v3300
        %v3309 = vadd.f32 %v3291, %v3303
        %v3310 = vadd.f32 %v3294, %v3306
        %v3311 = vrcp.pop %v3307
        %v3312 = vrcp.pop %v3308
        %v3313 = vrcp.pop %v3309
        %v3314 = vrcp.pop %v3310
        %v3315 = vmul.f32 %v3264, %v3311
        %v3316 = vmul.f32 %v3266, %v3312
        %v3317 = vmul.f32 %v3268, %v3313
        %v3318 = vmul.f32 %v3270, %v3314
        %v3319 = vpack.c.bf16 %v3315, %v3315
        %v3320 = vpack.c.bf16 %v3316, %v3316
        %v3321 = vpack.c.bf16 %v3317, %v3317
        %v3322 = vpack.c.bf16 %v3318, %v3318
        %v3323 = vmul.f32 %v3276, %v3311
        %v3324 = vmul.f32 %v3278, %v3312
        %v3325 = vmul.f32 %v3280, %v3313
        %v3326 = vmul.f32 %v3282, %v3314
        %v3327 = vpack.c.bf16 %v3323, %v3323
        %v3328 = vpack.c.bf16 %v3324, %v3324
        %v3329 = vpack.c.bf16 %v3325, %v3325
        %v3330 = vpack.c.bf16 %v3326, %v3326
        %3331 = vrot.lane.b32.xlu0 %v1133, 80
        %v3332 = vpop.permute.xlu0 %3331
        %v3334 = vsel %vm1137, %v3327, 0
        %v3337 = vsel %vm1599, %v3332, 0
        %3339 = vmatprep.subr.bf16.mxu0 0
        %3340 = vmatpush1.bf16.msra.mxu0 %v3337
        %3341 = vmatprep.subr.bf16.mxu0 0
        %3342 = vmatpush1.bf16.msra.mxu0 0
        %3343 = vmatprep.subr.bf16.mxu0 0
        %3344 = vmatpush1.bf16.msra.mxu0 0
        %3345 = vmatprep.subr.bf16.mxu0 0
        %3346 = vmatpush1.bf16.msra.mxu0 0
        %3347 = vmatprep.subr.bf16.mxu0 0
        %3348 = vmatpush1.bf16.msra.mxu0 0
        %3349 = vmatprep.subr.bf16.mxu0 0
        %3350 = vmatpush1.bf16.msra.mxu0 0
        %3351 = vmatprep.subr.bf16.mxu0 0
        %3352 = vmatpush1.bf16.msra.mxu0 0
        %3353 = vmatprep.subr.bf16.mxu0 0
        %3354 = vmatpush1.bf16.msra.mxu0 0
        %3355 = vmatprep.subr.bf16.mxu0 0
        %3356 = vmatpush1.bf16.msra.mxu0 0
        %3357 = vmatprep.subr.bf16.mxu0 0
        %3358 = vmatpush1.bf16.msra.mxu0 0
        %3359 = vmatprep.subr.bf16.mxu0 0
        %3360 = vmatpush1.bf16.msra.mxu0 0
        %3361 = vmatprep.subr.bf16.mxu0 0
        %3362 = vmatpush1.bf16.msra.mxu0 0
        %3363 = vmatprep.subr.bf16.mxu0 0
        %3364 = vmatpush1.bf16.msra.mxu0 0
        %3365 = vmatprep.subr.bf16.mxu0 0
        %3366 = vmatpush1.bf16.msra.mxu0 0
        %3367 = vmatprep.subr.bf16.mxu0 0
        %3368 = vmatpush1.bf16.msra.mxu0 0
        %3369 = vmatprep.subr.bf16.mxu0 0
        %3370 = vmatpush1.bf16.msra.mxu0 0
        %3371 = vmatprep.mubr.bf16.mxu0 0
        %3372 = vmatmul.mubr.bf16.gmra.mrb[0].mxu0 %v3334
        %v3373 = vpop.f32.mrb[0].mxu0
        %v3374 = vadd.f32 0.0, %v3373
        %v3375 = vpop.f32.mrb[0].mxu0
        %v3376 = vpop.f32.mrb[0].mxu0
        %v3377 = vpop.f32.mrb[0].mxu0
        %3378 = vdwg.mxu0
        %3379 = vrot.lane.b32.xlu0 %v1134, 80
        %v3380 = vpop.permute.xlu0 %3379
        %v3382 = vsel %vm1137, %v3328, 0
        %v3385 = vsel %vm1599, %v3380, 0
        %3387 = vmatprep.subr.bf16.mxu0 0
        %3388 = vmatpush1.bf16.msra.mxu0 %v3385
        %3389 = vmatprep.subr.bf16.mxu0 0
        %3390 = vmatpush1.bf16.msra.mxu0 0
        %3391 = vmatprep.subr.bf16.mxu0 0
        %3392 = vmatpush1.bf16.msra.mxu0 0
        %3393 = vmatprep.subr.bf16.mxu0 0
        %3394 = vmatpush1.bf16.msra.mxu0 0
        %3395 = vmatprep.subr.bf16.mxu0 0
        %3396 = vmatpush1.bf16.msra.mxu0 0
        %3397 = vmatprep.subr.bf16.mxu0 0
        %3398 = vmatpush1.bf16.msra.mxu0 0
        %3399 = vmatprep.subr.bf16.mxu0 0
        %3400 = vmatpush1.bf16.msra.mxu0 0
        %3401 = vmatprep.subr.bf16.mxu0 0
        %3402 = vmatpush1.bf16.msra.mxu0 0
        %3403 = vmatprep.subr.bf16.mxu0 0
        %3404 = vmatpush1.bf16.msra.mxu0 0
        %3405 = vmatprep.subr.bf16.mxu0 0
        %3406 = vmatpush1.bf16.msra.mxu0 0
        %3407 = vmatprep.subr.bf16.mxu0 0
        %3408 = vmatpush1.bf16.msra.mxu0 0
        %3409 = vmatprep.subr.bf16.mxu0 0
        %3410 = vmatpush1.bf16.msra.mxu0 0
        %3411 = vmatprep.subr.bf16.mxu0 0
        %3412 = vmatpush1.bf16.msra.mxu0 0
        %3413 = vmatprep.subr.bf16.mxu0 0
        %3414 = vmatpush1.bf16.msra.mxu0 0
        %3415 = vmatprep.subr.bf16.mxu0 0
        %3416 = vmatpush1.bf16.msra.mxu0 0
        %3417 = vmatprep.subr.bf16.mxu0 0
        %3418 = vmatpush1.bf16.msra.mxu0 0
        %3419 = vmatprep.mubr.bf16.mxu0 0
        %3420 = vmatmul.mubr.bf16.gmra.mrb[0].mxu0 %v3382
        %v3421 = vpop.f32.mrb[0].mxu0
        %v3422 = vadd.f32 0.0, %v3421
        %v3423 = vpop.f32.mrb[0].mxu0
        %v3424 = vpop.f32.mrb[0].mxu0
        %v3425 = vpop.f32.mrb[0].mxu0
        %3426 = vdwg.mxu0
        %3427 = vrot.lane.b32.xlu0 %v1135, 80
        %v3428 = vpop.permute.xlu0 %3427
        %v3430 = vsel %vm1137, %v3329, 0
        %v3433 = vsel %vm1599, %v3428, 0
        %3435 = vmatprep.subr.bf16.mxu0 0
        %3436 = vmatpush1.bf16.msra.mxu0 %v3433
        %3437 = vmatprep.subr.bf16.mxu0 0
        %3438 = vmatpush1.bf16.msra.mxu0 0
        %3439 = vmatprep.subr.bf16.mxu0 0
        %3440 = vmatpush1.bf16.msra.mxu0 0
        %3441 = vmatprep.subr.bf16.mxu0 0
        %3442 = vmatpush1.bf16.msra.mxu0 0
        %3443 = vmatprep.subr.bf16.mxu0 0
        %3444 = vmatpush1.bf16.msra.mxu0 0
        %3445 = vmatprep.subr.bf16.mxu0 0
        %3446 = vmatpush1.bf16.msra.mxu0 0
        %3447 = vmatprep.subr.bf16.mxu0 0
        %3448 = vmatpush1.bf16.msra.mxu0 0
        %3449 = vmatprep.subr.bf16.mxu0 0
        %3450 = vmatpush1.bf16.msra.mxu0 0
        %3451 = vmatprep.subr.bf16.mxu0 0
        %3452 = vmatpush1.bf16.msra.mxu0 0
        %3453 = vmatprep.subr.bf16.mxu0 0
        %3454 = vmatpush1.bf16.msra.mxu0 0
        %3455 = vmatprep.subr.bf16.mxu0 0
        %3456 = vmatpush1.bf16.msra.mxu0 0
        %3457 = vmatprep.subr.bf16.mxu0 0
        %3458 = vmatpush1.bf16.msra.mxu0 0
        %3459 = vmatprep.subr.bf16.mxu0 0
        %3460 = vmatpush1.bf16.msra.mxu0 0
        %3461 = vmatprep.subr.bf16.mxu0 0
        %3462 = vmatpush1.bf16.msra.mxu0 0
        %3463 = vmatprep.subr.bf16.mxu0 0
        %3464 = vmatpush1.bf16.msra.mxu0 0
        %3465 = vmatprep.subr.bf16.mxu0 0
        %3466 = vmatpush1.bf16.msra.mxu0 0
        %3467 = vmatprep.mubr.bf16.mxu0 0
        %3468 = vmatmul.mubr.bf16.gmra.mrb[0].mxu0 %v3430
        %v3469 = vpop.f32.mrb[0].mxu0
        %v3470 = vadd.f32 0.0, %v3469
        %v3471 = vpop.f32.mrb[0].mxu0
        %v3472 = vpop.f32.mrb[0].mxu0
        %v3473 = vpop.f32.mrb[0].mxu0
        %3474 = vdwg.mxu0
        %3475 = vrot.lane.b32.xlu0 %v1136, 80
        %v3476 = vpop.permute.xlu0 %3475
        %v3478 = vsel %vm1137, %v3330, 0
        %v3481 = vsel %vm1599, %v3476, 0
        %3483 = vmatprep.subr.bf16.mxu0 0
        %3484 = vmatpush1.bf16.msra.mxu0 %v3481
        %3485 = vmatprep.subr.bf16.mxu0 0
        %3486 = vmatpush1.bf16.msra.mxu0 0
        %3487 = vmatprep.subr.bf16.mxu0 0
        %3488 = vmatpush1.bf16.msra.mxu0 0
        %3489 = vmatprep.subr.bf16.mxu0 0
        %3490 = vmatpush1.bf16.msra.mxu0 0
        %3491 = vmatprep.subr.bf16.mxu0 0
        %3492 = vmatpush1.bf16.msra.mxu0 0
        %3493 = vmatprep.subr.bf16.mxu0 0
        %3494 = vmatpush1.bf16.msra.mxu0 0
        %3495 = vmatprep.subr.bf16.mxu0 0
        %3496 = vmatpush1.bf16.msra.mxu0 0
        %3497 = vmatprep.subr.bf16.mxu0 0
        %3498 = vmatpush1.bf16.msra.mxu0 0
        %3499 = vmatprep.subr.bf16.mxu0 0
        %3500 = vmatpush1.bf16.msra.mxu0 0
        %3501 = vmatprep.subr.bf16.mxu0 0
        %3502 = vmatpush1.bf16.msra.mxu0 0
        %3503 = vmatprep.subr.bf16.mxu0 0
        %3504 = vmatpush1.bf16.msra.mxu0 0
        %3505 = vmatprep.subr.bf16.mxu0 0
        %3506 = vmatpush1.bf16.msra.mxu0 0
        %3507 = vmatprep.subr.bf16.mxu0 0
        %3508 = vmatpush1.bf16.msra.mxu0 0
        %3509 = vmatprep.subr.bf16.mxu0 0
        %3510 = vmatpush1.bf16.msra.mxu0 0
        %3511 = vmatprep.subr.bf16.mxu0 0
        %3512 = vmatpush1.bf16.msra.mxu0 0
        %3513 = vmatprep.subr.bf16.mxu0 0
        %3514 = vmatpush1.bf16.msra.mxu0 0
        %3515 = vmatprep.mubr.bf16.mxu0 0
        %3516 = vmatmul.mubr.bf16.gmra.mrb[0].mxu0 %v3478
        %v3517 = vpop.f32.mrb[0].mxu0
        %v3518 = vadd.f32 0.0, %v3517
        %v3519 = vpop.f32.mrb[0].mxu0
        %v3520 = vpop.f32.mrb[0].mxu0
        %v3521 = vpop.f32.mrb[0].mxu0
        %3522 = vdwg.mxu0
        %3523 = vrot.lane.b32.xlu0 %v1072, 80
        %v3524 = vpop.permute.xlu0 %3523
        %v3526 = vsel %vm1137, %v3319, 0
        %v3529 = vsel %vm1599, %v3524, 0
        %3531 = vmatprep.subr.bf16.mxu0 0
        %3532 = vmatpush1.bf16.msra.mxu0 %v3529
        %3533 = vmatprep.subr.bf16.mxu0 0
        %3534 = vmatpush1.bf16.msra.mxu0 0
        %3535 = vmatprep.subr.bf16.mxu0 0
        %3536 = vmatpush1.bf16.msra.mxu0 0
        %3537 = vmatprep.subr.bf16.mxu0 0
        %3538 = vmatpush1.bf16.msra.mxu0 0
        %3539 = vmatprep.subr.bf16.mxu0 0
        %3540 = vmatpush1.bf16.msra.mxu0 0
        %3541 = vmatprep.subr.bf16.mxu0 0
        %3542 = vmatpush1.bf16.msra.mxu0 0
        %3543 = vmatprep.subr.bf16.mxu0 0
        %3544 = vmatpush1.bf16.msra.mxu0 0
        %3545 = vmatprep.subr.bf16.mxu0 0
        %3546 = vmatpush1.bf16.msra.mxu0 0
        %3547 = vmatprep.subr.bf16.mxu0 0
        %3548 = vmatpush1.bf16.msra.mxu0 0
        %3549 = vmatprep.subr.bf16.mxu0 0
        %3550 = vmatpush1.bf16.msra.mxu0 0
        %3551 = vmatprep.subr.bf16.mxu0 0
        %3552 = vmatpush1.bf16.msra.mxu0 0
        %3553 = vmatprep.subr.bf16.mxu0 0
        %3554 = vmatpush1.bf16.msra.mxu0 0
        %3555 = vmatprep.subr.bf16.mxu0 0
        %3556 = vmatpush1.bf16.msra.mxu0 0
        %3557 = vmatprep.subr.bf16.mxu0 0
        %3558 = vmatpush1.bf16.msra.mxu0 0
        %3559 = vmatprep.subr.bf16.mxu0 0
        %3560 = vmatpush1.bf16.msra.mxu0 0
        %3561 = vmatprep.subr.bf16.mxu0 0
        %3562 = vmatpush1.bf16.msra.mxu0 0
        %3563 = vmatprep.mubr.bf16.mxu0 0
        %3564 = vmatmul.mubr.bf16.gmra.mrb[0].mxu0 %v3526
        %v3565 = vpop.f32.mrb[0].mxu0
        %v3566 = vadd.f32 %v3374, %v3565
        %v3567 = vpop.f32.mrb[0].mxu0
        %v3568 = vpop.f32.mrb[0].mxu0
        %v3569 = vpop.f32.mrb[0].mxu0
        %3570 = vdwg.mxu0
        %3571 = vrot.lane.b32.xlu0 %v1073, 80
        %v3572 = vpop.permute.xlu0 %3571
        %v3574 = vsel %vm1137, %v3320, 0
        %v3577 = vsel %vm1599, %v3572, 0
        %3579 = vmatprep.subr.bf16.mxu0 0
        %3580 = vmatpush1.bf16.msra.mxu0 %v3577
        %3581 = vmatprep.subr.bf16.mxu0 0
        %3582 = vmatpush1.bf16.msra.mxu0 0
        %3583 = vmatprep.subr.bf16.mxu0 0
        %3584 = vmatpush1.bf16.msra.mxu0 0
        %3585 = vmatprep.subr.bf16.mxu0 0
        %3586 = vmatpush1.bf16.msra.mxu0 0
        %3587 = vmatprep.subr.bf16.mxu0 0
        %3588 = vmatpush1.bf16.msra.mxu0 0
        %3589 = vmatprep.subr.bf16.mxu0 0
        %3590 = vmatpush1.bf16.msra.mxu0 0
        %3591 = vmatprep.subr.bf16.mxu0 0
        %3592 = vmatpush1.bf16.msra.mxu0 0
        %3593 = vmatprep.subr.bf16.mxu0 0
        %3594 = vmatpush1.bf16.msra.mxu0 0
        %3595 = vmatprep.subr.bf16.mxu0 0
        %3596 = vmatpush1.bf16.msra.mxu0 0
        %3597 = vmatprep.subr.bf16.mxu0 0
        %3598 = vmatpush1.bf16.msra.mxu0 0
        %3599 = vmatprep.subr.bf16.mxu0 0
        %3600 = vmatpush1.bf16.msra.mxu0 0
        %3601 = vmatprep.subr.bf16.mxu0 0
        %3602 = vmatpush1.bf16.msra.mxu0 0
        %3603 = vmatprep.subr.bf16.mxu0 0
        %3604 = vmatpush1.bf16.msra.mxu0 0
        %3605 = vmatprep.subr.bf16.mxu0 0
        %3606 = vmatpush1.bf16.msra.mxu0 0
        %3607 = vmatprep.subr.bf16.mxu0 0
        %3608 = vmatpush1.bf16.msra.mxu0 0
        %3609 = vmatprep.subr.bf16.mxu0 0
        %3610 = vmatpush1.bf16.msra.mxu0 0
        %3611 = vmatprep.mubr.bf16.mxu0 0
        %3612 = vmatmul.mubr.bf16.gmra.mrb[0].mxu0 %v3574
        %v3613 = vpop.f32.mrb[0].mxu0
        %v3614 = vadd.f32 %v3422, %v3613
        %v3615 = vpop.f32.mrb[0].mxu0
        %v3616 = vpop.f32.mrb[0].mxu0
        %v3617 = vpop.f32.mrb[0].mxu0
        %3618 = vdwg.mxu0
        %3619 = vrot.lane.b32.xlu0 %v1074, 80
        %v3620 = vpop.permute.xlu0 %3619
        %v3622 = vsel %vm1137, %v3321, 0
        %v3625 = vsel %vm1599, %v3620, 0
        %3627 = vmatprep.subr.bf16.mxu0 0
        %3628 = vmatpush1.bf16.msra.mxu0 %v3625
        %3629 = vmatprep.subr.bf16.mxu0 0
        %3630 = vmatpush1.bf16.msra.mxu0 0
        %3631 = vmatprep.subr.bf16.mxu0 0
        %3632 = vmatpush1.bf16.msra.mxu0 0
        %3633 = vmatprep.subr.bf16.mxu0 0
        %3634 = vmatpush1.bf16.msra.mxu0 0
        %3635 = vmatprep.subr.bf16.mxu0 0
        %3636 = vmatpush1.bf16.msra.mxu0 0
        %3637 = vmatprep.subr.bf16.mxu0 0
        %3638 = vmatpush1.bf16.msra.mxu0 0
        %3639 = vmatprep.subr.bf16.mxu0 0
        %3640 = vmatpush1.bf16.msra.mxu0 0
        %3641 = vmatprep.subr.bf16.mxu0 0
        %3642 = vmatpush1.bf16.msra.mxu0 0
        %3643 = vmatprep.subr.bf16.mxu0 0
        %3644 = vmatpush1.bf16.msra.mxu0 0
        %3645 = vmatprep.subr.bf16.mxu0 0
        %3646 = vmatpush1.bf16.msra.mxu0 0
        %3647 = vmatprep.subr.bf16.mxu0 0
        %3648 = vmatpush1.bf16.msra.mxu0 0
        %3649 = vmatprep.subr.bf16.mxu0 0
        %3650 = vmatpush1.bf16.msra.mxu0 0
        %3651 = vmatprep.subr.bf16.mxu0 0
        %3652 = vmatpush1.bf16.msra.mxu0 0
        %3653 = vmatprep.subr.bf16.mxu0 0
        %3654 = vmatpush1.bf16.msra.mxu0 0
        %3655 = vmatprep.subr.bf16.mxu0 0
        %3656 = vmatpush1.bf16.msra.mxu0 0
        %3657 = vmatprep.subr.bf16.mxu0 0
        %3658 = vmatpush1.bf16.msra.mxu0 0
        %3659 = vmatprep.mubr.bf16.mxu0 0
        %3660 = vmatmul.mubr.bf16.gmra.mrb[0].mxu0 %v3622
        %v3661 = vpop.f32.mrb[0].mxu0
        %v3662 = vadd.f32 %v3470, %v3661
        %v3663 = vpop.f32.mrb[0].mxu0
        %v3664 = vpop.f32.mrb[0].mxu0
        %v3665 = vpop.f32.mrb[0].mxu0
        %3666 = vdwg.mxu0
        %3667 = vrot.lane.b32.xlu0 %v1075, 80
        %v3668 = vpop.permute.xlu0 %3667
        %v3670 = vsel %vm1137, %v3322, 0
        %v3673 = vsel %vm1599, %v3668, 0
        %3675 = vmatprep.subr.bf16.mxu0 0
        %3676 = vmatpush1.bf16.msra.mxu0 %v3673
        %3677 = vmatprep.subr.bf16.mxu0 0
        %3678 = vmatpush1.bf16.msra.mxu0 0
        %3679 = vmatprep.subr.bf16.mxu0 0
        %3680 = vmatpush1.bf16.msra.mxu0 0
        %3681 = vmatprep.subr.bf16.mxu0 0
        %3682 = vmatpush1.bf16.msra.mxu0 0
        %3683 = vmatprep.subr.bf16.mxu0 0
        %3684 = vmatpush1.bf16.msra.mxu0 0
        %3685 = vmatprep.subr.bf16.mxu0 0
        %3686 = vmatpush1.bf16.msra.mxu0 0
        %3687 = vmatprep.subr.bf16.mxu0 0
        %3688 = vmatpush1.bf16.msra.mxu0 0
        %3689 = vmatprep.subr.bf16.mxu0 0
        %3690 = vmatpush1.bf16.msra.mxu0 0
        %3691 = vmatprep.subr.bf16.mxu0 0
        %3692 = vmatpush1.bf16.msra.mxu0 0
        %3693 = vmatprep.subr.bf16.mxu0 0
        %3694 = vmatpush1.bf16.msra.mxu0 0
        %3695 = vmatprep.subr.bf16.mxu0 0
        %3696 = vmatpush1.bf16.msra.mxu0 0
        %3697 = vmatprep.subr.bf16.mxu0 0
        %3698 = vmatpush1.bf16.msra.mxu0 0
        %3699 = vmatprep.subr.bf16.mxu0 0
        %3700 = vmatpush1.bf16.msra.mxu0 0
        %3701 = vmatprep.subr.bf16.mxu0 0
        %3702 = vmatpush1.bf16.msra.mxu0 0
        %3703 = vmatprep.subr.bf16.mxu0 0
        %3704 = vmatpush1.bf16.msra.mxu0 0
        %3705 = vmatprep.subr.bf16.mxu0 0
        %3706 = vmatpush1.bf16.msra.mxu0 0
        %3707 = vmatprep.mubr.bf16.mxu0 0
        %3708 = vmatmul.mubr.bf16.gmra.mrb[0].mxu0 %v3670
        %v3709 = vpop.f32.mrb[0].mxu0
        %v3710 = vadd.f32 %v3518, %v3709
        %v3711 = vpop.f32.mrb[0].mxu0
        %v3712 = vpop.f32.mrb[0].mxu0
        %v3713 = vpop.f32.mrb[0].mxu0
        %3714 = vdwg.mxu0
        %v3715 = vpack.c.bf16 %v3566, %v3566
        %v3716 = vpack.c.bf16 %v3614, %v3614
        %v3717 = vpack.c.bf16 %v3662, %v3662
        %v3718 = vpack.c.bf16 %v3710, %v3710
        %3719 = vrot.lane.b32.xlu0 %v993, 104
        %v3720 = vpop.permute.xlu0 %3719
        %3721 = vrot.lane.b32.xlu0 %v1072, 104
        %v3722 = vpop.permute.xlu0 %3721
        %v3724 = vsel %vm1137, %v3720, 0
        %v3727 = vsel %vm1137, %v3722, 0
        %3729 = vmatprep.subr.bf16.mxu0 0
        %3730 = vmatpush1.bf16.xpose.msra.mxu0 %v3727
        %3731 = vmatprep.subr.bf16.mxu0 0
        %3732 = vmatpush1.bf16.xpose.msra.mxu0 0
        %3733 = vmatprep.subr.bf16.mxu0 0
        %3734 = vmatpush1.bf16.xpose.msra.mxu0 0
        %3735 = vmatprep.subr.bf16.mxu0 0
        %3736 = vmatpush1.bf16.xpose.msra.mxu0 0
        %3737 = vmatprep.subr.bf16.mxu0 0
        %3738 = vmatpush1.bf16.xpose.msra.mxu0 0
        %3739 = vmatprep.subr.bf16.mxu0 0
        %3740 = vmatpush1.bf16.xpose.msra.mxu0 0
        %3741 = vmatprep.subr.bf16.mxu0 0
        %3742 = vmatpush1.bf16.xpose.msra.mxu0 0
        %3743 = vmatprep.subr.bf16.mxu0 0
        %3744 = vmatpush1.bf16.xpose.msra.mxu0 0
        %3745 = vmatprep.subr.bf16.mxu0 0
        %3746 = vmatpush1.bf16.xpose.msra.mxu0 0
        %3747 = vmatprep.subr.bf16.mxu0 0
        %3748 = vmatpush1.bf16.xpose.msra.mxu0 0
        %3749 = vmatprep.subr.bf16.mxu0 0
        %3750 = vmatpush1.bf16.xpose.msra.mxu0 0
        %3751 = vmatprep.subr.bf16.mxu0 0
        %3752 = vmatpush1.bf16.xpose.msra.mxu0 0
        %3753 = vmatprep.subr.bf16.mxu0 0
        %3754 = vmatpush1.bf16.xpose.msra.mxu0 0
        %3755 = vmatprep.subr.bf16.mxu0 0
        %3756 = vmatpush1.bf16.xpose.msra.mxu0 0
        %3757 = vmatprep.subr.bf16.mxu0 0
        %3758 = vmatpush1.bf16.xpose.msra.mxu0 0
        %3759 = vmatprep.subr.bf16.mxu0 0
        %3760 = vmatpush1.bf16.xpose.msra.mxu0 0
        %3761 = vmatprep.mubr.bf16.mxu0 0
        %3762 = vmatmul.mubr.bf16.gmra.mrb[0].mxu0 %v3724
        %v3763 = vpop.f32.mrb[0].mxu0
        %v3764 = vadd.f32 0.0, %v3763
        %v3765 = vpop.f32.mrb[0].mxu0
        %v3766 = vpop.f32.mrb[0].mxu0
        %v3767 = vpop.f32.mrb[0].mxu0
        %3768 = vdwg.mxu0
        %3769 = vrot.lane.b32.xlu0 %v994, 104
        %v3770 = vpop.permute.xlu0 %3769
        %3771 = vrot.lane.b32.xlu0 %v1073, 104
        %v3772 = vpop.permute.xlu0 %3771
        %v3774 = vsel %vm1137, %v3770, 0
        %v3777 = vsel %vm1137, %v3772, 0
        %3779 = vmatprep.subr.bf16.mxu0 0
        %3780 = vmatpush1.bf16.xpose.msra.mxu0 %v3777
        %3781 = vmatprep.subr.bf16.mxu0 0
        %3782 = vmatpush1.bf16.xpose.msra.mxu0 0
        %3783 = vmatprep.subr.bf16.mxu0 0
        %3784 = vmatpush1.bf16.xpose.msra.mxu0 0
        %3785 = vmatprep.subr.bf16.mxu0 0
        %3786 = vmatpush1.bf16.xpose.msra.mxu0 0
        %3787 = vmatprep.subr.bf16.mxu0 0
        %3788 = vmatpush1.bf16.xpose.msra.mxu0 0
        %3789 = vmatprep.subr.bf16.mxu0 0
        %3790 = vmatpush1.bf16.xpose.msra.mxu0 0
        %3791 = vmatprep.subr.bf16.mxu0 0
        %3792 = vmatpush1.bf16.xpose.msra.mxu0 0
        %3793 = vmatprep.subr.bf16.mxu0 0
        %3794 = vmatpush1.bf16.xpose.msra.mxu0 0
        %3795 = vmatprep.subr.bf16.mxu0 0
        %3796 = vmatpush1.bf16.xpose.msra.mxu0 0
        %3797 = vmatprep.subr.bf16.mxu0 0
        %3798 = vmatpush1.bf16.xpose.msra.mxu0 0
        %3799 = vmatprep.subr.bf16.mxu0 0
        %3800 = vmatpush1.bf16.xpose.msra.mxu0 0
        %3801 = vmatprep.subr.bf16.mxu0 0
        %3802 = vmatpush1.bf16.xpose.msra.mxu0 0
        %3803 = vmatprep.subr.bf16.mxu0 0
        %3804 = vmatpush1.bf16.xpose.msra.mxu0 0
        %3805 = vmatprep.subr.bf16.mxu0 0
        %3806 = vmatpush1.bf16.xpose.msra.mxu0 0
        %3807 = vmatprep.subr.bf16.mxu0 0
        %3808 = vmatpush1.bf16.xpose.msra.mxu0 0
        %3809 = vmatprep.subr.bf16.mxu0 0
        %3810 = vmatpush1.bf16.xpose.msra.mxu0 0
        %3811 = vmatprep.mubr.bf16.mxu0 0
        %3812 = vmatmul.mubr.bf16.gmra.mrb[0].mxu0 %v3774
        %v3813 = vpop.f32.mrb[0].mxu0
        %v3814 = vadd.f32 0.0, %v3813
        %v3815 = vpop.f32.mrb[0].mxu0
        %v3816 = vpop.f32.mrb[0].mxu0
        %v3817 = vpop.f32.mrb[0].mxu0
        %3818 = vdwg.mxu0
        %3819 = vrot.lane.b32.xlu0 %v995, 104
        %v3820 = vpop.permute.xlu0 %3819
        %3821 = vrot.lane.b32.xlu0 %v1074, 104
        %v3822 = vpop.permute.xlu0 %3821
        %v3824 = vsel %vm1137, %v3820, 0
        %v3827 = vsel %vm1137, %v3822, 0
        %3829 = vmatprep.subr.bf16.mxu0 0
        %3830 = vmatpush1.bf16.xpose.msra.mxu0 %v3827
        %3831 = vmatprep.subr.bf16.mxu0 0
        %3832 = vmatpush1.bf16.xpose.msra.mxu0 0
        %3833 = vmatprep.subr.bf16.mxu0 0
        %3834 = vmatpush1.bf16.xpose.msra.mxu0 0
        %3835 = vmatprep.subr.bf16.mxu0 0
        %3836 = vmatpush1.bf16.xpose.msra.mxu0 0
        %3837 = vmatprep.subr.bf16.mxu0 0
        %3838 = vmatpush1.bf16.xpose.msra.mxu0 0
        %3839 = vmatprep.subr.bf16.mxu0 0
        %3840 = vmatpush1.bf16.xpose.msra.mxu0 0
        %3841 = vmatprep.subr.bf16.mxu0 0
        %3842 = vmatpush1.bf16.xpose.msra.mxu0 0
        %3843 = vmatprep.subr.bf16.mxu0 0
        %3844 = vmatpush1.bf16.xpose.msra.mxu0 0
        %3845 = vmatprep.subr.bf16.mxu0 0
        %3846 = vmatpush1.bf16.xpose.msra.mxu0 0
        %3847 = vmatprep.subr.bf16.mxu0 0
        %3848 = vmatpush1.bf16.xpose.msra.mxu0 0
        %3849 = vmatprep.subr.bf16.mxu0 0
        %3850 = vmatpush1.bf16.xpose.msra.mxu0 0
        %3851 = vmatprep.subr.bf16.mxu0 0
        %3852 = vmatpush1.bf16.xpose.msra.mxu0 0
        %3853 = vmatprep.subr.bf16.mxu0 0
        %3854 = vmatpush1.bf16.xpose.msra.mxu0 0
        %3855 = vmatprep.subr.bf16.mxu0 0
        %3856 = vmatpush1.bf16.xpose.msra.mxu0 0
        %3857 = vmatprep.subr.bf16.mxu0 0
        %3858 = vmatpush1.bf16.xpose.msra.mxu0 0
        %3859 = vmatprep.subr.bf16.mxu0 0
        %3860 = vmatpush1.bf16.xpose.msra.mxu0 0
        %3861 = vmatprep.mubr.bf16.mxu0 0
        %3862 = vmatmul.mubr.bf16.gmra.mrb[0].mxu0 %v3824
        %v3863 = vpop.f32.mrb[0].mxu0
        %v3864 = vadd.f32 0.0, %v3863
        %v3865 = vpop.f32.mrb[0].mxu0
        %v3866 = vpop.f32.mrb[0].mxu0
        %v3867 = vpop.f32.mrb[0].mxu0
        %3868 = vdwg.mxu0
        %3869 = vrot.lane.b32.xlu0 %v996, 104
        %v3870 = vpop.permute.xlu0 %3869
        %3871 = vrot.lane.b32.xlu0 %v1075, 104
        %v3872 = vpop.permute.xlu0 %3871
        %v3874 = vsel %vm1137, %v3870, 0
        %v3877 = vsel %vm1137, %v3872, 0
        %3879 = vmatprep.subr.bf16.mxu0 0
        %3880 = vmatpush1.bf16.xpose.msra.mxu0 %v3877
        %3881 = vmatprep.subr.bf16.mxu0 0
        %3882 = vmatpush1.bf16.xpose.msra.mxu0 0
        %3883 = vmatprep.subr.bf16.mxu0 0
        %3884 = vmatpush1.bf16.xpose.msra.mxu0 0
        %3885 = vmatprep.subr.bf16.mxu0 0
        %3886 = vmatpush1.bf16.xpose.msra.mxu0 0
        %3887 = vmatprep.subr.bf16.mxu0 0
        %3888 = vmatpush1.bf16.xpose.msra.mxu0 0
        %3889 = vmatprep.subr.bf16.mxu0 0
        %3890 = vmatpush1.bf16.xpose.msra.mxu0 0
        %3891 = vmatprep.subr.bf16.mxu0 0
        %3892 = vmatpush1.bf16.xpose.msra.mxu0 0
        %3893 = vmatprep.subr.bf16.mxu0 0
        %3894 = vmatpush1.bf16.xpose.msra.mxu0 0
        %3895 = vmatprep.subr.bf16.mxu0 0
        %3896 = vmatpush1.bf16.xpose.msra.mxu0 0
        %3897 = vmatprep.subr.bf16.mxu0 0
        %3898 = vmatpush1.bf16.xpose.msra.mxu0 0
        %3899 = vmatprep.subr.bf16.mxu0 0
        %3900 = vmatpush1.bf16.xpose.msra.mxu0 0
        %3901 = vmatprep.subr.bf16.mxu0 0
        %3902 = vmatpush1.bf16.xpose.msra.mxu0 0
        %3903 = vmatprep.subr.bf16.mxu0 0
        %3904 = vmatpush1.bf16.xpose.msra.mxu0 0
        %3905 = vmatprep.subr.bf16.mxu0 0
        %3906 = vmatpush1.bf16.xpose.msra.mxu0 0
        %3907 = vmatprep.subr.bf16.mxu0 0
        %3908 = vmatpush1.bf16.xpose.msra.mxu0 0
        %3909 = vmatprep.subr.bf16.mxu0 0
        %3910 = vmatpush1.bf16.xpose.msra.mxu0 0
        %3911 = vmatprep.mubr.bf16.mxu0 0
        %3912 = vmatmul.mubr.bf16.gmra.mrb[0].mxu0 %v3874
        %v3913 = vpop.f32.mrb[0].mxu0
        %v3914 = vadd.f32 0.0, %v3913
        %v3915 = vpop.f32.mrb[0].mxu0
        %v3916 = vpop.f32.mrb[0].mxu0
        %v3917 = vpop.f32.mrb[0].mxu0
        %3918 = vdwg.mxu0
        %3919 = vrot.lane.b32.xlu0 %v1133, 104
        %v3920 = vpop.permute.xlu0 %3919
        %v3922 = vsel %vm1137, %v3920, 0
        %3924 = vmatprep.subr.bf16.mxu0 0
        %3925 = vmatpush1.bf16.xpose.msra.mxu0 %v3922
        %3926 = vmatprep.subr.bf16.mxu0 0
        %3927 = vmatpush1.bf16.xpose.msra.mxu0 0
        %3928 = vmatprep.subr.bf16.mxu0 0
        %3929 = vmatpush1.bf16.xpose.msra.mxu0 0
        %3930 = vmatprep.subr.bf16.mxu0 0
        %3931 = vmatpush1.bf16.xpose.msra.mxu0 0
        %3932 = vmatprep.subr.bf16.mxu0 0
        %3933 = vmatpush1.bf16.xpose.msra.mxu0 0
        %3934 = vmatprep.subr.bf16.mxu0 0
        %3935 = vmatpush1.bf16.xpose.msra.mxu0 0
        %3936 = vmatprep.subr.bf16.mxu0 0
        %3937 = vmatpush1.bf16.xpose.msra.mxu0 0
        %3938 = vmatprep.subr.bf16.mxu0 0
        %3939 = vmatpush1.bf16.xpose.msra.mxu0 0
        %3940 = vmatprep.subr.bf16.mxu0 0
        %3941 = vmatpush1.bf16.xpose.msra.mxu0 0
        %3942 = vmatprep.subr.bf16.mxu0 0
        %3943 = vmatpush1.bf16.xpose.msra.mxu0 0
        %3944 = vmatprep.subr.bf16.mxu0 0
        %3945 = vmatpush1.bf16.xpose.msra.mxu0 0
        %3946 = vmatprep.subr.bf16.mxu0 0
        %3947 = vmatpush1.bf16.xpose.msra.mxu0 0
        %3948 = vmatprep.subr.bf16.mxu0 0
        %3949 = vmatpush1.bf16.xpose.msra.mxu0 0
        %3950 = vmatprep.subr.bf16.mxu0 0
        %3951 = vmatpush1.bf16.xpose.msra.mxu0 0
        %3952 = vmatprep.subr.bf16.mxu0 0
        %3953 = vmatpush1.bf16.xpose.msra.mxu0 0
        %3954 = vmatprep.subr.bf16.mxu0 0
        %3955 = vmatpush1.bf16.xpose.msra.mxu0 0
        %3956 = vmatprep.mubr.bf16.mxu0 0
        %3957 = vmatmul.mubr.bf16.gmra.mrb[0].mxu0 %v3724
        %v3958 = vpop.f32.mrb[0].mxu0
        %v3959 = vadd.f32 0.0, %v3958
        %v3960 = vpop.f32.mrb[0].mxu0
        %v3961 = vpop.f32.mrb[0].mxu0
        %v3962 = vpop.f32.mrb[0].mxu0
        %3963 = vdwg.mxu0
        %3964 = vrot.lane.b32.xlu0 %v1134, 104
        %v3965 = vpop.permute.xlu0 %3964
        %v3967 = vsel %vm1137, %v3965, 0
        %3969 = vmatprep.subr.bf16.mxu0 0
        %3970 = vmatpush1.bf16.xpose.msra.mxu0 %v3967
        %3971 = vmatprep.subr.bf16.mxu0 0
        %3972 = vmatpush1.bf16.xpose.msra.mxu0 0
        %3973 = vmatprep.subr.bf16.mxu0 0
        %3974 = vmatpush1.bf16.xpose.msra.mxu0 0
        %3975 = vmatprep.subr.bf16.mxu0 0
        %3976 = vmatpush1.bf16.xpose.msra.mxu0 0
        %3977 = vmatprep.subr.bf16.mxu0 0
        %3978 = vmatpush1.bf16.xpose.msra.mxu0 0
        %3979 = vmatprep.subr.bf16.mxu0 0
        %3980 = vmatpush1.bf16.xpose.msra.mxu0 0
        %3981 = vmatprep.subr.bf16.mxu0 0
        %3982 = vmatpush1.bf16.xpose.msra.mxu0 0
        %3983 = vmatprep.subr.bf16.mxu0 0
        %3984 = vmatpush1.bf16.xpose.msra.mxu0 0
        %3985 = vmatprep.subr.bf16.mxu0 0
        %3986 = vmatpush1.bf16.xpose.msra.mxu0 0
        %3987 = vmatprep.subr.bf16.mxu0 0
        %3988 = vmatpush1.bf16.xpose.msra.mxu0 0
        %3989 = vmatprep.subr.bf16.mxu0 0
        %3990 = vmatpush1.bf16.xpose.msra.mxu0 0
        %3991 = vmatprep.subr.bf16.mxu0 0
        %3992 = vmatpush1.bf16.xpose.msra.mxu0 0
        %3993 = vmatprep.subr.bf16.mxu0 0
        %3994 = vmatpush1.bf16.xpose.msra.mxu0 0
        %3995 = vmatprep.subr.bf16.mxu0 0
        %3996 = vmatpush1.bf16.xpose.msra.mxu0 0
        %3997 = vmatprep.subr.bf16.mxu0 0
        %3998 = vmatpush1.bf16.xpose.msra.mxu0 0
        %3999 = vmatprep.subr.bf16.mxu0 0
        %4000 = vmatpush1.bf16.xpose.msra.mxu0 0
        %4001 = vmatprep.mubr.bf16.mxu0 0
        %4002 = vmatmul.mubr.bf16.gmra.mrb[0].mxu0 %v3774
        %v4003 = vpop.f32.mrb[0].mxu0
        %v4004 = vadd.f32 0.0, %v4003
        %v4005 = vpop.f32.mrb[0].mxu0
        %v4006 = vpop.f32.mrb[0].mxu0
        %v4007 = vpop.f32.mrb[0].mxu0
        %4008 = vdwg.mxu0
        %4009 = vrot.lane.b32.xlu0 %v1135, 104
        %v4010 = vpop.permute.xlu0 %4009
        %v4012 = vsel %vm1137, %v4010, 0
        %4014 = vmatprep.subr.bf16.mxu0 0
        %4015 = vmatpush1.bf16.xpose.msra.mxu0 %v4012
        %4016 = vmatprep.subr.bf16.mxu0 0
        %4017 = vmatpush1.bf16.xpose.msra.mxu0 0
        %4018 = vmatprep.subr.bf16.mxu0 0
        %4019 = vmatpush1.bf16.xpose.msra.mxu0 0
        %4020 = vmatprep.subr.bf16.mxu0 0
        %4021 = vmatpush1.bf16.xpose.msra.mxu0 0
        %4022 = vmatprep.subr.bf16.mxu0 0
        %4023 = vmatpush1.bf16.xpose.msra.mxu0 0
        %4024 = vmatprep.subr.bf16.mxu0 0
        %4025 = vmatpush1.bf16.xpose.msra.mxu0 0
        %4026 = vmatprep.subr.bf16.mxu0 0
        %4027 = vmatpush1.bf16.xpose.msra.mxu0 0
        %4028 = vmatprep.subr.bf16.mxu0 0
        %4029 = vmatpush1.bf16.xpose.msra.mxu0 0
        %4030 = vmatprep.subr.bf16.mxu0 0
        %4031 = vmatpush1.bf16.xpose.msra.mxu0 0
        %4032 = vmatprep.subr.bf16.mxu0 0
        %4033 = vmatpush1.bf16.xpose.msra.mxu0 0
        %4034 = vmatprep.subr.bf16.mxu0 0
        %4035 = vmatpush1.bf16.xpose.msra.mxu0 0
        %4036 = vmatprep.subr.bf16.mxu0 0
        %4037 = vmatpush1.bf16.xpose.msra.mxu0 0
        %4038 = vmatprep.subr.bf16.mxu0 0
        %4039 = vmatpush1.bf16.xpose.msra.mxu0 0
        %4040 = vmatprep.subr.bf16.mxu0 0
        %4041 = vmatpush1.bf16.xpose.msra.mxu0 0
        %4042 = vmatprep.subr.bf16.mxu0 0
        %4043 = vmatpush1.bf16.xpose.msra.mxu0 0
        %4044 = vmatprep.subr.bf16.mxu0 0
        %4045 = vmatpush1.bf16.xpose.msra.mxu0 0
        %4046 = vmatprep.mubr.bf16.mxu0 0
        %4047 = vmatmul.mubr.bf16.gmra.mrb[0].mxu0 %v3824
        %v4048 = vpop.f32.mrb[0].mxu0
        %v4049 = vadd.f32 0.0, %v4048
        %v4050 = vpop.f32.mrb[0].mxu0
        %v4051 = vpop.f32.mrb[0].mxu0
        %v4052 = vpop.f32.mrb[0].mxu0
        %4053 = vdwg.mxu0
        %4054 = vrot.lane.b32.xlu0 %v1136, 104
        %v4055 = vpop.permute.xlu0 %4054
        %v4057 = vsel %vm1137, %v4055, 0
        %4059 = vmatprep.subr.bf16.mxu0 0
        %4060 = vmatpush1.bf16.xpose.msra.mxu0 %v4057
        %4061 = vmatprep.subr.bf16.mxu0 0
        %4062 = vmatpush1.bf16.xpose.msra.mxu0 0
        %4063 = vmatprep.subr.bf16.mxu0 0
        %4064 = vmatpush1.bf16.xpose.msra.mxu0 0
        %4065 = vmatprep.subr.bf16.mxu0 0
        %4066 = vmatpush1.bf16.xpose.msra.mxu0 0
        %4067 = vmatprep.subr.bf16.mxu0 0
        %4068 = vmatpush1.bf16.xpose.msra.mxu0 0
        %4069 = vmatprep.subr.bf16.mxu0 0
        %4070 = vmatpush1.bf16.xpose.msra.mxu0 0
        %4071 = vmatprep.subr.bf16.mxu0 0
        %4072 = vmatpush1.bf16.xpose.msra.mxu0 0
        %4073 = vmatprep.subr.bf16.mxu0 0
        %4074 = vmatpush1.bf16.xpose.msra.mxu0 0
        %4075 = vmatprep.subr.bf16.mxu0 0
        %4076 = vmatpush1.bf16.xpose.msra.mxu0 0
        %4077 = vmatprep.subr.bf16.mxu0 0
        %4078 = vmatpush1.bf16.xpose.msra.mxu0 0
        %4079 = vmatprep.subr.bf16.mxu0 0
        %4080 = vmatpush1.bf16.xpose.msra.mxu0 0
        %4081 = vmatprep.subr.bf16.mxu0 0
        %4082 = vmatpush1.bf16.xpose.msra.mxu0 0
        %4083 = vmatprep.subr.bf16.mxu0 0
        %4084 = vmatpush1.bf16.xpose.msra.mxu0 0
        %4085 = vmatprep.subr.bf16.mxu0 0
        %4086 = vmatpush1.bf16.xpose.msra.mxu0 0
        %4087 = vmatprep.subr.bf16.mxu0 0
        %4088 = vmatpush1.bf16.xpose.msra.mxu0 0
        %4089 = vmatprep.subr.bf16.mxu0 0
        %4090 = vmatpush1.bf16.xpose.msra.mxu0 0
        %4091 = vmatprep.mubr.bf16.mxu0 0
        %4092 = vmatmul.mubr.bf16.gmra.mrb[0].mxu0 %v3874
        %v4093 = vpop.f32.mrb[0].mxu0
        %v4094 = vadd.f32 0.0, %v4093
        %v4095 = vpop.f32.mrb[0].mxu0
        %v4096 = vpop.f32.mrb[0].mxu0
        %v4097 = vpop.f32.mrb[0].mxu0
        %4098 = vdwg.mxu0
        %v4099 = vsel %vm1137, %v3764, -inf
        %4100 = vmax.xlane.f32.xlu0 %v4099
        %v4101 = vpop.xlane.xlu0 %4100
        %v4102 = vsel %vm1137, %v3814, -inf
        %4103 = vmax.xlane.f32.xlu0 %v4102
        %v4104 = vpop.xlane.xlu0 %4103
        %v4105 = vsel %vm1137, %v3864, -inf
        %4106 = vmax.xlane.f32.xlu0 %v4105
        %v4107 = vpop.xlane.xlu0 %4106
        %v4108 = vsel %vm1137, %v3914, -inf
        %4109 = vmax.xlane.f32.xlu0 %v4108
        %v4110 = vpop.xlane.xlu0 %4109
        %v4111 = vsel %vm1137, %v3959, -inf
        %4112 = vmax.xlane.f32.xlu0 %v4111
        %v4113 = vpop.xlane.xlu0 %4112
        %v4114 = vsel %vm1137, %v4004, -inf
        %4115 = vmax.xlane.f32.xlu0 %v4114
        %v4116 = vpop.xlane.xlu0 %4115
        %v4117 = vsel %vm1137, %v4049, -inf
        %4118 = vmax.xlane.f32.xlu0 %v4117
        %v4119 = vpop.xlane.xlu0 %4118
        %v4120 = vsel %vm1137, %v4094, -inf
        %4121 = vmax.xlane.f32.xlu0 %v4120
        %v4122 = vpop.xlane.xlu0 %4121
        %v4123 = vmax.f32 %v4101, %v4113
        %v4124 = vmax.f32 %v4104, %v4116
        %v4125 = vmax.f32 %v4107, %v4119
        %v4126 = vmax.f32 %v4110, %v4122
        %v4127 = vsub.f32 %v3764, %v4123
        %v4128 = vsub.f32 %v3814, %v4124
        %v4129 = vsub.f32 %v3864, %v4125
        %v4130 = vsub.f32 %v3914, %v4126
        %v4131 = vmul.f32 %v4127, 1.442695
        %v4132 = vpow.pop %v4131
        %v4133 = vmul.f32 %v4128, 1.442695
        %v4134 = vpow.pop %v4133
        %v4135 = vmul.f32 %v4129, 1.442695
        %v4136 = vpow.pop %v4135
        %v4137 = vmul.f32 %v4130, 1.442695
        %v4138 = vpow.pop %v4137
        %v4139 = vsub.f32 %v3959, %v4123
        %v4140 = vsub.f32 %v4004, %v4124
        %v4141 = vsub.f32 %v4049, %v4125
        %v4142 = vsub.f32 %v4094, %v4126
        %v4143 = vmul.f32 %v4139, 1.442695
        %v4144 = vpow.pop %v4143
        %v4145 = vmul.f32 %v4140, 1.442695
        %v4146 = vpow.pop %v4145
        %v4147 = vmul.f32 %v4141, 1.442695
        %v4148 = vpow.pop %v4147
        %v4149 = vmul.f32 %v4142, 1.442695
        %v4150 = vpow.pop %v4149
        %v4151 = vsel %vm1137, %v4132, 0.0
        %4152 = vadd.xlane.f32.xlu0 %v4151
        %v4153 = vpop.xlane.xlu0 %4152
        %v4154 = vsel %vm1137, %v4134, 0.0
        %4155 = vadd.xlane.f32.xlu0 %v4154
        %v4156 = vpop.xlane.xlu0 %4155
        %v4157 = vsel %vm1137, %v4136, 0.0
        %4158 = vadd.xlane.f32.xlu0 %v4157
        %v4159 = vpop.xlane.xlu0 %4158
        %v4160 = vsel %vm1137, %v4138, 0.0
        %4161 = vadd.xlane.f32.xlu0 %v4160
        %v4162 = vpop.xlane.xlu0 %4161
        %v4163 = vsel %vm1137, %v4144, 0.0
        %4164 = vadd.xlane.f32.xlu0 %v4163
        %v4165 = vpop.xlane.xlu0 %4164
        %v4166 = vsel %vm1137, %v4146, 0.0
        %4167 = vadd.xlane.f32.xlu0 %v4166
        %v4168 = vpop.xlane.xlu0 %4167
        %v4169 = vsel %vm1137, %v4148, 0.0
        %4170 = vadd.xlane.f32.xlu0 %v4169
        %v4171 = vpop.xlane.xlu0 %4170
        %v4172 = vsel %vm1137, %v4150, 0.0
        %4173 = vadd.xlane.f32.xlu0 %v4172
        %v4174 = vpop.xlane.xlu0 %4173
        %v4175 = vadd.f32 %v4153, %v4165
        %v4176 = vadd.f32 %v4156, %v4168
        %v4177 = vadd.f32 %v4159, %v4171
        %v4178 = vadd.f32 %v4162, %v4174
        %v4179 = vrcp.pop %v4175
        %v4180 = vrcp.pop %v4176
        %v4181 = vrcp.pop %v4177
        %v4182 = vrcp.pop %v4178
        %v4183 = vmul.f32 %v4132, %v4179
        %v4184 = vmul.f32 %v4134, %v4180
        %v4185 = vmul.f32 %v4136, %v4181
        %v4186 = vmul.f32 %v4138, %v4182
        %v4187 = vpack.c.bf16 %v4183, %v4183
        %v4188 = vpack.c.bf16 %v4184, %v4184
        %v4189 = vpack.c.bf16 %v4185, %v4185
        %v4190 = vpack.c.bf16 %v4186, %v4186
        %v4191 = vmul.f32 %v4144, %v4179
        %v4192 = vmul.f32 %v4146, %v4180
        %v4193 = vmul.f32 %v4148, %v4181
        %v4194 = vmul.f32 %v4150, %v4182
        %v4195 = vpack.c.bf16 %v4191, %v4191
        %v4196 = vpack.c.bf16 %v4192, %v4192
        %v4197 = vpack.c.bf16 %v4193, %v4193
        %v4198 = vpack.c.bf16 %v4194, %v4194
        %4199 = vrot.lane.b32.xlu0 %v1133, 72
        %v4200 = vpop.permute.xlu0 %4199
        %v4202 = vsel %vm1137, %v4195, 0
        %v4205 = vsel %vm1599, %v4200, 0
        %4207 = vmatprep.subr.bf16.mxu0 0
        %4208 = vmatpush1.bf16.msra.mxu0 %v4205
        %4209 = vmatprep.subr.bf16.mxu0 0
        %4210 = vmatpush1.bf16.msra.mxu0 0
        %4211 = vmatprep.subr.bf16.mxu0 0
        %4212 = vmatpush1.bf16.msra.mxu0 0
        %4213 = vmatprep.subr.bf16.mxu0 0
        %4214 = vmatpush1.bf16.msra.mxu0 0
        %4215 = vmatprep.subr.bf16.mxu0 0
        %4216 = vmatpush1.bf16.msra.mxu0 0
        %4217 = vmatprep.subr.bf16.mxu0 0
        %4218 = vmatpush1.bf16.msra.mxu0 0
        %4219 = vmatprep.subr.bf16.mxu0 0
        %4220 = vmatpush1.bf16.msra.mxu0 0
        %4221 = vmatprep.subr.bf16.mxu0 0
        %4222 = vmatpush1.bf16.msra.mxu0 0
        %4223 = vmatprep.subr.bf16.mxu0 0
        %4224 = vmatpush1.bf16.msra.mxu0 0
        %4225 = vmatprep.subr.bf16.mxu0 0
        %4226 = vmatpush1.bf16.msra.mxu0 0
        %4227 = vmatprep.subr.bf16.mxu0 0
        %4228 = vmatpush1.bf16.msra.mxu0 0
        %4229 = vmatprep.subr.bf16.mxu0 0
        %4230 = vmatpush1.bf16.msra.mxu0 0
        %4231 = vmatprep.subr.bf16.mxu0 0
        %4232 = vmatpush1.bf16.msra.mxu0 0
        %4233 = vmatprep.subr.bf16.mxu0 0
        %4234 = vmatpush1.bf16.msra.mxu0 0
        %4235 = vmatprep.subr.bf16.mxu0 0
        %4236 = vmatpush1.bf16.msra.mxu0 0
        %4237 = vmatprep.subr.bf16.mxu0 0
        %4238 = vmatpush1.bf16.msra.mxu0 0
        %4239 = vmatprep.mubr.bf16.mxu0 0
        %4240 = vmatmul.mubr.bf16.gmra.mrb[0].mxu0 %v4202
        %v4241 = vpop.f32.mrb[0].mxu0
        %v4242 = vadd.f32 0.0, %v4241
        %v4243 = vpop.f32.mrb[0].mxu0
        %v4244 = vpop.f32.mrb[0].mxu0
        %v4245 = vpop.f32.mrb[0].mxu0
        %4246 = vdwg.mxu0
        %4247 = vrot.lane.b32.xlu0 %v1134, 72
        %v4248 = vpop.permute.xlu0 %4247
        %v4250 = vsel %vm1137, %v4196, 0
        %v4253 = vsel %vm1599, %v4248, 0
        %4255 = vmatprep.subr.bf16.mxu0 0
        %4256 = vmatpush1.bf16.msra.mxu0 %v4253
        %4257 = vmatprep.subr.bf16.mxu0 0
        %4258 = vmatpush1.bf16.msra.mxu0 0
        %4259 = vmatprep.subr.bf16.mxu0 0
        %4260 = vmatpush1.bf16.msra.mxu0 0
        %4261 = vmatprep.subr.bf16.mxu0 0
        %4262 = vmatpush1.bf16.msra.mxu0 0
        %4263 = vmatprep.subr.bf16.mxu0 0
        %4264 = vmatpush1.bf16.msra.mxu0 0
        %4265 = vmatprep.subr.bf16.mxu0 0
        %4266 = vmatpush1.bf16.msra.mxu0 0
        %4267 = vmatprep.subr.bf16.mxu0 0
        %4268 = vmatpush1.bf16.msra.mxu0 0
        %4269 = vmatprep.subr.bf16.mxu0 0
        %4270 = vmatpush1.bf16.msra.mxu0 0
        %4271 = vmatprep.subr.bf16.mxu0 0
        %4272 = vmatpush1.bf16.msra.mxu0 0
        %4273 = vmatprep.subr.bf16.mxu0 0
        %4274 = vmatpush1.bf16.msra.mxu0 0
        %4275 = vmatprep.subr.bf16.mxu0 0
        %4276 = vmatpush1.bf16.msra.mxu0 0
        %4277 = vmatprep.subr.bf16.mxu0 0
        %4278 = vmatpush1.bf16.msra.mxu0 0
        %4279 = vmatprep.subr.bf16.mxu0 0
        %4280 = vmatpush1.bf16.msra.mxu0 0
        %4281 = vmatprep.subr.bf16.mxu0 0
        %4282 = vmatpush1.bf16.msra.mxu0 0
        %4283 = vmatprep.subr.bf16.mxu0 0
        %4284 = vmatpush1.bf16.msra.mxu0 0
        %4285 = vmatprep.subr.bf16.mxu0 0
        %4286 = vmatpush1.bf16.msra.mxu0 0
        %4287 = vmatprep.mubr.bf16.mxu0 0
        %4288 = vmatmul.mubr.bf16.gmra.mrb[0].mxu0 %v4250
        %v4289 = vpop.f32.mrb[0].mxu0
        %v4290 = vadd.f32 0.0, %v4289
        %v4291 = vpop.f32.mrb[0].mxu0
        %v4292 = vpop.f32.mrb[0].mxu0
        %v4293 = vpop.f32.mrb[0].mxu0
        %4294 = vdwg.mxu0
        %4295 = vrot.lane.b32.xlu0 %v1135, 72
        %v4296 = vpop.permute.xlu0 %4295
        %v4298 = vsel %vm1137, %v4197, 0
        %v4301 = vsel %vm1599, %v4296, 0
        %4303 = vmatprep.subr.bf16.mxu0 0
        %4304 = vmatpush1.bf16.msra.mxu0 %v4301
        %4305 = vmatprep.subr.bf16.mxu0 0
        %4306 = vmatpush1.bf16.msra.mxu0 0
        %4307 = vmatprep.subr.bf16.mxu0 0
        %4308 = vmatpush1.bf16.msra.mxu0 0
        %4309 = vmatprep.subr.bf16.mxu0 0
        %4310 = vmatpush1.bf16.msra.mxu0 0
        %4311 = vmatprep.subr.bf16.mxu0 0
        %4312 = vmatpush1.bf16.msra.mxu0 0
        %4313 = vmatprep.subr.bf16.mxu0 0
        %4314 = vmatpush1.bf16.msra.mxu0 0
        %4315 = vmatprep.subr.bf16.mxu0 0
        %4316 = vmatpush1.bf16.msra.mxu0 0
        %4317 = vmatprep.subr.bf16.mxu0 0
        %4318 = vmatpush1.bf16.msra.mxu0 0
        %4319 = vmatprep.subr.bf16.mxu0 0
        %4320 = vmatpush1.bf16.msra.mxu0 0
        %4321 = vmatprep.subr.bf16.mxu0 0
        %4322 = vmatpush1.bf16.msra.mxu0 0
        %4323 = vmatprep.subr.bf16.mxu0 0
        %4324 = vmatpush1.bf16.msra.mxu0 0
        %4325 = vmatprep.subr.bf16.mxu0 0
        %4326 = vmatpush1.bf16.msra.mxu0 0
        %4327 = vmatprep.subr.bf16.mxu0 0
        %4328 = vmatpush1.bf16.msra.mxu0 0
        %4329 = vmatprep.subr.bf16.mxu0 0
        %4330 = vmatpush1.bf16.msra.mxu0 0
        %4331 = vmatprep.subr.bf16.mxu0 0
        %4332 = vmatpush1.bf16.msra.mxu0 0
        %4333 = vmatprep.subr.bf16.mxu0 0
        %4334 = vmatpush1.bf16.msra.mxu0 0
        %4335 = vmatprep.mubr.bf16.mxu0 0
        %4336 = vmatmul.mubr.bf16.gmra.mrb[0].mxu0 %v4298
        %v4337 = vpop.f32.mrb[0].mxu0
        %v4338 = vadd.f32 0.0, %v4337
        %v4339 = vpop.f32.mrb[0].mxu0
        %v4340 = vpop.f32.mrb[0].mxu0
        %v4341 = vpop.f32.mrb[0].mxu0
        %4342 = vdwg.mxu0
        %4343 = vrot.lane.b32.xlu0 %v1136, 72
        %v4344 = vpop.permute.xlu0 %4343
        %v4346 = vsel %vm1137, %v4198, 0
        %v4349 = vsel %vm1599, %v4344, 0
        %4351 = vmatprep.subr.bf16.mxu0 0
        %4352 = vmatpush1.bf16.msra.mxu0 %v4349
        %4353 = vmatprep.subr.bf16.mxu0 0
        %4354 = vmatpush1.bf16.msra.mxu0 0
        %4355 = vmatprep.subr.bf16.mxu0 0
        %4356 = vmatpush1.bf16.msra.mxu0 0
        %4357 = vmatprep.subr.bf16.mxu0 0
        %4358 = vmatpush1.bf16.msra.mxu0 0
        %4359 = vmatprep.subr.bf16.mxu0 0
        %4360 = vmatpush1.bf16.msra.mxu0 0
        %4361 = vmatprep.subr.bf16.mxu0 0
        %4362 = vmatpush1.bf16.msra.mxu0 0
        %4363 = vmatprep.subr.bf16.mxu0 0
        %4364 = vmatpush1.bf16.msra.mxu0 0
        %4365 = vmatprep.subr.bf16.mxu0 0
        %4366 = vmatpush1.bf16.msra.mxu0 0
        %4367 = vmatprep.subr.bf16.mxu0 0
        %4368 = vmatpush1.bf16.msra.mxu0 0
        %4369 = vmatprep.subr.bf16.mxu0 0
        %4370 = vmatpush1.bf16.msra.mxu0 0
        %4371 = vmatprep.subr.bf16.mxu0 0
        %4372 = vmatpush1.bf16.msra.mxu0 0
        %4373 = vmatprep.subr.bf16.mxu0 0
        %4374 = vmatpush1.bf16.msra.mxu0 0
        %4375 = vmatprep.subr.bf16.mxu0 0
        %4376 = vmatpush1.bf16.msra.mxu0 0
        %4377 = vmatprep.subr.bf16.mxu0 0
        %4378 = vmatpush1.bf16.msra.mxu0 0
        %4379 = vmatprep.subr.bf16.mxu0 0
        %4380 = vmatpush1.bf16.msra.mxu0 0
        %4381 = vmatprep.subr.bf16.mxu0 0
        %4382 = vmatpush1.bf16.msra.mxu0 0
        %4383 = vmatprep.mubr.bf16.mxu0 0
        %4384 = vmatmul.mubr.bf16.gmra.mrb[0].mxu0 %v4346
        %v4385 = vpop.f32.mrb[0].mxu0
        %v4386 = vadd.f32 0.0, %v4385
        %v4387 = vpop.f32.mrb[0].mxu0
        %v4388 = vpop.f32.mrb[0].mxu0
        %v4389 = vpop.f32.mrb[0].mxu0
        %4390 = vdwg.mxu0
        %4391 = vrot.lane.b32.xlu0 %v1072, 72
        %v4392 = vpop.permute.xlu0 %4391
        %v4394 = vsel %vm1137, %v4187, 0
        %v4397 = vsel %vm1599, %v4392, 0
        %4399 = vmatprep.subr.bf16.mxu0 0
        %4400 = vmatpush1.bf16.msra.mxu0 %v4397
        %4401 = vmatprep.subr.bf16.mxu0 0
        %4402 = vmatpush1.bf16.msra.mxu0 0
        %4403 = vmatprep.subr.bf16.mxu0 0
        %4404 = vmatpush1.bf16.msra.mxu0 0
        %4405 = vmatprep.subr.bf16.mxu0 0
        %4406 = vmatpush1.bf16.msra.mxu0 0
        %4407 = vmatprep.subr.bf16.mxu0 0
        %4408 = vmatpush1.bf16.msra.mxu0 0
        %4409 = vmatprep.subr.bf16.mxu0 0
        %4410 = vmatpush1.bf16.msra.mxu0 0
        %4411 = vmatprep.subr.bf16.mxu0 0
        %4412 = vmatpush1.bf16.msra.mxu0 0
        %4413 = vmatprep.subr.bf16.mxu0 0
        %4414 = vmatpush1.bf16.msra.mxu0 0
        %4415 = vmatprep.subr.bf16.mxu0 0
        %4416 = vmatpush1.bf16.msra.mxu0 0
        %4417 = vmatprep.subr.bf16.mxu0 0
        %4418 = vmatpush1.bf16.msra.mxu0 0
        %4419 = vmatprep.subr.bf16.mxu0 0
        %4420 = vmatpush1.bf16.msra.mxu0 0
        %4421 = vmatprep.subr.bf16.mxu0 0
        %4422 = vmatpush1.bf16.msra.mxu0 0
        %4423 = vmatprep.subr.bf16.mxu0 0
        %4424 = vmatpush1.bf16.msra.mxu0 0
        %4425 = vmatprep.subr.bf16.mxu0 0
        %4426 = vmatpush1.bf16.msra.mxu0 0
        %4427 = vmatprep.subr.bf16.mxu0 0
        %4428 = vmatpush1.bf16.msra.mxu0 0
        %4429 = vmatprep.subr.bf16.mxu0 0
        %4430 = vmatpush1.bf16.msra.mxu0 0
        %4431 = vmatprep.mubr.bf16.mxu0 0
        %4432 = vmatmul.mubr.bf16.gmra.mrb[0].mxu0 %v4394
        %v4433 = vpop.f32.mrb[0].mxu0
        %v4434 = vadd.f32 %v4242, %v4433
        %v4435 = vpop.f32.mrb[0].mxu0
        %v4436 = vpop.f32.mrb[0].mxu0
        %v4437 = vpop.f32.mrb[0].mxu0
        %4438 = vdwg.mxu0
        %4439 = vrot.lane.b32.xlu0 %v1073, 72
        %v4440 = vpop.permute.xlu0 %4439
        %v4442 = vsel %vm1137, %v4188, 0
        %v4445 = vsel %vm1599, %v4440, 0
        %4447 = vmatprep.subr.bf16.mxu0 0
        %4448 = vmatpush1.bf16.msra.mxu0 %v4445
        %4449 = vmatprep.subr.bf16.mxu0 0
        %4450 = vmatpush1.bf16.msra.mxu0 0
        %4451 = vmatprep.subr.bf16.mxu0 0
        %4452 = vmatpush1.bf16.msra.mxu0 0
        %4453 = vmatprep.subr.bf16.mxu0 0
        %4454 = vmatpush1.bf16.msra.mxu0 0
        %4455 = vmatprep.subr.bf16.mxu0 0
        %4456 = vmatpush1.bf16.msra.mxu0 0
        %4457 = vmatprep.subr.bf16.mxu0 0
        %4458 = vmatpush1.bf16.msra.mxu0 0
        %4459 = vmatprep.subr.bf16.mxu0 0
        %4460 = vmatpush1.bf16.msra.mxu0 0
        %4461 = vmatprep.subr.bf16.mxu0 0
        %4462 = vmatpush1.bf16.msra.mxu0 0
        %4463 = vmatprep.subr.bf16.mxu0 0
        %4464 = vmatpush1.bf16.msra.mxu0 0
        %4465 = vmatprep.subr.bf16.mxu0 0
        %4466 = vmatpush1.bf16.msra.mxu0 0
        %4467 = vmatprep.subr.bf16.mxu0 0
        %4468 = vmatpush1.bf16.msra.mxu0 0
        %4469 = vmatprep.subr.bf16.mxu0 0
        %4470 = vmatpush1.bf16.msra.mxu0 0
        %4471 = vmatprep.subr.bf16.mxu0 0
        %4472 = vmatpush1.bf16.msra.mxu0 0
        %4473 = vmatprep.subr.bf16.mxu0 0
        %4474 = vmatpush1.bf16.msra.mxu0 0
        %4475 = vmatprep.subr.bf16.mxu0 0
        %4476 = vmatpush1.bf16.msra.mxu0 0
        %4477 = vmatprep.subr.bf16.mxu0 0
        %4478 = vmatpush1.bf16.msra.mxu0 0
        %4479 = vmatprep.mubr.bf16.mxu0 0
        %4480 = vmatmul.mubr.bf16.gmra.mrb[0].mxu0 %v4442
        %v4481 = vpop.f32.mrb[0].mxu0
        %v4482 = vadd.f32 %v4290, %v4481
        %v4483 = vpop.f32.mrb[0].mxu0
        %v4484 = vpop.f32.mrb[0].mxu0
        %v4485 = vpop.f32.mrb[0].mxu0
        %4486 = vdwg.mxu0
        %4487 = vrot.lane.b32.xlu0 %v1074, 72
        %v4488 = vpop.permute.xlu0 %4487
        %v4490 = vsel %vm1137, %v4189, 0
        %v4493 = vsel %vm1599, %v4488, 0
        %4495 = vmatprep.subr.bf16.mxu0 0
        %4496 = vmatpush1.bf16.msra.mxu0 %v4493
        %4497 = vmatprep.subr.bf16.mxu0 0
        %4498 = vmatpush1.bf16.msra.mxu0 0
        %4499 = vmatprep.subr.bf16.mxu0 0
        %4500 = vmatpush1.bf16.msra.mxu0 0
        %4501 = vmatprep.subr.bf16.mxu0 0
        %4502 = vmatpush1.bf16.msra.mxu0 0
        %4503 = vmatprep.subr.bf16.mxu0 0
        %4504 = vmatpush1.bf16.msra.mxu0 0
        %4505 = vmatprep.subr.bf16.mxu0 0
        %4506 = vmatpush1.bf16.msra.mxu0 0
        %4507 = vmatprep.subr.bf16.mxu0 0
        %4508 = vmatpush1.bf16.msra.mxu0 0
        %4509 = vmatprep.subr.bf16.mxu0 0
        %4510 = vmatpush1.bf16.msra.mxu0 0
        %4511 = vmatprep.subr.bf16.mxu0 0
        %4512 = vmatpush1.bf16.msra.mxu0 0
        %4513 = vmatprep.subr.bf16.mxu0 0
        %4514 = vmatpush1.bf16.msra.mxu0 0
        %4515 = vmatprep.subr.bf16.mxu0 0
        %4516 = vmatpush1.bf16.msra.mxu0 0
        %4517 = vmatprep.subr.bf16.mxu0 0
        %4518 = vmatpush1.bf16.msra.mxu0 0
        %4519 = vmatprep.subr.bf16.mxu0 0
        %4520 = vmatpush1.bf16.msra.mxu0 0
        %4521 = vmatprep.subr.bf16.mxu0 0
        %4522 = vmatpush1.bf16.msra.mxu0 0
        %4523 = vmatprep.subr.bf16.mxu0 0
        %4524 = vmatpush1.bf16.msra.mxu0 0
        %4525 = vmatprep.subr.bf16.mxu0 0
        %4526 = vmatpush1.bf16.msra.mxu0 0
        %4527 = vmatprep.mubr.bf16.mxu0 0
        %4528 = vmatmul.mubr.bf16.gmra.mrb[0].mxu0 %v4490
        %v4529 = vpop.f32.mrb[0].mxu0
        %v4530 = vadd.f32 %v4338, %v4529
        %v4531 = vpop.f32.mrb[0].mxu0
        %v4532 = vpop.f32.mrb[0].mxu0
        %v4533 = vpop.f32.mrb[0].mxu0
        %4534 = vdwg.mxu0
        %4535 = vrot.lane.b32.xlu0 %v1075, 72
        %v4536 = vpop.permute.xlu0 %4535
        %v4538 = vsel %vm1137, %v4190, 0
        %v4541 = vsel %vm1599, %v4536, 0
        %4543 = vmatprep.subr.bf16.mxu0 0
        %4544 = vmatpush1.bf16.msra.mxu0 %v4541
        %4545 = vmatprep.subr.bf16.mxu0 0
        %4546 = vmatpush1.bf16.msra.mxu0 0
        %4547 = vmatprep.subr.bf16.mxu0 0
        %4548 = vmatpush1.bf16.msra.mxu0 0
        %4549 = vmatprep.subr.bf16.mxu0 0
        %4550 = vmatpush1.bf16.msra.mxu0 0
        %4551 = vmatprep.subr.bf16.mxu0 0
        %4552 = vmatpush1.bf16.msra.mxu0 0
        %4553 = vmatprep.subr.bf16.mxu0 0
        %4554 = vmatpush1.bf16.msra.mxu0 0
        %4555 = vmatprep.subr.bf16.mxu0 0
        %4556 = vmatpush1.bf16.msra.mxu0 0
        %4557 = vmatprep.subr.bf16.mxu0 0
        %4558 = vmatpush1.bf16.msra.mxu0 0
        %4559 = vmatprep.subr.bf16.mxu0 0
        %4560 = vmatpush1.bf16.msra.mxu0 0
        %4561 = vmatprep.subr.bf16.mxu0 0
        %4562 = vmatpush1.bf16.msra.mxu0 0
        %4563 = vmatprep.subr.bf16.mxu0 0
        %4564 = vmatpush1.bf16.msra.mxu0 0
        %4565 = vmatprep.subr.bf16.mxu0 0
        %4566 = vmatpush1.bf16.msra.mxu0 0
        %4567 = vmatprep.subr.bf16.mxu0 0
        %4568 = vmatpush1.bf16.msra.mxu0 0
        %4569 = vmatprep.subr.bf16.mxu0 0
        %4570 = vmatpush1.bf16.msra.mxu0 0
        %4571 = vmatprep.subr.bf16.mxu0 0
        %4572 = vmatpush1.bf16.msra.mxu0 0
        %4573 = vmatprep.subr.bf16.mxu0 0
        %4574 = vmatpush1.bf16.msra.mxu0 0
        %4575 = vmatprep.mubr.bf16.mxu0 0
        %4576 = vmatmul.mubr.bf16.gmra.mrb[0].mxu0 %v4538
        %v4577 = vpop.f32.mrb[0].mxu0
        %v4578 = vadd.f32 %v4386, %v4577
        %v4579 = vpop.f32.mrb[0].mxu0
        %v4580 = vpop.f32.mrb[0].mxu0
        %v4581 = vpop.f32.mrb[0].mxu0
        %4582 = vdwg.mxu0
        %v4583 = vpack.c.bf16 %v4434, %v4434
        %v4584 = vpack.c.bf16 %v4482, %v4482
        %v4585 = vpack.c.bf16 %v4530, %v4530
        %v4586 = vpack.c.bf16 %v4578, %v4578
        %4591 = vrot.lane.b32.xlu0 %v2847, 8
        %v4592 = vpop.permute.xlu0 %4591
        %4593 = vrot.lane.b32.xlu0 %v2848, 8
        %v4594 = vpop.permute.xlu0 %4593
        %4595 = vrot.lane.b32.xlu0 %v2849, 8
        %v4596 = vpop.permute.xlu0 %4595
        %4597 = vrot.lane.b32.xlu0 %v2850, 8
        %v4598 = vpop.permute.xlu0 %4597
        %4603 = vrot.lane.b32.xlu0 %v3715, 16
        %v4604 = vpop.permute.xlu0 %4603
        %4605 = vrot.lane.b32.xlu0 %v3716, 16
        %v4606 = vpop.permute.xlu0 %4605
        %4607 = vrot.lane.b32.xlu0 %v3717, 16
        %v4608 = vpop.permute.xlu0 %4607
        %4609 = vrot.lane.b32.xlu0 %v3718, 16
        %v4610 = vpop.permute.xlu0 %4609
        %4615 = vrot.lane.b32.xlu0 %v4583, 24
        %v4616 = vpop.permute.xlu0 %4615
        %4617 = vrot.lane.b32.xlu0 %v4584, 24
        %v4618 = vpop.permute.xlu0 %4617
        %4619 = vrot.lane.b32.xlu0 %v4585, 24
        %v4620 = vpop.permute.xlu0 %4619
        %4621 = vrot.lane.b32.xlu0 %v4586, 24
        %v4622 = vpop.permute.xlu0 %4621
        %v4625 = vsel %vm1137, %v1979, %v4592
        %v4628 = vsel %vm1137, %v1980, %v4594
        %v4631 = vsel %vm1137, %v1981, %v4596
        %v4634 = vsel %vm1137, %v1982, %v4598
        %vm4635 = vcmask 130048
        %v4637 = vsel %vm4635, %v4625, %v4604
        %v4639 = vsel %vm4635, %v4628, %v4606
        %v4641 = vsel %vm4635, %v4631, %v4608
        %v4643 = vsel %vm4635, %v4634, %v4610
        %vm4644 = vcmask 195584
        %v4646 = vsel %vm4644, %v4637, %v4616
        %v4648 = vsel %vm4644, %v4639, %v4618
        %v4650 = vsel %vm4644, %v4641, %v4620
        %v4652 = vsel %vm4644, %v4643, %v4622
        %v4657 = vunpack.c.l.b16 %v4646
        %v4658 = vunpack.c.l.b16 %v4648
        %v4659 = vunpack.c.l.b16 %v4650
        %v4660 = vunpack.c.l.b16 %v4652
        %v4661 = vpack.c.b16 %v4658, %v4657
        %v4662 = vpack.c.b16 %v4660, %v4659
        %v4667 = vunpack.c.l.b16 %v914
        %v4668 = vunpack.c.l.b16 %v915
        %v4669 = vunpack.c.l.b16 %v916
        %v4670 = vunpack.c.l.b16 %v917
        %v4671 = vpack.c.b16 %v4668, %v4667
        %v4672 = vpack.c.b16 %v4670, %v4669
        %v4676 = vsel %vm730, %v4661, 0
        %v4679 = vsel %vm730, %v4662, 0
        %4681 = vmatprep.subr.bf16.mxu0 0
        %4682 = vmatpush1.bf16.msra.mxu0 %v4671
        %4683 = vmatprep.subr.bf16.mxu0 0
        %4684 = vmatpush1.bf16.msra.mxu0 %v4672
        %4685 = vmatprep.subr.bf16.mxu0 0
        %4686 = vmatpush1.bf16.msra.mxu0 0
        %4687 = vmatprep.subr.bf16.mxu0 0
        %4688 = vmatpush1.bf16.msra.mxu0 0
        %4689 = vmatprep.subr.bf16.mxu0 0
        %4690 = vmatpush1.bf16.msra.mxu0 0
        %4691 = vmatprep.subr.bf16.mxu0 0
        %4692 = vmatpush1.bf16.msra.mxu0 0
        %4693 = vmatprep.subr.bf16.mxu0 0
        %4694 = vmatpush1.bf16.msra.mxu0 0
        %4695 = vmatprep.subr.bf16.mxu0 0
        %4696 = vmatpush1.bf16.msra.mxu0 0
        %4697 = vmatprep.subr.bf16.mxu0 0
        %4698 = vmatpush1.bf16.msra.mxu0 0
        %4699 = vmatprep.subr.bf16.mxu0 0
        %4700 = vmatpush1.bf16.msra.mxu0 0
        %4701 = vmatprep.subr.bf16.mxu0 0
        %4702 = vmatpush1.bf16.msra.mxu0 0
        %4703 = vmatprep.subr.bf16.mxu0 0
        %4704 = vmatpush1.bf16.msra.mxu0 0
        %4705 = vmatprep.subr.bf16.mxu0 0
        %4706 = vmatpush1.bf16.msra.mxu0 0
        %4707 = vmatprep.subr.bf16.mxu0 0
        %4708 = vmatpush1.bf16.msra.mxu0 0
        %4709 = vmatprep.subr.bf16.mxu0 0
        %4710 = vmatpush1.bf16.msra.mxu0 0
        %4711 = vmatprep.subr.bf16.mxu0 0
        %4712 = vmatpush1.bf16.msra.mxu0 0
        %4713 = vmatprep.mubr.bf16.mxu0 0
        %4714 = vmatmul.mubr.bf16.gmra.mrb[0].mxu0 %v4676
        %v4715 = vpop.f32.mrb[0].mxu0
        %v4716 = vadd.f32 0.0, %v4715
        %v4717 = vpop.f32.mrb[0].mxu0
        %v4718 = vpop.f32.mrb[0].mxu0
        %v4719 = vadd.f32 0.0, %v4718
        %v4720 = vpop.f32.mrb[0].mxu0
        %4721 = vmatprep.mubr.bf16.mxu0 0
        %4722 = vmatmul.mubr.bf16.gmra.mrb[0].mxu0 %v4679
        %v4723 = vpop.f32.mrb[0].mxu0
        %v4724 = vadd.f32 0.0, %v4723
        %v4725 = vpop.f32.mrb[0].mxu0
        %v4726 = vpop.f32.mrb[0].mxu0
        %v4727 = vadd.f32 0.0, %v4726
        %v4728 = vpop.f32.mrb[0].mxu0
        %4729 = vdwg.mxu0
        %v4730 = vadd.f32 %v716, %v4716
        %v4731 = vadd.f32 %v717, %v4719
        %v4732 = vadd.f32 %v718, %v4724
        %v4733 = vadd.f32 %v719, %v4727
        %v4734 = vld [vmem:[%s690] sm:$0x1]
        %v4735 = vld [vmem:[%s693] sm:$0x1]
        %v4736 = vsel %vm730, %v4730, 0.0
        %4737 = vadd.xlane.f32.xlu0 %v4736
        %v4738 = vpop.xlane.xlu0 %4737
        %v4739 = vsel %vm730, %v4731, 0.0
        %4740 = vadd.xlane.f32.xlu0 %v4739
        %v4741 = vpop.xlane.xlu0 %4740
        %v4742 = vsel %vm730, %v4732, 0.0
        %4743 = vadd.xlane.f32.xlu0 %v4742
        %v4744 = vpop.xlane.xlu0 %4743
        %v4745 = vsel %vm730, %v4733, 0.0
        %4746 = vadd.xlane.f32.xlu0 %v4745
        %v4747 = vpop.xlane.xlu0 %4746
        %v4748 = vmul.f32 %v4738, %v743
        %v4749 = vmul.f32 %v4741, %v743
        %v4750 = vmul.f32 %v4744, %v743
        %v4751 = vmul.f32 %v4747, %v743
        %v4752 = vmul.f32 %v4730, %v4730
        %v4753 = vmul.f32 %v4731, %v4731
        %v4754 = vmul.f32 %v4732, %v4732
        %v4755 = vmul.f32 %v4733, %v4733
        %v4756 = vsel %vm730, %v4752, 0.0
        %4757 = vadd.xlane.f32.xlu0 %v4756
        %v4758 = vpop.xlane.xlu0 %4757
        %v4759 = vsel %vm730, %v4753, 0.0
        %4760 = vadd.xlane.f32.xlu0 %v4759
        %v4761 = vpop.xlane.xlu0 %4760
        %v4762 = vsel %vm730, %v4754, 0.0
        %4763 = vadd.xlane.f32.xlu0 %v4762
        %v4764 = vpop.xlane.xlu0 %4763
        %v4765 = vsel %vm730, %v4755, 0.0
        %4766 = vadd.xlane.f32.xlu0 %v4765
        %v4767 = vpop.xlane.xlu0 %4766
        %v4768 = vmul.f32 %v4758, %v743
        %v4769 = vmul.f32 %v4761, %v743
        %v4770 = vmul.f32 %v4764, %v743
        %v4771 = vmul.f32 %v4767, %v743
        %v4772 = vmul.f32 %v4748, %v4748
        %v4773 = vmul.f32 %v4749, %v4749
        %v4774 = vmul.f32 %v4750, %v4750
        %v4775 = vmul.f32 %v4751, %v4751
        %v4776 = vsub.f32 %v4768, %v4772
        %v4777 = vsub.f32 %v4769, %v4773
        %v4778 = vsub.f32 %v4770, %v4774
        %v4779 = vsub.f32 %v4771, %v4775
        %v4780 = vmax.f32 %v4776, 0.0
        %v4781 = vmax.f32 %v4777, 0.0
        %v4782 = vmax.f32 %v4778, 0.0
        %v4783 = vmax.f32 %v4779, 0.0
        %v4784 = vsub.f32 %v4730, %v4748
        %v4785 = vsub.f32 %v4731, %v4749
        %v4786 = vsub.f32 %v4732, %v4750
        %v4787 = vsub.f32 %v4733, %v4751
        %v4788 = vadd.f32 %v4780, 1e-05
        %v4789 = vadd.f32 %v4781, 1e-05
        %v4790 = vadd.f32 %v4782, 1e-05
        %v4791 = vadd.f32 %v4783, 1e-05
        %v4792 = vrsqrt.pop %v4788
        %v4793 = vrsqrt.pop %v4789
        %v4794 = vrsqrt.pop %v4790
        %v4795 = vrsqrt.pop %v4791
        %v4796 = vmul.f32 %v4784, %v4792
        %v4797 = vmul.f32 %v4785, %v4793
        %v4798 = vmul.f32 %v4786, %v4794
        %v4799 = vmul.f32 %v4787, %v4795
        %v4801 = vlaneseq
        %v4802 = vshrl.u32 %v4801, 7
        %v4803 = vsub.s32 0, %v4802
        %v4804 = vrot.slane %v4734, %v4803
        %v4806 = vmul.f32 %v4796, %v4804
        %v4807 = vmul.f32 %v4797, %v4804
        %v4808 = vmul.f32 %v4798, %v4804
        %v4809 = vmul.f32 %v4799, %v4804
        %v4811 = vlaneseq
        %v4812 = vshrl.u32 %v4811, 7
        %v4813 = vsub.s32 0, %v4812
        %v4814 = vrot.slane %v4735, %v4813
        %v4816 = vadd.f32 %v4806, %v4814
        %v4817 = vadd.f32 %v4807, %v4814
        %v4818 = vadd.f32 %v4808, %v4814
        %v4819 = vadd.f32 %v4809, %v4814
        %v4820 = vpack.c.bf16 %v4817, %v4816
        %v4821 = vpack.c.bf16 %v4819, %v4818
        %v4822 = vld [vmem:[%s698] sm:$0xf]
        %v4823 = vld [vmem:[%s698 + $0x4] sm:$0xf]
        %v4824 = vld [vmem:[%s698 + $0x8] sm:$0xf]
        %v4825 = vld [vmem:[%s698 + $0xc] sm:$0xf]
        %v4830 = vunpack.c.l.b16 %v4822
        %v4831 = vunpack.c.l.b16 %v4823
        %v4832 = vunpack.c.l.b16 %v4824
        %v4833 = vunpack.c.l.b16 %v4825
        %v4834 = vpack.c.b16 %v4831, %v4830
        %v4835 = vpack.c.b16 %v4833, %v4832
        %v4839 = vsel %vm730, %v4820, 0
        %v4842 = vsel %vm730, %v4821, 0
        %4844 = vmatprep.subr.bf16.mxu0 0
        %4845 = vmatpush1.bf16.msra.mxu0 %v4834
        %4846 = vmatprep.subr.bf16.mxu0 0
        %4847 = vmatpush1.bf16.msra.mxu0 %v4835
        %4848 = vmatprep.subr.bf16.mxu0 0
        %4849 = vmatpush1.bf16.msra.mxu0 0
        %4850 = vmatprep.subr.bf16.mxu0 0
        %4851 = vmatpush1.bf16.msra.mxu0 0
        %4852 = vmatprep.subr.bf16.mxu0 0
        %4853 = vmatpush1.bf16.msra.mxu0 0
        %4854 = vmatprep.subr.bf16.mxu0 0
        %4855 = vmatpush1.bf16.msra.mxu0 0
        %4856 = vmatprep.subr.bf16.mxu0 0
        %4857 = vmatpush1.bf16.msra.mxu0 0
        %4858 = vmatprep.subr.bf16.mxu0 0
        %4859 = vmatpush1.bf16.msra.mxu0 0
        %4860 = vmatprep.subr.bf16.mxu0 0
        %4861 = vmatpush1.bf16.msra.mxu0 0
        %4862 = vmatprep.subr.bf16.mxu0 0
        %4863 = vmatpush1.bf16.msra.mxu0 0
        %4864 = vmatprep.subr.bf16.mxu0 0
        %4865 = vmatpush1.bf16.msra.mxu0 0
        %4866 = vmatprep.subr.bf16.mxu0 0
        %4867 = vmatpush1.bf16.msra.mxu0 0
        %4868 = vmatprep.subr.bf16.mxu0 0
        %4869 = vmatpush1.bf16.msra.mxu0 0
        %4870 = vmatprep.subr.bf16.mxu0 0
        %4871 = vmatpush1.bf16.msra.mxu0 0
        %4872 = vmatprep.subr.bf16.mxu0 0
        %4873 = vmatpush1.bf16.msra.mxu0 0
        %4874 = vmatprep.subr.bf16.mxu0 0
        %4875 = vmatpush1.bf16.msra.mxu0 0
        %4876 = vmatprep.mubr.bf16.mxu0 0
        %4877 = vmatmul.mubr.bf16.gmra.mrb[0].mxu0 %v4839
        %v4878 = vpop.f32.mrb[0].mxu0
        %v4879 = vadd.f32 0.0, %v4878
        %v4880 = vpop.f32.mrb[0].mxu0
        %v4881 = vpop.f32.mrb[0].mxu0
        %v4882 = vadd.f32 0.0, %v4881
        %v4883 = vpop.f32.mrb[0].mxu0
        %4884 = vmatprep.mubr.bf16.mxu0 0
        %4885 = vmatmul.mubr.bf16.gmra.mrb[0].mxu0 %v4842
        %v4886 = vpop.f32.mrb[0].mxu0
        %v4887 = vadd.f32 0.0, %v4886
        %v4888 = vpop.f32.mrb[0].mxu0
        %v4889 = vpop.f32.mrb[0].mxu0
        %v4890 = vadd.f32 0.0, %v4889
        %v4891 = vpop.f32.mrb[0].mxu0
        %4892 = vdwg.mxu0
        %v4893 = vmul.f32 %v4879, 0.5
        %v4894 = vmul.f32 %v4882, 0.5
        %v4895 = vmul.f32 %v4887, 0.5
        %v4896 = vmul.f32 %v4890, 0.5
        %v4897 = vmul.f32 %v4879, 0.70710677
        %v4898 = vmul.f32 %v4882, 0.70710677
        %v4899 = vmul.f32 %v4887, 0.70710677
        %v4900 = vmul.f32 %v4890, 0.70710677
        %v4901 = verf.f32.pop %v4897
        %v4902 = verf.f32.pop %v4898
        %v4903 = verf.f32.pop %v4899
        %v4904 = verf.f32.pop %v4900
        %v4905 = vadd.f32 %v4901, 1.0
        %v4906 = vadd.f32 %v4902, 1.0
        %v4907 = vadd.f32 %v4903, 1.0
        %v4908 = vadd.f32 %v4904, 1.0
        %v4909 = vmul.f32 %v4893, %v4905
        %v4910 = vmul.f32 %v4894, %v4906
        %v4911 = vmul.f32 %v4895, %v4907
        %v4912 = vmul.f32 %v4896, %v4908
        %v4913 = vpack.c.bf16 %v4910, %v4909
        %v4914 = vpack.c.bf16 %v4912, %v4911
        %v4915 = vld [vmem:[%s703] sm:$0xf]
        %v4916 = vld [vmem:[%s703 + $0x4] sm:$0xf]
        %v4917 = vld [vmem:[%s703 + $0x8] sm:$0xf]
        %v4918 = vld [vmem:[%s703 + $0xc] sm:$0xf]
        %v4919 = vld [vmem:[%s703 + $0x10] sm:$0xf]
        %v4920 = vld [vmem:[%s703 + $0x14] sm:$0xf]
        %v4921 = vld [vmem:[%s703 + $0x18] sm:$0xf]
        %v4922 = vld [vmem:[%s703 + $0x1c] sm:$0xf]
        %v4923 = vld [vmem:[%s703 + $0x20] sm:$0xf]
        %v4924 = vld [vmem:[%s703 + $0x24] sm:$0xf]
        %v4925 = vld [vmem:[%s703 + $0x28] sm:$0xf]
        %v4926 = vld [vmem:[%s703 + $0x2c] sm:$0xf]
        %v4927 = vld [vmem:[%s703 + $0x30] sm:$0xf]
        %v4928 = vld [vmem:[%s703 + $0x34] sm:$0xf]
        %v4929 = vld [vmem:[%s703 + $0x38] sm:$0xf]
        %v4930 = vld [vmem:[%s703 + $0x3c] sm:$0xf]
        %v4947 = vunpack.c.l.b16 %v4915
        %v4948 = vunpack.c.l.b16 %v4916
        %v4949 = vunpack.c.l.b16 %v4917
        %v4950 = vunpack.c.l.b16 %v4918
        %v4951 = vunpack.c.l.b16 %v4919
        %v4952 = vunpack.c.l.b16 %v4920
        %v4953 = vunpack.c.l.b16 %v4921
        %v4954 = vunpack.c.l.b16 %v4922
        %v4955 = vunpack.c.l.b16 %v4923
        %v4956 = vunpack.c.l.b16 %v4924
        %v4957 = vunpack.c.l.b16 %v4925
        %v4958 = vunpack.c.l.b16 %v4926
        %v4959 = vunpack.c.l.b16 %v4927
        %v4960 = vunpack.c.l.b16 %v4928
        %v4961 = vunpack.c.l.b16 %v4929
        %v4962 = vunpack.c.l.b16 %v4930
        %v4963 = vpack.c.b16 %v4948, %v4947
        %v4964 = vpack.c.b16 %v4950, %v4949
        %v4965 = vpack.c.b16 %v4952, %v4951
        %v4966 = vpack.c.b16 %v4954, %v4953
        %v4967 = vpack.c.b16 %v4956, %v4955
        %v4968 = vpack.c.b16 %v4958, %v4957
        %v4969 = vpack.c.b16 %v4960, %v4959
        %v4970 = vpack.c.b16 %v4962, %v4961
        %4979 = vmatprep.subr.bf16.mxu0 0
        %4980 = vmatpush1.bf16.msra.mxu0 %v4963
        %4981 = vmatprep.subr.bf16.mxu0 0
        %4982 = vmatpush1.bf16.msra.mxu0 %v4964
        %4983 = vmatprep.subr.bf16.mxu0 0
        %4984 = vmatpush1.bf16.msra.mxu0 %v4965
        %4985 = vmatprep.subr.bf16.mxu0 0
        %4986 = vmatpush1.bf16.msra.mxu0 %v4966
        %4987 = vmatprep.subr.bf16.mxu0 0
        %4988 = vmatpush1.bf16.msra.mxu0 %v4967
        %4989 = vmatprep.subr.bf16.mxu0 0
        %4990 = vmatpush1.bf16.msra.mxu0 %v4968
        %4991 = vmatprep.subr.bf16.mxu0 0
        %4992 = vmatpush1.bf16.msra.mxu0 %v4969
        %4993 = vmatprep.subr.bf16.mxu0 0
        %4994 = vmatpush1.bf16.msra.mxu0 %v4970
        %4995 = vmatprep.subr.bf16.mxu0 0
        %4996 = vmatpush1.bf16.msra.mxu0 0
        %4997 = vmatprep.subr.bf16.mxu0 0
        %4998 = vmatpush1.bf16.msra.mxu0 0
        %4999 = vmatprep.subr.bf16.mxu0 0
        %5000 = vmatpush1.bf16.msra.mxu0 0
        %5001 = vmatprep.subr.bf16.mxu0 0
        %5002 = vmatpush1.bf16.msra.mxu0 0
        %5003 = vmatprep.subr.bf16.mxu0 0
        %5004 = vmatpush1.bf16.msra.mxu0 0
        %5005 = vmatprep.subr.bf16.mxu0 0
        %5006 = vmatpush1.bf16.msra.mxu0 0
        %5007 = vmatprep.subr.bf16.mxu0 0
        %5008 = vmatpush1.bf16.msra.mxu0 0
        %5009 = vmatprep.subr.bf16.mxu0 0
        %5010 = vmatpush1.bf16.msra.mxu0 0
        %5011 = vmatprep.mubr.bf16.mxu0 0
        %5012 = vmatmul.mubr.bf16.gmra.mrb[0].mxu0 %v4913
        %v5013 = vpop.f32.mrb[0].mxu0
        %v5014 = vadd.f32 0.0, %v5013
        %v5015 = vpop.f32.mrb[0].mxu0
        %v5016 = vpop.f32.mrb[0].mxu0
        %v5017 = vadd.f32 0.0, %v5016
        %v5018 = vpop.f32.mrb[0].mxu0
        %5019 = vmatprep.mubr.bf16.mxu0 0
        %5020 = vmatmul.mubr.bf16.gmra.mrb[0].mxu0 %v4914
        %v5021 = vpop.f32.mrb[0].mxu0
        %v5022 = vadd.f32 0.0, %v5021
        %v5023 = vpop.f32.mrb[0].mxu0
        %v5024 = vpop.f32.mrb[0].mxu0
        %v5025 = vadd.f32 0.0, %v5024
        %v5026 = vpop.f32.mrb[0].mxu0
        %5027 = vdwg.mxu0
        %v5028 = vadd.f32 %v4730, %v5014
        %v5029 = vadd.f32 %v4731, %v5017
        %v5030 = vadd.f32 %v4732, %v5022
        %v5031 = vadd.f32 %v4733, %v5025
        %5032 = vst.msk [vmem:[#allocation2] sm:$0xff] %vm730, %v5028
        %5033 = vst.msk [vmem:[#allocation2 + $0x8] sm:$0xff] %vm730, %v5029
        %5034 = vst.msk [vmem:[#allocation2 + $0x10] sm:$0xff] %vm730, %v5030
        %5035 = vst.msk [vmem:[#allocation2 + $0x18] sm:$0xff] %vm730, %v5031
        %p5036 = scmp.eq.s32.totalorder %s35, 1
        // Predicated region
        $region89: #{tpu_custom_call.1} parent=79 // pred_check
          %p5037 = pneg %p5036
        $region90: #{tpu_custom_call.1} parent=79 // pred_check_branch
          %5039 = sbr.rel (%p5037) target = $region92
        $region91: #{tpu_custom_call.1} parent=79 // pred_region
          %v5040 = vld [vmem:[%s13] sm:$0x1]
          %v5041 = vld [vmem:[%s14] sm:$0x1]
          %v5042 = vsel %vm730, %v5028, 0.0
          %5043 = vadd.xlane.f32.xlu0 %v5042
          %v5044 = vpop.xlane.xlu0 %5043
          %v5045 = vsel %vm730, %v5029, 0.0
          %5046 = vadd.xlane.f32.xlu0 %v5045
          %v5047 = vpop.xlane.xlu0 %5046
          %v5048 = vsel %vm730, %v5030, 0.0
          %5049 = vadd.xlane.f32.xlu0 %v5048
          %v5050 = vpop.xlane.xlu0 %5049
          %v5051 = vsel %vm730, %v5031, 0.0
          %5052 = vadd.xlane.f32.xlu0 %v5051
          %v5053 = vpop.xlane.xlu0 %5052
          %v5054 = vmul.f32 %v5044, %v743
          %v5055 = vmul.f32 %v5047, %v743
          %v5056 = vmul.f32 %v5050, %v743
          %v5057 = vmul.f32 %v5053, %v743
          %v5058 = vmul.f32 %v5028, %v5028
          %v5059 = vmul.f32 %v5029, %v5029
          %v5060 = vmul.f32 %v5030, %v5030
          %v5061 = vmul.f32 %v5031, %v5031
          %v5062 = vsel %vm730, %v5058, 0.0
          %5063 = vadd.xlane.f32.xlu0 %v5062
          %v5064 = vpop.xlane.xlu0 %5063
          %v5065 = vsel %vm730, %v5059, 0.0
          %5066 = vadd.xlane.f32.xlu0 %v5065
          %v5067 = vpop.xlane.xlu0 %5066
          %v5068 = vsel %vm730, %v5060, 0.0
          %5069 = vadd.xlane.f32.xlu0 %v5068
          %v5070 = vpop.xlane.xlu0 %5069
          %v5071 = vsel %vm730, %v5061, 0.0
          %5072 = vadd.xlane.f32.xlu0 %v5071
          %v5073 = vpop.xlane.xlu0 %5072
          %v5074 = vmul.f32 %v5064, %v743
          %v5075 = vmul.f32 %v5067, %v743
          %v5076 = vmul.f32 %v5070, %v743
          %v5077 = vmul.f32 %v5073, %v743
          %v5078 = vmul.f32 %v5054, %v5054
          %v5079 = vmul.f32 %v5055, %v5055
          %v5080 = vmul.f32 %v5056, %v5056
          %v5081 = vmul.f32 %v5057, %v5057
          %v5082 = vsub.f32 %v5074, %v5078
          %v5083 = vsub.f32 %v5075, %v5079
          %v5084 = vsub.f32 %v5076, %v5080
          %v5085 = vsub.f32 %v5077, %v5081
          %v5086 = vmax.f32 %v5082, 0.0
          %v5087 = vmax.f32 %v5083, 0.0
          %v5088 = vmax.f32 %v5084, 0.0
          %v5089 = vmax.f32 %v5085, 0.0
          %v5090 = vsub.f32 %v5028, %v5054
          %v5091 = vsub.f32 %v5029, %v5055
          %v5092 = vsub.f32 %v5030, %v5056
          %v5093 = vsub.f32 %v5031, %v5057
          %v5094 = vadd.f32 %v5086, 1e-05
          %v5095 = vadd.f32 %v5087, 1e-05
          %v5096 = vadd.f32 %v5088, 1e-05
          %v5097 = vadd.f32 %v5089, 1e-05
          %v5098 = vrsqrt.pop %v5094
          %v5099 = vrsqrt.pop %v5095
          %v5100 = vrsqrt.pop %v5096
          %v5101 = vrsqrt.pop %v5097
          %v5102 = vmul.f32 %v5090, %v5098
          %v5103 = vmul.f32 %v5091, %v5099
          %v5104 = vmul.f32 %v5092, %v5100
          %v5105 = vmul.f32 %v5093, %v5101
          %v5107 = vlaneseq
          %v5108 = vshrl.u32 %v5107, 7
          %v5109 = vsub.s32 0, %v5108
          %v5110 = vrot.slane %v5040, %v5109
          %v5112 = vmul.f32 %v5102, %v5110
          %v5113 = vmul.f32 %v5103, %v5110
          %v5114 = vmul.f32 %v5104, %v5110
          %v5115 = vmul.f32 %v5105, %v5110
          %v5117 = vlaneseq
          %v5118 = vshrl.u32 %v5117, 7
          %v5119 = vsub.s32 0, %v5118
          %v5120 = vrot.slane %v5041, %v5119
          %v5122 = vadd.f32 %v5112, %v5120
          %v5123 = vadd.f32 %v5113, %v5120
          %v5124 = vadd.f32 %v5114, %v5120
          %v5125 = vadd.f32 %v5115, %v5120
          %5126 = vst.msk [vmem:[%s654] sm:$0xff] %vm730, %v5122
          %5127 = vst.msk [vmem:[%s654 + $0x8] sm:$0xff] %vm730, %v5123
          %5128 = vst.msk [vmem:[%s654 + $0x10] sm:$0xff] %vm730, %v5124
          %5129 = vst.msk [vmem:[%s654 + $0x18] sm:$0xff] %vm730, %v5125
        $region92: #{tpu_custom_call.1} parent=79 // pred_fallthru
          _
        %s5130 = sand.u32 %s425, 1
        %s5131 = scalar_lea.sflag [#allocation5], %s5130
        %s5132 = sand.u32 %s425, 1
        %s5133 = smul.addr %s5132, 32
        %s5134 = scalar_lea.vmem [#allocation6], %s5133
        // Predicated region
        $region93: #{tpu_custom_call.1} parent=79 // pred_check
          %p5135 = pneg %p435
        $region94: #{tpu_custom_call.1} parent=79 // pred_check_branch
          %5137 = sbr.rel (%p5135) target = $region96
        $region95: #{tpu_custom_call.1} parent=79 // pred_region
          %s5138 = smul.u32 4, %s34
          %s5140 = ssub.s32 512, 512
          %5141 = vsyncadd %s5131, %s5140
          %s5142 = smul.addr %s5138, 128
          %s5143 = scalar_lea.hbm %s15, %s5142
          %s5144 = sshll.u32 %s5134, 4
          %s5145 = int_to_ptr.vmem [resolvable:$true] %s5144
          %5150 = dma.vmem_to_hbm [thread:$0]  %s5145, 512, %s5143, %s5131, 128, 128, 8
        $region96: #{tpu_custom_call.1} parent=79 // pred_fallthru
          _
      $region80: #{tpu_custom_call.1} parent=5 // pred_fallthru
        _
      %p5151 = scmp.le.s32.totalorder 2, %s25
      // Predicated region
      $region97: #{tpu_custom_call.1} parent=5 // pred_check
        %p5152 = pneg %p5151
      $region98: #{tpu_custom_call.1} parent=5 // pred_check_branch
        %5154 = sbr.rel (%p5152) target = $region100
      $region99: #{tpu_custom_call.1} parent=5 // pred_region
        %s5155 = ssub.s32 %s25, 2
        // Predicated region
        $region101: #{tpu_custom_call.1} parent=99 // pred_check
          %p5156 = pneg %p441
        $region102: #{tpu_custom_call.1} parent=99 // pred_check_branch
          %5158 = sbr.rel (%p5156) target = $region104
        $region103: #{tpu_custom_call.1} parent=99 // pred_region
          %s5159 = sand.u32 %s426, 1
          %s5160 = scalar_lea.sflag [#allocation5], %s5159
          %s5161 = sand.u32 %s426, 1
          %s5162 = smul.addr %s5161, 32
          %s5163 = scalar_lea.vmem [#allocation6], %s5162
          %5164 = dma.done %s5160, 512
        $region104: #{tpu_custom_call.1} parent=99 // pred_fallthru
          _
      $region100: #{tpu_custom_call.1} parent=5 // pred_fallthru
        _
    $region6: #{tpu_custom_call.1} parent=1 // loop_footer
      %s29 = sadd.s32 1, %s25
    $region7: #{tpu_custom_call.1} parent=1 // loop_footer_branch
      %24 = sbr.rel target = $region3
    $region8: #{tpu_custom_call.1} parent=1 // loop_exit
      _
    %5165 = vsyncpa [#allocation4], 1
    %s5166 = scalar_lea.sflag [#allocation4], 1
    %5167 = vsyncpa %s5166, 1
    %5168 = vsyncpa [#allocation5], 1
    %s5169 = scalar_lea.sflag [#allocation5], 1
    %5170 = vsyncpa %s5169, 1

</llo_original>
